<compile_context>
chip_gen: v7x
topology: tpu7x:2x2x1
jax: 0.10.0
libtpu: 0.0.40
codegen_flags: <defaults>
</compile_context>

<pallas_src>
import functools

import jax
import jax.numpy as jnp
from jax import lax
from jax.experimental import pallas as pl
from jax.experimental.pallas import tpu as pltpu

# Small synthetic shapes consistent with the module's forward.
B, F, H, E, V, T, NOUT = 64, 16, 32, 32, 16, 8, 16

LANES = 128      # width of the packed output slab (one vreg row)
N_SUMM = 6       # per-tile partial-sum columns


def _game_kernel(common_ratio, s_coeff, r_coeff, length_cost, eff_max_len,
                 dims, w_offs, summ_off,
                 x_ref, lbl_ref, w_ref, b_ref, out_ref):
    f32 = jnp.float32
    Ff, Hh, Vv, Tt, Nout = dims
    off_enc, off_step, off_out, off_rout = w_offs
    Bt = x_ref.shape[0]
    H2 = 2 * Hh
    lanes = out_ref.shape[1]

    iota_v = lax.broadcasted_iota(jnp.int32, (Bt, Vv), 1)
    iota_o = lax.broadcasted_iota(jnp.int32, (Bt, Nout), 1)
    iota_t = lax.broadcasted_iota(jnp.int32, (Bt, Tt), 1)

    # ---- static slices of the packed parameter slabs (fusion preamble lives in the wrapper) ----
    w_enc = w_ref[pl.ds(off_enc, Ff), pl.ds(0, Hh)]              # [F, H]
    w_step = w_ref[pl.ds(off_step, Vv + H2), :]                  # [V+2H, 2H] block-diag fused
    w_init = w_ref[pl.ds(off_step + Vv, Hh), :]                  # [H, 2H]  == [w_hh | 0]
    w_out2 = w_ref[pl.ds(off_out, H2), pl.ds(0, Vv)]             # [2H, V]  (lower H rows zero)
    w_rout2 = w_ref[pl.ds(off_rout, H2), pl.ds(0, Nout)]         # [2H, NOUT] (upper H rows zero)

    b_enc = b_ref[pl.ds(0, 1), pl.ds(0, Hh)]                     # [1, H]
    c0_pad = b_ref[pl.ds(1, 1), :]                               # [1, 2H] = [sos@w_ih + b_ih + b_hh | 0]
    b_step = b_ref[pl.ds(2, 1), :]                               # [1, 2H]
    b_out = b_ref[pl.ds(3, 1), pl.ds(0, Vv)]                     # [1, V]
    b_rout = b_ref[pl.ds(4, 1), pl.ds(0, Nout)]                  # [1, NOUT]

    # ---- sender initial hidden + fused state for step 0 ----
    h0 = jnp.tanh(jnp.dot(x_ref[...], w_enc, preferred_element_type=f32) + b_enc)   # [Bt, H]
    # hh = [sender hidden | receiver hidden]; receiver starts at tanh(0) = 0.
    hh = jnp.tanh(jnp.dot(h0, w_init, preferred_element_type=f32) + c0_pad)          # [Bt, 2H]

    eosed_before = jnp.zeros((Bt, 1), f32)
    eff_ent = jnp.zeros((Bt, 1), f32)
    eff_lp = jnp.zeros((Bt, 1), f32)
    denom = jnp.zeros((Bt, 1), f32)
    lengths_f = jnp.zeros((Bt, 1), f32)
    hsel2 = jnp.zeros((Bt, H2), f32)
    msg_acc = jnp.zeros((Bt, Tt), f32)
    ent_acc = jnp.zeros((Bt, Tt), f32)
    ratio = 1.0

    # ---- fused rollout: sender head + merged (sender-next + receiver) step + REINFORCE accum ----
    for t in range(Tt):
        logits = jnp.dot(hh, w_out2, preferred_element_type=f32) + b_out            # [Bt, V]

        # shared-max softmax statistics (single exp pass; max shared with argmax)
        m = jnp.max(logits, axis=-1, keepdims=True)
        z = logits - m
        e = jnp.exp(z)
        s = jnp.sum(e, axis=-1, keepdims=True)
        log_s = jnp.log(s)
        ent_t = log_s - jnp.sum(e * z, axis=-1, keepdims=True) / s                  # -sum p*logp
        lp_t = -log_s                                     # log-prob of greedy token (max of logp)
        tok = jnp.min(jnp.where(logits >= m, iota_v, Vv), axis=-1, keepdims=True)   # first argmax
        onehot = (iota_v == tok).astype(f32)                                        # [Bt, V]

        # merged block-diagonal step: [next sender hidden | receiver hidden after token t]
        hh_next = jnp.tanh(
            jnp.dot(jnp.concatenate([onehot, hh], axis=1), w_step,
                    preferred_element_type=f32) + b_step)                           # [Bt, 2H]

        # online find_lengths + effective entropy / logprob (common-ratio decay)
        not_eosed = 1.0 - eosed_before                    # (t < lengths)
        eff_ent = eff_ent + ent_t * (not_eosed * ratio)
        eff_lp = eff_lp + lp_t * not_eosed
        denom = denom + ratio * not_eosed
        lengths_f = lengths_f + not_eosed

        is_eos = onehot[:, 0:1]
        is_last = not_eosed if t == Tt - 1 else not_eosed * is_eos                  # t == lengths-1
        hsel2 = hsel2 + is_last * hh_next                 # receiver hidden lives in lanes H:2H
        eosed_before = jnp.maximum(eosed_before, is_eos)

        msg_acc = jnp.where(iota_t == t, tok.astype(f32), msg_acc)
        ent_acc = jnp.where(iota_t == t, ent_t, ent_acc)

        ratio = ratio * common_ratio
        hh = hh_next

    # ---- receiver output + cross-entropy loss vs labels ----
    recv_logits = jnp.dot(hsel2, w_rout2, preferred_element_type=f32) + b_rout      # [Bt, NOUT]
    logprob_r = jnp.zeros((Bt, 1), f32)    # RnnReceiverDeterministic returns zeros
    entropy_r = jnp.zeros((Bt, 1), f32)

    lbl = lbl_ref[...]                                                               # [Bt, 1] i32
    onehot_lbl = (iota_o == lbl).astype(f32)
    mo = jnp.max(recv_logits, axis=-1, keepdims=True)
    zo = recv_logits - mo
    logp_o = zo - jnp.log(jnp.sum(jnp.exp(zo), axis=-1, keepdims=True))
    loss_vec = -jnp.sum(onehot_lbl * logp_o, axis=-1, keepdims=True)                # [Bt, 1]
    pred = jnp.min(jnp.where(recv_logits >= mo, iota_o, Nout), axis=-1, keepdims=True)
    acc = (pred == lbl).astype(f32)

    # ---- REINFORCE terms (effective entropy scaled by loss.detach(); baselines = 0 first call) ----
    eff_ent = (eff_ent / denom) * loss_vec          # exact divide for reference parity (denom >= 1)
    logprob = eff_lp + logprob_r

    if eff_max_len is None:
        len_loss = jnp.zeros((Bt, 1), f32)
    else:
        len_loss = length_cost * jnp.maximum(lengths_f - float(eff_max_len), 0.0)

    opt_term = (loss_vec + loss_vec * logprob + len_loss * eff_lp
                - eff_ent * s_coeff - entropy_r * r_coeff)

    # ---- pack everything into one lane-dense [Bt, 128] slab (single unmasked store) ----
    def _bsum(v):  # per-tile sum, replicated down the tile's rows
        return jnp.broadcast_to(jnp.sum(v, keepdims=True).reshape(1, 1), (Bt, 1))

    per_ex = [msg_acc, ent_acc, loss_vec, eff_ent, eff_lp,
              logprob_r, entropy_r, lengths_f, acc]                                  # 2T + 7 cols
    summ = [_bsum(loss_vec), _bsum(acc), _bsum(ent_acc),
            _bsum(lengths_f), _bsum(entropy_r), _bsum(opt_term)]                     # N_SUMM cols

    used = 2 * Tt + 7
    pad_mid = summ_off - used
    pad_end = lanes - summ_off - len(summ)
    pieces = list(per_ex)
    if pad_mid > 0:
        pieces.append(jnp.zeros((Bt, pad_mid), f32))
    pieces += summ
    if pad_end > 0:
        pieces.append(jnp.zeros((Bt, pad_end), f32))
    out_ref[...] = jnp.concatenate(pieces, axis=1)


def init_params(key):
    ks = jax.random.split(key, 10)
    s = 0.3
    f32 = jnp.float32
    return dict(
        w_enc=jax.random.normal(ks[0], (F, H), f32) * s,
        b_enc=jnp.zeros((1, H), f32),
        sos=jax.random.normal(ks[1], (1, E), f32) * s,
        w_ih=jax.random.normal(ks[2], (E, H), f32) * s,
        b_ih=jnp.zeros((1, H), f32),
        w_hh=jax.random.normal(ks[3], (H, H), f32) * s,
        b_hh=jnp.zeros((1, H), f32),
        w_out=jax.random.normal(ks[4], (H, V), f32) * s,
        b_out=jnp.zeros((1, V), f32),
        s_emb=jax.random.normal(ks[5], (V, E), f32) * s,
        r_emb=jax.random.normal(ks[6], (V, E), f32) * s,
        wr_ih=jax.random.normal(ks[7], (E, H), f32) * s,
        br_ih=jnp.zeros((1, H), f32),
        wr_hh=jax.random.normal(ks[8], (H, H), f32) * s,
        br_hh=jnp.zeros((1, H), f32),
        w_rout=jax.random.normal(ks[9], (H, NOUT), f32) * s,
        b_rout=jnp.zeros((1, NOUT), f32),
    )


def sender_receiver_rnn_reinforce(sender_input, labels, params,
                                  sender_entropy_coeff=0.1,
                                  receiver_entropy_coeff=0.01,
                                  length_cost=0.0,
                                  effective_max_len=None,
                                  sender_entropy_common_ratio=1.0,
                                  max_len=T,
                                  b_tile=None,
                                  vmem_limit_bytes=32 * 1024 * 1024):
    f32 = jnp.float32
    b_total, Ff = sender_input.shape
    Hh = params["w_hh"].shape[0]
    Vv = params["w_out"].shape[1]
    Nout = params["w_rout"].shape[1]
    Tt = int(max_len)
    H2 = 2 * Hh

    # One big tile per call is best on v5e/v6e; pick b_tile <= b_total/2 (mult of 8) on v7x
    # so the "parallel" grid axis shards across both TensorCores.
    if b_tile is None:
        b_tile = b_total
    assert b_total % b_tile == 0 and (b_tile == b_total or b_tile % 8 == 0)
    n_tiles = b_total // b_tile

    summ_off = 2 * Tt + 8
    assert summ_off + N_SUMM <= LANES and 2 * Tt + 7 <= summ_off

    # ---- hoisted preamble: fold embeddings, fuse sender+receiver step into one block-diag weight ----
    ws_top = jnp.dot(params["s_emb"], params["w_ih"])                       # [V, H]
    wr_top = jnp.dot(params["r_emb"], params["wr_ih"])                      # [V, H]
    zhh = jnp.zeros((Hh, Hh), f32)
    w_step = jnp.concatenate([
        jnp.concatenate([ws_top, wr_top], axis=1),                          # token embeddings
        jnp.concatenate([params["w_hh"], zhh], axis=1),                     # sender recurrence
        jnp.concatenate([zhh, params["wr_hh"]], axis=1)], axis=0)           # receiver recurrence
    b_step = jnp.concatenate([params["b_ih"] + params["b_hh"],
                              params["br_ih"] + params["br_hh"]], axis=1)   # [1, 2H]
    c0 = jnp.dot(params["sos"], params["w_ih"]) + params["b_ih"] + params["b_hh"]
    c0_pad = jnp.concatenate([c0, jnp.zeros((1, Hh), f32)], axis=1)         # [1, 2H]
    w_out2 = jnp.concatenate([params["w_out"], jnp.zeros((Hh, Vv), f32)], axis=0)       # [2H, V]
    w_rout2 = jnp.concatenate([jnp.zeros((Hh, Nout), f32), params["w_rout"]], axis=0)   # [2H, NOUT]

    # ---- pack all weights into one sublane-stacked slab; all biases into one [8, lane_w] slab ----
    lane_w = max(H2, Hh, Vv, Nout)

    def _rpad8(r):
        return -(-r // 8) * 8

    def _pad_block(mat):
        r, c = mat.shape
        return jnp.zeros((_rpad8(r), lane_w), f32).at[:r, :c].set(mat)

    sections = [params["w_enc"], w_step, w_out2, w_rout2]
    blocks, offs, off = [], [], 0
    for m in sections:
        blocks.append(_pad_block(m))
        offs.append(off)
        off += _rpad8(m.shape[0])
    w_slab = jnp.concatenate(blocks, axis=0)                                # [off, lane_w]

    b_rows = [params["b_enc"], c0_pad, b_step, params["b_out"], params["b_rout"]]
    b_slab = jnp.zeros((8, lane_w), f32)
    for i, row in enumerate(b_rows):
        b_slab = b_slab.at[i, :row.shape[1]].set(row[0])

    in_specs = [
        pl.BlockSpec((b_tile, Ff), lambda i: (i, 0)),
        pl.BlockSpec((b_tile, 1), lambda i: (i, 0)),
        pl.BlockSpec(w_slab.shape, lambda i: (0, 0)),
        pl.BlockSpec(b_slab.shape, lambda i: (0, 0)),
    ]
    out_spec = pl.BlockSpec((b_tile, LANES), lambda i: (i, 0))
    out_shape = jax.ShapeDtypeStruct((b_total, LANES), jnp.float32)

    kernel = functools.partial(
        _game_kernel,
        float(sender_entropy_common_ratio),
        float(sender_entropy_coeff),
        float(receiver_entropy_coeff),
        float(length_cost),
        effective_max_len,
        (Ff, Hh, Vv, Tt, Nout),
        tuple(offs),
        summ_off)

    slab = pl.pallas_call(
        kernel,
        grid=(n_tiles,),
        in_specs=in_specs,
        out_specs=out_spec,
        out_shape=out_shape,
        compiler_params=pltpu.CompilerParams(
            dimension_semantics=("parallel",),
            vmem_limit_bytes=vmem_limit_bytes),
    )(sender_input, labels, w_slab, b_slab)

    # per-example message tokens (exactly representable in f32)
    message = slab[:, :Tt].astype(jnp.int32)

    # per-tile partial sums -> final scalars (tiny wrapper tail)
    summ = slab[0::b_tile, summ_off:summ_off + N_SUMM]   # [n_tiles, N_SUMM]
    tot = jnp.sum(summ, axis=0)
    bf = float(b_total)
    original_loss = tot[0] / bf
    acc_mean = tot[1] / bf
    sender_entropy = tot[2] / (bf * Tt)
    mean_length = tot[3] / bf
    receiver_entropy = tot[4] / bf
    optimized_loss = tot[5] / bf

    rest = {
        "acc": acc_mean,
        "loss": optimized_loss,
        "sender_entropy": sender_entropy,
        "receiver_entropy": receiver_entropy,
        "original_loss": original_loss,
        "mean_length": mean_length,
    }
    return optimized_loss, rest, message


if __name__ == "__main__":
    key = jax.random.PRNGKey(0)
    k_x, k_lbl, k_p = jax.random.split(key, 3)
    sender_input = jax.random.normal(k_x, (B, F), jnp.float32)
    labels = jax.random.randint(k_lbl, (B, 1), 0, NOUT, dtype=jnp.int32)
    params = init_params(k_p)

    # 2 tiles so the "parallel" batch axis can shard across both TCs on v7x;
    # use b_tile=None (single big tile) on v5e/v6e for lowest per-call overhead.
    opt_loss, rest, message = sender_receiver_rnn_reinforce(
        sender_input, labels, params,
        sender_entropy_coeff=0.1, receiver_entropy_coeff=0.01,
        sender_entropy_common_ratio=1.0, b_tile=B // 2)

    opt_loss = jax.block_until_ready(opt_loss)
    rest = {k: float(jax.block_until_ready(v)) for k, v in rest.items()}
    _ = jax.block_until_ready(message)
    print("KERNEL_OK")
</pallas_src>

<mosaic_0001>
module attributes {stable_mosaic.version = 11 : i64} {
  func.func @_game_kernel(%arg0: i32, %arg1: memref<32x16xf32, #tpu.memory_space<vmem>>, %arg2: memref<32x1xi32, #tpu.memory_space<vmem>>, %arg3: memref<224x64xf32, #tpu.memory_space<vmem>>, %arg4: memref<8x64xf32, #tpu.memory_space<vmem>>, %arg5: memref<32x128xf32, #tpu.memory_space<vmem>>) attributes {dimension_semantics = [#tpu.dimension_semantics<parallel>], iteration_bounds = array<i64: 2>, scalar_prefetch = 0 : i64, scratch_operands = 0 : i64, tpu.core_type = #tpu.core_type<tc>, window_params = [{transform_indices = @transform_0, window_bounds = array<i64: 32, 16>}, {transform_indices = @transform_1, window_bounds = array<i64: 32, 1>}, {pipeline_mode = #tpu.pipeline_mode<synchronous>, transform_indices = @transform_2, window_bounds = array<i64: 224, 64>}, {pipeline_mode = #tpu.pipeline_mode<synchronous>, transform_indices = @transform_3, window_bounds = array<i64: 8, 64>}, {transform_indices = @transform_4, window_bounds = array<i64: 32, 128>}]} {
    %0 = tpu.iota {dimensions = array<i32: 1>} : vector<32x16xi32>
    %1 = tpu.iota {dimensions = array<i32: 1>} : vector<32x16xi32>
    %2 = tpu.iota {dimensions = array<i32: 1>} : vector<32x8xi32>
    %c0 = arith.constant 0 : index
    %c0_0 = arith.constant 0 : index
    %3 = vector.load %arg3[%c0, %c0_0] : memref<224x64xf32, #tpu.memory_space<vmem>>, vector<16x32xf32>
    %c16 = arith.constant 16 : index
    %c0_1 = arith.constant 0 : index
    %4 = vector.load %arg3[%c16, %c0_1] : memref<224x64xf32, #tpu.memory_space<vmem>>, vector<80x64xf32>
    %c32 = arith.constant 32 : index
    %c0_2 = arith.constant 0 : index
    %5 = vector.load %arg3[%c32, %c0_2] : memref<224x64xf32, #tpu.memory_space<vmem>>, vector<32x64xf32>
    %c96 = arith.constant 96 : index
    %c0_3 = arith.constant 0 : index
    %6 = vector.load %arg3[%c96, %c0_3] : memref<224x64xf32, #tpu.memory_space<vmem>>, vector<64x16xf32>
    %c160 = arith.constant 160 : index
    %c0_4 = arith.constant 0 : index
    %7 = vector.load %arg3[%c160, %c0_4] : memref<224x64xf32, #tpu.memory_space<vmem>>, vector<64x16xf32>
    %c0_5 = arith.constant 0 : index
    %c0_6 = arith.constant 0 : index
    %8 = vector.load %arg4[%c0_5, %c0_6] : memref<8x64xf32, #tpu.memory_space<vmem>>, vector<1x32xf32>
    %c1 = arith.constant 1 : index
    %c0_7 = arith.constant 0 : index
    %9 = vector.load %arg4[%c1, %c0_7] : memref<8x64xf32, #tpu.memory_space<vmem>>, vector<1x64xf32>
    %c2 = arith.constant 2 : index
    %c0_8 = arith.constant 0 : index
    %10 = vector.load %arg4[%c2, %c0_8] : memref<8x64xf32, #tpu.memory_space<vmem>>, vector<1x64xf32>
    %c3 = arith.constant 3 : index
    %c0_9 = arith.constant 0 : index
    %11 = vector.load %arg4[%c3, %c0_9] : memref<8x64xf32, #tpu.memory_space<vmem>>, vector<1x16xf32>
    %c4 = arith.constant 4 : index
    %c0_10 = arith.constant 0 : index
    %12 = vector.load %arg4[%c4, %c0_10] : memref<8x64xf32, #tpu.memory_space<vmem>>, vector<1x16xf32>
    %c0_11 = arith.constant 0 : index
    %c0_12 = arith.constant 0 : index
    %13 = vector.load %arg1[%c0_11, %c0_12] : memref<32x16xf32, #tpu.memory_space<vmem>>, vector<32x16xf32>
    %cst = arith.constant dense<0.000000e+00> : vector<32x32xf32>
    %14 = tpu.matmul %13, %3, %cst {dimension_numbers = #tpu.dot_dimension_numbers<[1], [0], [0], [1], [0, 0, 1, 1], [], []>} : vector<32x16xf32>, vector<16x32xf32>, vector<32x32xf32> -> vector<32x32xf32>
    %15 = vector.broadcast %8 : vector<1x32xf32> to vector<32x32xf32>
    %16 = arith.addf %14, %15 : vector<32x32xf32>
    %17 = math.tanh %16 : vector<32x32xf32>
    %cst_13 = arith.constant dense<0.000000e+00> : vector<32x64xf32>
    %18 = tpu.matmul %17, %5, %cst_13 {dimension_numbers = #tpu.dot_dimension_numbers<[1], [0], [0], [1], [0, 0, 1, 1], [], []>} : vector<32x32xf32>, vector<32x64xf32>, vector<32x64xf32> -> vector<32x64xf32>
    %19 = vector.broadcast %9 : vector<1x64xf32> to vector<32x64xf32>
    %20 = arith.addf %18, %19 : vector<32x64xf32>
    %21 = math.tanh %20 : vector<32x64xf32>
    %cst_14 = arith.constant 0.000000e+00 : f32
    %22 = vector.broadcast %cst_14 : f32 to vector<32x1xf32>
    %cst_15 = arith.constant 0.000000e+00 : f32
    %23 = vector.broadcast %cst_15 : f32 to vector<32x1xf32>
    %cst_16 = arith.constant 0.000000e+00 : f32
    %24 = vector.broadcast %cst_16 : f32 to vector<32x1xf32>
    %cst_17 = arith.constant 0.000000e+00 : f32
    %25 = vector.broadcast %cst_17 : f32 to vector<32x1xf32>
    %cst_18 = arith.constant 0.000000e+00 : f32
    %26 = vector.broadcast %cst_18 : f32 to vector<32x1xf32>
    %cst_19 = arith.constant 0.000000e+00 : f32
    %27 = vector.broadcast %cst_19 : f32 to vector<32x64xf32>
    %cst_20 = arith.constant 0.000000e+00 : f32
    %28 = vector.broadcast %cst_20 : f32 to vector<32x8xf32>
    %cst_21 = arith.constant 0.000000e+00 : f32
    %29 = vector.broadcast %cst_21 : f32 to vector<32x8xf32>
    %cst_22 = arith.constant dense<0.000000e+00> : vector<32x16xf32>
    %30 = tpu.matmul %21, %6, %cst_22 {dimension_numbers = #tpu.dot_dimension_numbers<[1], [0], [0], [1], [0, 0, 1, 1], [], []>} : vector<32x64xf32>, vector<64x16xf32>, vector<32x16xf32> -> vector<32x16xf32>
    %31 = vector.broadcast %11 : vector<1x16xf32> to vector<32x16xf32>
    %32 = arith.addf %30, %31 : vector<32x16xf32>
    %cst_23 = arith.constant dense<0xFF800000> : vector<32xf32>
    %33 = vector.multi_reduction <maximumf>, %32, %cst_23 [1] : vector<32x16xf32> to vector<32xf32>
    %34 = vector.shape_cast %33 : vector<32xf32> to vector<32x1xf32>
    %35 = vector.broadcast %34 : vector<32x1xf32> to vector<32x16xf32>
    %36 = arith.subf %32, %35 : vector<32x16xf32>
    %37 = math.exp %36 : vector<32x16xf32>
    %cst_24 = arith.constant dense<0.000000e+00> : vector<32xf32>
    %38 = vector.multi_reduction <add>, %37, %cst_24 [1] : vector<32x16xf32> to vector<32xf32>
    %39 = vector.shape_cast %38 : vector<32xf32> to vector<32x1xf32>
    %40 = math.log %39 : vector<32x1xf32>
    %41 = arith.mulf %37, %36 : vector<32x16xf32>
    %cst_25 = arith.constant dense<0.000000e+00> : vector<32xf32>
    %42 = vector.multi_reduction <add>, %41, %cst_25 [1] : vector<32x16xf32> to vector<32xf32>
    %43 = vector.shape_cast %42 : vector<32xf32> to vector<32x1xf32>
    %44 = arith.divf %43, %39 : vector<32x1xf32>
    %45 = arith.subf %40, %44 : vector<32x1xf32>
    %cst_26 = arith.constant 0.000000e+00 : f32
    %46 = vector.broadcast %cst_26 : f32 to vector<32x1xf32>
    %47 = arith.subf %46, %40 : vector<32x1xf32>
    %48 = vector.broadcast %34 : vector<32x1xf32> to vector<32x16xf32>
    %49 = arith.cmpf oge, %32, %48 : vector<32x16xf32>
    %c16_i32 = arith.constant 16 : i32
    %50 = vector.broadcast %c16_i32 : i32 to vector<32x16xi32>
    %51 = arith.select %49, %0, %50 : vector<32x16xi1>, vector<32x16xi32>
    %cst_27 = arith.constant dense<2147483647> : vector<32xi32>
    %52 = vector.multi_reduction <minsi>, %51, %cst_27 [1] : vector<32x16xi32> to vector<32xi32>
    %53 = vector.shape_cast %52 : vector<32xi32> to vector<32x1xi32>
    %54 = vector.broadcast %53 : vector<32x1xi32> to vector<32x16xi32>
    %55 = arith.cmpi eq, %0, %54 : vector<32x16xi32>
    %56 = arith.extui %55 : vector<32x16xi1> to vector<32x16xi32>
    %57 = arith.sitofp %56 : vector<32x16xi32> to vector<32x16xf32>
    %58 = tpu.concatenate %57, %21 in 1 : vector<32x16xf32>, vector<32x64xf32> -> vector<32x80xf32>
    %cst_28 = arith.constant dense<0.000000e+00> : vector<32x64xf32>
    %59 = tpu.matmul %58, %4, %cst_28 {dimension_numbers = #tpu.dot_dimension_numbers<[1], [0], [0], [1], [0, 0, 1, 1], [], []>} : vector<32x80xf32>, vector<80x64xf32>, vector<32x64xf32> -> vector<32x64xf32>
    %60 = vector.broadcast %10 : vector<1x64xf32> to vector<32x64xf32>
    %61 = arith.addf %59, %60 : vector<32x64xf32>
    %62 = math.tanh %61 : vector<32x64xf32>
    %cst_29 = arith.constant 1.000000e+00 : f32
    %63 = vector.broadcast %cst_29 : f32 to vector<32x1xf32>
    %64 = arith.subf %63, %22 : vector<32x1xf32>
    %cst_30 = arith.constant 1.000000e+00 : f32
    %65 = vector.broadcast %cst_30 : f32 to vector<32x1xf32>
    %66 = arith.mulf %64, %65 : vector<32x1xf32>
    %67 = arith.mulf %45, %66 : vector<32x1xf32>
    %68 = arith.addf %23, %67 : vector<32x1xf32>
    %69 = arith.mulf %47, %64 : vector<32x1xf32>
    %70 = arith.addf %24, %69 : vector<32x1xf32>
    %cst_31 = arith.constant 1.000000e+00 : f32
    %71 = vector.broadcast %cst_31 : f32 to vector<32x1xf32>
    %72 = arith.mulf %71, %64 : vector<32x1xf32>
    %73 = arith.addf %25, %72 : vector<32x1xf32>
    %74 = arith.addf %26, %64 : vector<32x1xf32>
    %75 = vector.extract_strided_slice %57 {offsets = [0, 0], sizes = [32, 1], strides = [1, 1]} : vector<32x16xf32> to vector<32x1xf32>
    %76 = arith.mulf %64, %75 : vector<32x1xf32>
    %77 = vector.broadcast %76 : vector<32x1xf32> to vector<32x64xf32>
    %78 = arith.mulf %77, %62 : vector<32x64xf32>
    %79 = arith.addf %27, %78 : vector<32x64xf32>
    %80 = arith.maximumf %22, %75 : vector<32x1xf32>
    %c0_i32 = arith.constant 0 : i32
    %81 = vector.broadcast %c0_i32 : i32 to vector<32x8xi32>
    %82 = arith.cmpi eq, %2, %81 : vector<32x8xi32>
    %83 = arith.sitofp %53 : vector<32x1xi32> to vector<32x1xf32>
    %84 = vector.shape_cast %83 : vector<32x1xf32> to vector<32x1xf32>
    %85 = vector.broadcast %84 : vector<32x1xf32> to vector<32x8xf32>
    %86 = arith.select %82, %85, %28 : vector<32x8xi1>, vector<32x8xf32>
    %c0_i32_32 = arith.constant 0 : i32
    %87 = vector.broadcast %c0_i32_32 : i32 to vector<32x8xi32>
    %88 = arith.cmpi eq, %2, %87 : vector<32x8xi32>
    %89 = vector.shape_cast %45 : vector<32x1xf32> to vector<32x1xf32>
    %90 = vector.broadcast %89 : vector<32x1xf32> to vector<32x8xf32>
    %91 = arith.select %88, %90, %29 : vector<32x8xi1>, vector<32x8xf32>
    %cst_33 = arith.constant dense<0.000000e+00> : vector<32x16xf32>
    %92 = tpu.matmul %62, %6, %cst_33 {dimension_numbers = #tpu.dot_dimension_numbers<[1], [0], [0], [1], [0, 0, 1, 1], [], []>} : vector<32x64xf32>, vector<64x16xf32>, vector<32x16xf32> -> vector<32x16xf32>
    %93 = vector.broadcast %11 : vector<1x16xf32> to vector<32x16xf32>
    %94 = arith.addf %92, %93 : vector<32x16xf32>
    %cst_34 = arith.constant dense<0xFF800000> : vector<32xf32>
    %95 = vector.multi_reduction <maximumf>, %94, %cst_34 [1] : vector<32x16xf32> to vector<32xf32>
    %96 = vector.shape_cast %95 : vector<32xf32> to vector<32x1xf32>
    %97 = vector.broadcast %96 : vector<32x1xf32> to vector<32x16xf32>
    %98 = arith.subf %94, %97 : vector<32x16xf32>
    %99 = math.exp %98 : vector<32x16xf32>
    %cst_35 = arith.constant dense<0.000000e+00> : vector<32xf32>
    %100 = vector.multi_reduction <add>, %99, %cst_35 [1] : vector<32x16xf32> to vector<32xf32>
    %101 = vector.shape_cast %100 : vector<32xf32> to vector<32x1xf32>
    %102 = math.log %101 : vector<32x1xf32>
    %103 = arith.mulf %99, %98 : vector<32x16xf32>
    %cst_36 = arith.constant dense<0.000000e+00> : vector<32xf32>
    %104 = vector.multi_reduction <add>, %103, %cst_36 [1] : vector<32x16xf32> to vector<32xf32>
    %105 = vector.shape_cast %104 : vector<32xf32> to vector<32x1xf32>
    %106 = arith.divf %105, %101 : vector<32x1xf32>
    %107 = arith.subf %102, %106 : vector<32x1xf32>
    %cst_37 = arith.constant 0.000000e+00 : f32
    %108 = vector.broadcast %cst_37 : f32 to vector<32x1xf32>
    %109 = arith.subf %108, %102 : vector<32x1xf32>
    %110 = vector.broadcast %96 : vector<32x1xf32> to vector<32x16xf32>
    %111 = arith.cmpf oge, %94, %110 : vector<32x16xf32>
    %c16_i32_38 = arith.constant 16 : i32
    %112 = vector.broadcast %c16_i32_38 : i32 to vector<32x16xi32>
    %113 = arith.select %111, %0, %112 : vector<32x16xi1>, vector<32x16xi32>
    %cst_39 = arith.constant dense<2147483647> : vector<32xi32>
    %114 = vector.multi_reduction <minsi>, %113, %cst_39 [1] : vector<32x16xi32> to vector<32xi32>
    %115 = vector.shape_cast %114 : vector<32xi32> to vector<32x1xi32>
    %116 = vector.broadcast %115 : vector<32x1xi32> to vector<32x16xi32>
    %117 = arith.cmpi eq, %0, %116 : vector<32x16xi32>
    %118 = arith.extui %117 : vector<32x16xi1> to vector<32x16xi32>
    %119 = arith.sitofp %118 : vector<32x16xi32> to vector<32x16xf32>
    %120 = tpu.concatenate %119, %62 in 1 : vector<32x16xf32>, vector<32x64xf32> -> vector<32x80xf32>
    %cst_40 = arith.constant dense<0.000000e+00> : vector<32x64xf32>
    %121 = tpu.matmul %120, %4, %cst_40 {dimension_numbers = #tpu.dot_dimension_numbers<[1], [0], [0], [1], [0, 0, 1, 1], [], []>} : vector<32x80xf32>, vector<80x64xf32>, vector<32x64xf32> -> vector<32x64xf32>
    %122 = vector.broadcast %10 : vector<1x64xf32> to vector<32x64xf32>
    %123 = arith.addf %121, %122 : vector<32x64xf32>
    %124 = math.tanh %123 : vector<32x64xf32>
    %cst_41 = arith.constant 1.000000e+00 : f32
    %125 = vector.broadcast %cst_41 : f32 to vector<32x1xf32>
    %126 = arith.subf %125, %80 : vector<32x1xf32>
    %cst_42 = arith.constant 1.000000e+00 : f32
    %127 = vector.broadcast %cst_42 : f32 to vector<32x1xf32>
    %128 = arith.mulf %126, %127 : vector<32x1xf32>
    %129 = arith.mulf %107, %128 : vector<32x1xf32>
    %130 = arith.addf %68, %129 : vector<32x1xf32>
    %131 = arith.mulf %109, %126 : vector<32x1xf32>
    %132 = arith.addf %70, %131 : vector<32x1xf32>
    %cst_43 = arith.constant 1.000000e+00 : f32
    %133 = vector.broadcast %cst_43 : f32 to vector<32x1xf32>
    %134 = arith.mulf %133, %126 : vector<32x1xf32>
    %135 = arith.addf %73, %134 : vector<32x1xf32>
    %136 = arith.addf %74, %126 : vector<32x1xf32>
    %137 = vector.extract_strided_slice %119 {offsets = [0, 0], sizes = [32, 1], strides = [1, 1]} : vector<32x16xf32> to vector<32x1xf32>
    %138 = arith.mulf %126, %137 : vector<32x1xf32>
    %139 = vector.broadcast %138 : vector<32x1xf32> to vector<32x64xf32>
    %140 = arith.mulf %139, %124 : vector<32x64xf32>
    %141 = arith.addf %79, %140 : vector<32x64xf32>
    %142 = arith.maximumf %80, %137 : vector<32x1xf32>
    %c1_i32 = arith.constant 1 : i32
    %143 = vector.broadcast %c1_i32 : i32 to vector<32x8xi32>
    %144 = arith.cmpi eq, %2, %143 : vector<32x8xi32>
    %145 = arith.sitofp %115 : vector<32x1xi32> to vector<32x1xf32>
    %146 = vector.shape_cast %145 : vector<32x1xf32> to vector<32x1xf32>
    %147 = vector.broadcast %146 : vector<32x1xf32> to vector<32x8xf32>
    %148 = arith.select %144, %147, %86 : vector<32x8xi1>, vector<32x8xf32>
    %c1_i32_44 = arith.constant 1 : i32
    %149 = vector.broadcast %c1_i32_44 : i32 to vector<32x8xi32>
    %150 = arith.cmpi eq, %2, %149 : vector<32x8xi32>
    %151 = vector.shape_cast %107 : vector<32x1xf32> to vector<32x1xf32>
    %152 = vector.broadcast %151 : vector<32x1xf32> to vector<32x8xf32>
    %153 = arith.select %150, %152, %91 : vector<32x8xi1>, vector<32x8xf32>
    %cst_45 = arith.constant dense<0.000000e+00> : vector<32x16xf32>
    %154 = tpu.matmul %124, %6, %cst_45 {dimension_numbers = #tpu.dot_dimension_numbers<[1], [0], [0], [1], [0, 0, 1, 1], [], []>} : vector<32x64xf32>, vector<64x16xf32>, vector<32x16xf32> -> vector<32x16xf32>
    %155 = vector.broadcast %11 : vector<1x16xf32> to vector<32x16xf32>
    %156 = arith.addf %154, %155 : vector<32x16xf32>
    %cst_46 = arith.constant dense<0xFF800000> : vector<32xf32>
    %157 = vector.multi_reduction <maximumf>, %156, %cst_46 [1] : vector<32x16xf32> to vector<32xf32>
    %158 = vector.shape_cast %157 : vector<32xf32> to vector<32x1xf32>
    %159 = vector.broadcast %158 : vector<32x1xf32> to vector<32x16xf32>
    %160 = arith.subf %156, %159 : vector<32x16xf32>
    %161 = math.exp %160 : vector<32x16xf32>
    %cst_47 = arith.constant dense<0.000000e+00> : vector<32xf32>
    %162 = vector.multi_reduction <add>, %161, %cst_47 [1] : vector<32x16xf32> to vector<32xf32>
    %163 = vector.shape_cast %162 : vector<32xf32> to vector<32x1xf32>
    %164 = math.log %163 : vector<32x1xf32>
    %165 = arith.mulf %161, %160 : vector<32x16xf32>
    %cst_48 = arith.constant dense<0.000000e+00> : vector<32xf32>
    %166 = vector.multi_reduction <add>, %165, %cst_48 [1] : vector<32x16xf32> to vector<32xf32>
    %167 = vector.shape_cast %166 : vector<32xf32> to vector<32x1xf32>
    %168 = arith.divf %167, %163 : vector<32x1xf32>
    %169 = arith.subf %164, %168 : vector<32x1xf32>
    %cst_49 = arith.constant 0.000000e+00 : f32
    %170 = vector.broadcast %cst_49 : f32 to vector<32x1xf32>
    %171 = arith.subf %170, %164 : vector<32x1xf32>
    %172 = vector.broadcast %158 : vector<32x1xf32> to vector<32x16xf32>
    %173 = arith.cmpf oge, %156, %172 : vector<32x16xf32>
    %c16_i32_50 = arith.constant 16 : i32
    %174 = vector.broadcast %c16_i32_50 : i32 to vector<32x16xi32>
    %175 = arith.select %173, %0, %174 : vector<32x16xi1>, vector<32x16xi32>
    %cst_51 = arith.constant dense<2147483647> : vector<32xi32>
    %176 = vector.multi_reduction <minsi>, %175, %cst_51 [1] : vector<32x16xi32> to vector<32xi32>
    %177 = vector.shape_cast %176 : vector<32xi32> to vector<32x1xi32>
    %178 = vector.broadcast %177 : vector<32x1xi32> to vector<32x16xi32>
    %179 = arith.cmpi eq, %0, %178 : vector<32x16xi32>
    %180 = arith.extui %179 : vector<32x16xi1> to vector<32x16xi32>
    %181 = arith.sitofp %180 : vector<32x16xi32> to vector<32x16xf32>
    %182 = tpu.concatenate %181, %124 in 1 : vector<32x16xf32>, vector<32x64xf32> -> vector<32x80xf32>
    %cst_52 = arith.constant dense<0.000000e+00> : vector<32x64xf32>
    %183 = tpu.matmul %182, %4, %cst_52 {dimension_numbers = #tpu.dot_dimension_numbers<[1], [0], [0], [1], [0, 0, 1, 1], [], []>} : vector<32x80xf32>, vector<80x64xf32>, vector<32x64xf32> -> vector<32x64xf32>
    %184 = vector.broadcast %10 : vector<1x64xf32> to vector<32x64xf32>
    %185 = arith.addf %183, %184 : vector<32x64xf32>
    %186 = math.tanh %185 : vector<32x64xf32>
    %cst_53 = arith.constant 1.000000e+00 : f32
    %187 = vector.broadcast %cst_53 : f32 to vector<32x1xf32>
    %188 = arith.subf %187, %142 : vector<32x1xf32>
    %cst_54 = arith.constant 1.000000e+00 : f32
    %189 = vector.broadcast %cst_54 : f32 to vector<32x1xf32>
    %190 = arith.mulf %188, %189 : vector<32x1xf32>
    %191 = arith.mulf %169, %190 : vector<32x1xf32>
    %192 = arith.addf %130, %191 : vector<32x1xf32>
    %193 = arith.mulf %171, %188 : vector<32x1xf32>
    %194 = arith.addf %132, %193 : vector<32x1xf32>
    %cst_55 = arith.constant 1.000000e+00 : f32
    %195 = vector.broadcast %cst_55 : f32 to vector<32x1xf32>
    %196 = arith.mulf %195, %188 : vector<32x1xf32>
    %197 = arith.addf %135, %196 : vector<32x1xf32>
    %198 = arith.addf %136, %188 : vector<32x1xf32>
    %199 = vector.extract_strided_slice %181 {offsets = [0, 0], sizes = [32, 1], strides = [1, 1]} : vector<32x16xf32> to vector<32x1xf32>
    %200 = arith.mulf %188, %199 : vector<32x1xf32>
    %201 = vector.broadcast %200 : vector<32x1xf32> to vector<32x64xf32>
    %202 = arith.mulf %201, %186 : vector<32x64xf32>
    %203 = arith.addf %141, %202 : vector<32x64xf32>
    %204 = arith.maximumf %142, %199 : vector<32x1xf32>
    %c2_i32 = arith.constant 2 : i32
    %205 = vector.broadcast %c2_i32 : i32 to vector<32x8xi32>
    %206 = arith.cmpi eq, %2, %205 : vector<32x8xi32>
    %207 = arith.sitofp %177 : vector<32x1xi32> to vector<32x1xf32>
    %208 = vector.shape_cast %207 : vector<32x1xf32> to vector<32x1xf32>
    %209 = vector.broadcast %208 : vector<32x1xf32> to vector<32x8xf32>
    %210 = arith.select %206, %209, %148 : vector<32x8xi1>, vector<32x8xf32>
    %c2_i32_56 = arith.constant 2 : i32
    %211 = vector.broadcast %c2_i32_56 : i32 to vector<32x8xi32>
    %212 = arith.cmpi eq, %2, %211 : vector<32x8xi32>
    %213 = vector.shape_cast %169 : vector<32x1xf32> to vector<32x1xf32>
    %214 = vector.broadcast %213 : vector<32x1xf32> to vector<32x8xf32>
    %215 = arith.select %212, %214, %153 : vector<32x8xi1>, vector<32x8xf32>
    %cst_57 = arith.constant dense<0.000000e+00> : vector<32x16xf32>
    %216 = tpu.matmul %186, %6, %cst_57 {dimension_numbers = #tpu.dot_dimension_numbers<[1], [0], [0], [1], [0, 0, 1, 1], [], []>} : vector<32x64xf32>, vector<64x16xf32>, vector<32x16xf32> -> vector<32x16xf32>
    %217 = vector.broadcast %11 : vector<1x16xf32> to vector<32x16xf32>
    %218 = arith.addf %216, %217 : vector<32x16xf32>
    %cst_58 = arith.constant dense<0xFF800000> : vector<32xf32>
    %219 = vector.multi_reduction <maximumf>, %218, %cst_58 [1] : vector<32x16xf32> to vector<32xf32>
    %220 = vector.shape_cast %219 : vector<32xf32> to vector<32x1xf32>
    %221 = vector.broadcast %220 : vector<32x1xf32> to vector<32x16xf32>
    %222 = arith.subf %218, %221 : vector<32x16xf32>
    %223 = math.exp %222 : vector<32x16xf32>
    %cst_59 = arith.constant dense<0.000000e+00> : vector<32xf32>
    %224 = vector.multi_reduction <add>, %223, %cst_59 [1] : vector<32x16xf32> to vector<32xf32>
    %225 = vector.shape_cast %224 : vector<32xf32> to vector<32x1xf32>
    %226 = math.log %225 : vector<32x1xf32>
    %227 = arith.mulf %223, %222 : vector<32x16xf32>
    %cst_60 = arith.constant dense<0.000000e+00> : vector<32xf32>
    %228 = vector.multi_reduction <add>, %227, %cst_60 [1] : vector<32x16xf32> to vector<32xf32>
    %229 = vector.shape_cast %228 : vector<32xf32> to vector<32x1xf32>
    %230 = arith.divf %229, %225 : vector<32x1xf32>
    %231 = arith.subf %226, %230 : vector<32x1xf32>
    %cst_61 = arith.constant 0.000000e+00 : f32
    %232 = vector.broadcast %cst_61 : f32 to vector<32x1xf32>
    %233 = arith.subf %232, %226 : vector<32x1xf32>
    %234 = vector.broadcast %220 : vector<32x1xf32> to vector<32x16xf32>
    %235 = arith.cmpf oge, %218, %234 : vector<32x16xf32>
    %c16_i32_62 = arith.constant 16 : i32
    %236 = vector.broadcast %c16_i32_62 : i32 to vector<32x16xi32>
    %237 = arith.select %235, %0, %236 : vector<32x16xi1>, vector<32x16xi32>
    %cst_63 = arith.constant dense<2147483647> : vector<32xi32>
    %238 = vector.multi_reduction <minsi>, %237, %cst_63 [1] : vector<32x16xi32> to vector<32xi32>
    %239 = vector.shape_cast %238 : vector<32xi32> to vector<32x1xi32>
    %240 = vector.broadcast %239 : vector<32x1xi32> to vector<32x16xi32>
    %241 = arith.cmpi eq, %0, %240 : vector<32x16xi32>
    %242 = arith.extui %241 : vector<32x16xi1> to vector<32x16xi32>
    %243 = arith.sitofp %242 : vector<32x16xi32> to vector<32x16xf32>
    %244 = tpu.concatenate %243, %186 in 1 : vector<32x16xf32>, vector<32x64xf32> -> vector<32x80xf32>
    %cst_64 = arith.constant dense<0.000000e+00> : vector<32x64xf32>
    %245 = tpu.matmul %244, %4, %cst_64 {dimension_numbers = #tpu.dot_dimension_numbers<[1], [0], [0], [1], [0, 0, 1, 1], [], []>} : vector<32x80xf32>, vector<80x64xf32>, vector<32x64xf32> -> vector<32x64xf32>
    %246 = vector.broadcast %10 : vector<1x64xf32> to vector<32x64xf32>
    %247 = arith.addf %245, %246 : vector<32x64xf32>
    %248 = math.tanh %247 : vector<32x64xf32>
    %cst_65 = arith.constant 1.000000e+00 : f32
    %249 = vector.broadcast %cst_65 : f32 to vector<32x1xf32>
    %250 = arith.subf %249, %204 : vector<32x1xf32>
    %cst_66 = arith.constant 1.000000e+00 : f32
    %251 = vector.broadcast %cst_66 : f32 to vector<32x1xf32>
    %252 = arith.mulf %250, %251 : vector<32x1xf32>
    %253 = arith.mulf %231, %252 : vector<32x1xf32>
    %254 = arith.addf %192, %253 : vector<32x1xf32>
    %255 = arith.mulf %233, %250 : vector<32x1xf32>
    %256 = arith.addf %194, %255 : vector<32x1xf32>
    %cst_67 = arith.constant 1.000000e+00 : f32
    %257 = vector.broadcast %cst_67 : f32 to vector<32x1xf32>
    %258 = arith.mulf %257, %250 : vector<32x1xf32>
    %259 = arith.addf %197, %258 : vector<32x1xf32>
    %260 = arith.addf %198, %250 : vector<32x1xf32>
    %261 = vector.extract_strided_slice %243 {offsets = [0, 0], sizes = [32, 1], strides = [1, 1]} : vector<32x16xf32> to vector<32x1xf32>
    %262 = arith.mulf %250, %261 : vector<32x1xf32>
    %263 = vector.broadcast %262 : vector<32x1xf32> to vector<32x64xf32>
    %264 = arith.mulf %263, %248 : vector<32x64xf32>
    %265 = arith.addf %203, %264 : vector<32x64xf32>
    %266 = arith.maximumf %204, %261 : vector<32x1xf32>
    %c3_i32 = arith.constant 3 : i32
    %267 = vector.broadcast %c3_i32 : i32 to vector<32x8xi32>
    %268 = arith.cmpi eq, %2, %267 : vector<32x8xi32>
    %269 = arith.sitofp %239 : vector<32x1xi32> to vector<32x1xf32>
    %270 = vector.shape_cast %269 : vector<32x1xf32> to vector<32x1xf32>
    %271 = vector.broadcast %270 : vector<32x1xf32> to vector<32x8xf32>
    %272 = arith.select %268, %271, %210 : vector<32x8xi1>, vector<32x8xf32>
    %c3_i32_68 = arith.constant 3 : i32
    %273 = vector.broadcast %c3_i32_68 : i32 to vector<32x8xi32>
    %274 = arith.cmpi eq, %2, %273 : vector<32x8xi32>
    %275 = vector.shape_cast %231 : vector<32x1xf32> to vector<32x1xf32>
    %276 = vector.broadcast %275 : vector<32x1xf32> to vector<32x8xf32>
    %277 = arith.select %274, %276, %215 : vector<32x8xi1>, vector<32x8xf32>
    %cst_69 = arith.constant dense<0.000000e+00> : vector<32x16xf32>
    %278 = tpu.matmul %248, %6, %cst_69 {dimension_numbers = #tpu.dot_dimension_numbers<[1], [0], [0], [1], [0, 0, 1, 1], [], []>} : vector<32x64xf32>, vector<64x16xf32>, vector<32x16xf32> -> vector<32x16xf32>
    %279 = vector.broadcast %11 : vector<1x16xf32> to vector<32x16xf32>
    %280 = arith.addf %278, %279 : vector<32x16xf32>
    %cst_70 = arith.constant dense<0xFF800000> : vector<32xf32>
    %281 = vector.multi_reduction <maximumf>, %280, %cst_70 [1] : vector<32x16xf32> to vector<32xf32>
    %282 = vector.shape_cast %281 : vector<32xf32> to vector<32x1xf32>
    %283 = vector.broadcast %282 : vector<32x1xf32> to vector<32x16xf32>
    %284 = arith.subf %280, %283 : vector<32x16xf32>
    %285 = math.exp %284 : vector<32x16xf32>
    %cst_71 = arith.constant dense<0.000000e+00> : vector<32xf32>
    %286 = vector.multi_reduction <add>, %285, %cst_71 [1] : vector<32x16xf32> to vector<32xf32>
    %287 = vector.shape_cast %286 : vector<32xf32> to vector<32x1xf32>
    %288 = math.log %287 : vector<32x1xf32>
    %289 = arith.mulf %285, %284 : vector<32x16xf32>
    %cst_72 = arith.constant dense<0.000000e+00> : vector<32xf32>
    %290 = vector.multi_reduction <add>, %289, %cst_72 [1] : vector<32x16xf32> to vector<32xf32>
    %291 = vector.shape_cast %290 : vector<32xf32> to vector<32x1xf32>
    %292 = arith.divf %291, %287 : vector<32x1xf32>
    %293 = arith.subf %288, %292 : vector<32x1xf32>
    %cst_73 = arith.constant 0.000000e+00 : f32
    %294 = vector.broadcast %cst_73 : f32 to vector<32x1xf32>
    %295 = arith.subf %294, %288 : vector<32x1xf32>
    %296 = vector.broadcast %282 : vector<32x1xf32> to vector<32x16xf32>
    %297 = arith.cmpf oge, %280, %296 : vector<32x16xf32>
    %c16_i32_74 = arith.constant 16 : i32
    %298 = vector.broadcast %c16_i32_74 : i32 to vector<32x16xi32>
    %299 = arith.select %297, %0, %298 : vector<32x16xi1>, vector<32x16xi32>
    %cst_75 = arith.constant dense<2147483647> : vector<32xi32>
    %300 = vector.multi_reduction <minsi>, %299, %cst_75 [1] : vector<32x16xi32> to vector<32xi32>
    %301 = vector.shape_cast %300 : vector<32xi32> to vector<32x1xi32>
    %302 = vector.broadcast %301 : vector<32x1xi32> to vector<32x16xi32>
    %303 = arith.cmpi eq, %0, %302 : vector<32x16xi32>
    %304 = arith.extui %303 : vector<32x16xi1> to vector<32x16xi32>
    %305 = arith.sitofp %304 : vector<32x16xi32> to vector<32x16xf32>
    %306 = tpu.concatenate %305, %248 in 1 : vector<32x16xf32>, vector<32x64xf32> -> vector<32x80xf32>
    %cst_76 = arith.constant dense<0.000000e+00> : vector<32x64xf32>
    %307 = tpu.matmul %306, %4, %cst_76 {dimension_numbers = #tpu.dot_dimension_numbers<[1], [0], [0], [1], [0, 0, 1, 1], [], []>} : vector<32x80xf32>, vector<80x64xf32>, vector<32x64xf32> -> vector<32x64xf32>
    %308 = vector.broadcast %10 : vector<1x64xf32> to vector<32x64xf32>
    %309 = arith.addf %307, %308 : vector<32x64xf32>
    %310 = math.tanh %309 : vector<32x64xf32>
    %cst_77 = arith.constant 1.000000e+00 : f32
    %311 = vector.broadcast %cst_77 : f32 to vector<32x1xf32>
    %312 = arith.subf %311, %266 : vector<32x1xf32>
    %cst_78 = arith.constant 1.000000e+00 : f32
    %313 = vector.broadcast %cst_78 : f32 to vector<32x1xf32>
    %314 = arith.mulf %312, %313 : vector<32x1xf32>
    %315 = arith.mulf %293, %314 : vector<32x1xf32>
    %316 = arith.addf %254, %315 : vector<32x1xf32>
    %317 = arith.mulf %295, %312 : vector<32x1xf32>
    %318 = arith.addf %256, %317 : vector<32x1xf32>
    %cst_79 = arith.constant 1.000000e+00 : f32
    %319 = vector.broadcast %cst_79 : f32 to vector<32x1xf32>
    %320 = arith.mulf %319, %312 : vector<32x1xf32>
    %321 = arith.addf %259, %320 : vector<32x1xf32>
    %322 = arith.addf %260, %312 : vector<32x1xf32>
    %323 = vector.extract_strided_slice %305 {offsets = [0, 0], sizes = [32, 1], strides = [1, 1]} : vector<32x16xf32> to vector<32x1xf32>
    %324 = arith.mulf %312, %323 : vector<32x1xf32>
    %325 = vector.broadcast %324 : vector<32x1xf32> to vector<32x64xf32>
    %326 = arith.mulf %325, %310 : vector<32x64xf32>
    %327 = arith.addf %265, %326 : vector<32x64xf32>
    %328 = arith.maximumf %266, %323 : vector<32x1xf32>
    %c4_i32 = arith.constant 4 : i32
    %329 = vector.broadcast %c4_i32 : i32 to vector<32x8xi32>
    %330 = arith.cmpi eq, %2, %329 : vector<32x8xi32>
    %331 = arith.sitofp %301 : vector<32x1xi32> to vector<32x1xf32>
    %332 = vector.shape_cast %331 : vector<32x1xf32> to vector<32x1xf32>
    %333 = vector.broadcast %332 : vector<32x1xf32> to vector<32x8xf32>
    %334 = arith.select %330, %333, %272 : vector<32x8xi1>, vector<32x8xf32>
    %c4_i32_80 = arith.constant 4 : i32
    %335 = vector.broadcast %c4_i32_80 : i32 to vector<32x8xi32>
    %336 = arith.cmpi eq, %2, %335 : vector<32x8xi32>
    %337 = vector.shape_cast %293 : vector<32x1xf32> to vector<32x1xf32>
    %338 = vector.broadcast %337 : vector<32x1xf32> to vector<32x8xf32>
    %339 = arith.select %336, %338, %277 : vector<32x8xi1>, vector<32x8xf32>
    %cst_81 = arith.constant dense<0.000000e+00> : vector<32x16xf32>
    %340 = tpu.matmul %310, %6, %cst_81 {dimension_numbers = #tpu.dot_dimension_numbers<[1], [0], [0], [1], [0, 0, 1, 1], [], []>} : vector<32x64xf32>, vector<64x16xf32>, vector<32x16xf32> -> vector<32x16xf32>
    %341 = vector.broadcast %11 : vector<1x16xf32> to vector<32x16xf32>
    %342 = arith.addf %340, %341 : vector<32x16xf32>
    %cst_82 = arith.constant dense<0xFF800000> : vector<32xf32>
    %343 = vector.multi_reduction <maximumf>, %342, %cst_82 [1] : vector<32x16xf32> to vector<32xf32>
    %344 = vector.shape_cast %343 : vector<32xf32> to vector<32x1xf32>
    %345 = vector.broadcast %344 : vector<32x1xf32> to vector<32x16xf32>
    %346 = arith.subf %342, %345 : vector<32x16xf32>
    %347 = math.exp %346 : vector<32x16xf32>
    %cst_83 = arith.constant dense<0.000000e+00> : vector<32xf32>
    %348 = vector.multi_reduction <add>, %347, %cst_83 [1] : vector<32x16xf32> to vector<32xf32>
    %349 = vector.shape_cast %348 : vector<32xf32> to vector<32x1xf32>
    %350 = math.log %349 : vector<32x1xf32>
    %351 = arith.mulf %347, %346 : vector<32x16xf32>
    %cst_84 = arith.constant dense<0.000000e+00> : vector<32xf32>
    %352 = vector.multi_reduction <add>, %351, %cst_84 [1] : vector<32x16xf32> to vector<32xf32>
    %353 = vector.shape_cast %352 : vector<32xf32> to vector<32x1xf32>
    %354 = arith.divf %353, %349 : vector<32x1xf32>
    %355 = arith.subf %350, %354 : vector<32x1xf32>
    %cst_85 = arith.constant 0.000000e+00 : f32
    %356 = vector.broadcast %cst_85 : f32 to vector<32x1xf32>
    %357 = arith.subf %356, %350 : vector<32x1xf32>
    %358 = vector.broadcast %344 : vector<32x1xf32> to vector<32x16xf32>
    %359 = arith.cmpf oge, %342, %358 : vector<32x16xf32>
    %c16_i32_86 = arith.constant 16 : i32
    %360 = vector.broadcast %c16_i32_86 : i32 to vector<32x16xi32>
    %361 = arith.select %359, %0, %360 : vector<32x16xi1>, vector<32x16xi32>
    %cst_87 = arith.constant dense<2147483647> : vector<32xi32>
    %362 = vector.multi_reduction <minsi>, %361, %cst_87 [1] : vector<32x16xi32> to vector<32xi32>
    %363 = vector.shape_cast %362 : vector<32xi32> to vector<32x1xi32>
    %364 = vector.broadcast %363 : vector<32x1xi32> to vector<32x16xi32>
    %365 = arith.cmpi eq, %0, %364 : vector<32x16xi32>
    %366 = arith.extui %365 : vector<32x16xi1> to vector<32x16xi32>
    %367 = arith.sitofp %366 : vector<32x16xi32> to vector<32x16xf32>
    %368 = tpu.concatenate %367, %310 in 1 : vector<32x16xf32>, vector<32x64xf32> -> vector<32x80xf32>
    %cst_88 = arith.constant dense<0.000000e+00> : vector<32x64xf32>
    %369 = tpu.matmul %368, %4, %cst_88 {dimension_numbers = #tpu.dot_dimension_numbers<[1], [0], [0], [1], [0, 0, 1, 1], [], []>} : vector<32x80xf32>, vector<80x64xf32>, vector<32x64xf32> -> vector<32x64xf32>
    %370 = vector.broadcast %10 : vector<1x64xf32> to vector<32x64xf32>
    %371 = arith.addf %369, %370 : vector<32x64xf32>
    %372 = math.tanh %371 : vector<32x64xf32>
    %cst_89 = arith.constant 1.000000e+00 : f32
    %373 = vector.broadcast %cst_89 : f32 to vector<32x1xf32>
    %374 = arith.subf %373, %328 : vector<32x1xf32>
    %cst_90 = arith.constant 1.000000e+00 : f32
    %375 = vector.broadcast %cst_90 : f32 to vector<32x1xf32>
    %376 = arith.mulf %374, %375 : vector<32x1xf32>
    %377 = arith.mulf %355, %376 : vector<32x1xf32>
    %378 = arith.addf %316, %377 : vector<32x1xf32>
    %379 = arith.mulf %357, %374 : vector<32x1xf32>
    %380 = arith.addf %318, %379 : vector<32x1xf32>
    %cst_91 = arith.constant 1.000000e+00 : f32
    %381 = vector.broadcast %cst_91 : f32 to vector<32x1xf32>
    %382 = arith.mulf %381, %374 : vector<32x1xf32>
    %383 = arith.addf %321, %382 : vector<32x1xf32>
    %384 = arith.addf %322, %374 : vector<32x1xf32>
    %385 = vector.extract_strided_slice %367 {offsets = [0, 0], sizes = [32, 1], strides = [1, 1]} : vector<32x16xf32> to vector<32x1xf32>
    %386 = arith.mulf %374, %385 : vector<32x1xf32>
    %387 = vector.broadcast %386 : vector<32x1xf32> to vector<32x64xf32>
    %388 = arith.mulf %387, %372 : vector<32x64xf32>
    %389 = arith.addf %327, %388 : vector<32x64xf32>
    %390 = arith.maximumf %328, %385 : vector<32x1xf32>
    %c5_i32 = arith.constant 5 : i32
    %391 = vector.broadcast %c5_i32 : i32 to vector<32x8xi32>
    %392 = arith.cmpi eq, %2, %391 : vector<32x8xi32>
    %393 = arith.sitofp %363 : vector<32x1xi32> to vector<32x1xf32>
    %394 = vector.shape_cast %393 : vector<32x1xf32> to vector<32x1xf32>
    %395 = vector.broadcast %394 : vector<32x1xf32> to vector<32x8xf32>
    %396 = arith.select %392, %395, %334 : vector<32x8xi1>, vector<32x8xf32>
    %c5_i32_92 = arith.constant 5 : i32
    %397 = vector.broadcast %c5_i32_92 : i32 to vector<32x8xi32>
    %398 = arith.cmpi eq, %2, %397 : vector<32x8xi32>
    %399 = vector.shape_cast %355 : vector<32x1xf32> to vector<32x1xf32>
    %400 = vector.broadcast %399 : vector<32x1xf32> to vector<32x8xf32>
    %401 = arith.select %398, %400, %339 : vector<32x8xi1>, vector<32x8xf32>
    %cst_93 = arith.constant dense<0.000000e+00> : vector<32x16xf32>
    %402 = tpu.matmul %372, %6, %cst_93 {dimension_numbers = #tpu.dot_dimension_numbers<[1], [0], [0], [1], [0, 0, 1, 1], [], []>} : vector<32x64xf32>, vector<64x16xf32>, vector<32x16xf32> -> vector<32x16xf32>
    %403 = vector.broadcast %11 : vector<1x16xf32> to vector<32x16xf32>
    %404 = arith.addf %402, %403 : vector<32x16xf32>
    %cst_94 = arith.constant dense<0xFF800000> : vector<32xf32>
    %405 = vector.multi_reduction <maximumf>, %404, %cst_94 [1] : vector<32x16xf32> to vector<32xf32>
    %406 = vector.shape_cast %405 : vector<32xf32> to vector<32x1xf32>
    %407 = vector.broadcast %406 : vector<32x1xf32> to vector<32x16xf32>
    %408 = arith.subf %404, %407 : vector<32x16xf32>
    %409 = math.exp %408 : vector<32x16xf32>
    %cst_95 = arith.constant dense<0.000000e+00> : vector<32xf32>
    %410 = vector.multi_reduction <add>, %409, %cst_95 [1] : vector<32x16xf32> to vector<32xf32>
    %411 = vector.shape_cast %410 : vector<32xf32> to vector<32x1xf32>
    %412 = math.log %411 : vector<32x1xf32>
    %413 = arith.mulf %409, %408 : vector<32x16xf32>
    %cst_96 = arith.constant dense<0.000000e+00> : vector<32xf32>
    %414 = vector.multi_reduction <add>, %413, %cst_96 [1] : vector<32x16xf32> to vector<32xf32>
    %415 = vector.shape_cast %414 : vector<32xf32> to vector<32x1xf32>
    %416 = arith.divf %415, %411 : vector<32x1xf32>
    %417 = arith.subf %412, %416 : vector<32x1xf32>
    %cst_97 = arith.constant 0.000000e+00 : f32
    %418 = vector.broadcast %cst_97 : f32 to vector<32x1xf32>
    %419 = arith.subf %418, %412 : vector<32x1xf32>
    %420 = vector.broadcast %406 : vector<32x1xf32> to vector<32x16xf32>
    %421 = arith.cmpf oge, %404, %420 : vector<32x16xf32>
    %c16_i32_98 = arith.constant 16 : i32
    %422 = vector.broadcast %c16_i32_98 : i32 to vector<32x16xi32>
    %423 = arith.select %421, %0, %422 : vector<32x16xi1>, vector<32x16xi32>
    %cst_99 = arith.constant dense<2147483647> : vector<32xi32>
    %424 = vector.multi_reduction <minsi>, %423, %cst_99 [1] : vector<32x16xi32> to vector<32xi32>
    %425 = vector.shape_cast %424 : vector<32xi32> to vector<32x1xi32>
    %426 = vector.broadcast %425 : vector<32x1xi32> to vector<32x16xi32>
    %427 = arith.cmpi eq, %0, %426 : vector<32x16xi32>
    %428 = arith.extui %427 : vector<32x16xi1> to vector<32x16xi32>
    %429 = arith.sitofp %428 : vector<32x16xi32> to vector<32x16xf32>
    %430 = tpu.concatenate %429, %372 in 1 : vector<32x16xf32>, vector<32x64xf32> -> vector<32x80xf32>
    %cst_100 = arith.constant dense<0.000000e+00> : vector<32x64xf32>
    %431 = tpu.matmul %430, %4, %cst_100 {dimension_numbers = #tpu.dot_dimension_numbers<[1], [0], [0], [1], [0, 0, 1, 1], [], []>} : vector<32x80xf32>, vector<80x64xf32>, vector<32x64xf32> -> vector<32x64xf32>
    %432 = vector.broadcast %10 : vector<1x64xf32> to vector<32x64xf32>
    %433 = arith.addf %431, %432 : vector<32x64xf32>
    %434 = math.tanh %433 : vector<32x64xf32>
    %cst_101 = arith.constant 1.000000e+00 : f32
    %435 = vector.broadcast %cst_101 : f32 to vector<32x1xf32>
    %436 = arith.subf %435, %390 : vector<32x1xf32>
    %cst_102 = arith.constant 1.000000e+00 : f32
    %437 = vector.broadcast %cst_102 : f32 to vector<32x1xf32>
    %438 = arith.mulf %436, %437 : vector<32x1xf32>
    %439 = arith.mulf %417, %438 : vector<32x1xf32>
    %440 = arith.addf %378, %439 : vector<32x1xf32>
    %441 = arith.mulf %419, %436 : vector<32x1xf32>
    %442 = arith.addf %380, %441 : vector<32x1xf32>
    %cst_103 = arith.constant 1.000000e+00 : f32
    %443 = vector.broadcast %cst_103 : f32 to vector<32x1xf32>
    %444 = arith.mulf %443, %436 : vector<32x1xf32>
    %445 = arith.addf %383, %444 : vector<32x1xf32>
    %446 = arith.addf %384, %436 : vector<32x1xf32>
    %447 = vector.extract_strided_slice %429 {offsets = [0, 0], sizes = [32, 1], strides = [1, 1]} : vector<32x16xf32> to vector<32x1xf32>
    %448 = arith.mulf %436, %447 : vector<32x1xf32>
    %449 = vector.broadcast %448 : vector<32x1xf32> to vector<32x64xf32>
    %450 = arith.mulf %449, %434 : vector<32x64xf32>
    %451 = arith.addf %389, %450 : vector<32x64xf32>
    %452 = arith.maximumf %390, %447 : vector<32x1xf32>
    %c6_i32 = arith.constant 6 : i32
    %453 = vector.broadcast %c6_i32 : i32 to vector<32x8xi32>
    %454 = arith.cmpi eq, %2, %453 : vector<32x8xi32>
    %455 = arith.sitofp %425 : vector<32x1xi32> to vector<32x1xf32>
    %456 = vector.shape_cast %455 : vector<32x1xf32> to vector<32x1xf32>
    %457 = vector.broadcast %456 : vector<32x1xf32> to vector<32x8xf32>
    %458 = arith.select %454, %457, %396 : vector<32x8xi1>, vector<32x8xf32>
    %c6_i32_104 = arith.constant 6 : i32
    %459 = vector.broadcast %c6_i32_104 : i32 to vector<32x8xi32>
    %460 = arith.cmpi eq, %2, %459 : vector<32x8xi32>
    %461 = vector.shape_cast %417 : vector<32x1xf32> to vector<32x1xf32>
    %462 = vector.broadcast %461 : vector<32x1xf32> to vector<32x8xf32>
    %463 = arith.select %460, %462, %401 : vector<32x8xi1>, vector<32x8xf32>
    %cst_105 = arith.constant dense<0.000000e+00> : vector<32x16xf32>
    %464 = tpu.matmul %434, %6, %cst_105 {dimension_numbers = #tpu.dot_dimension_numbers<[1], [0], [0], [1], [0, 0, 1, 1], [], []>} : vector<32x64xf32>, vector<64x16xf32>, vector<32x16xf32> -> vector<32x16xf32>
    %465 = vector.broadcast %11 : vector<1x16xf32> to vector<32x16xf32>
    %466 = arith.addf %464, %465 : vector<32x16xf32>
    %cst_106 = arith.constant dense<0xFF800000> : vector<32xf32>
    %467 = vector.multi_reduction <maximumf>, %466, %cst_106 [1] : vector<32x16xf32> to vector<32xf32>
    %468 = vector.shape_cast %467 : vector<32xf32> to vector<32x1xf32>
    %469 = vector.broadcast %468 : vector<32x1xf32> to vector<32x16xf32>
    %470 = arith.subf %466, %469 : vector<32x16xf32>
    %471 = math.exp %470 : vector<32x16xf32>
    %cst_107 = arith.constant dense<0.000000e+00> : vector<32xf32>
    %472 = vector.multi_reduction <add>, %471, %cst_107 [1] : vector<32x16xf32> to vector<32xf32>
    %473 = vector.shape_cast %472 : vector<32xf32> to vector<32x1xf32>
    %474 = math.log %473 : vector<32x1xf32>
    %475 = arith.mulf %471, %470 : vector<32x16xf32>
    %cst_108 = arith.constant dense<0.000000e+00> : vector<32xf32>
    %476 = vector.multi_reduction <add>, %475, %cst_108 [1] : vector<32x16xf32> to vector<32xf32>
    %477 = vector.shape_cast %476 : vector<32xf32> to vector<32x1xf32>
    %478 = arith.divf %477, %473 : vector<32x1xf32>
    %479 = arith.subf %474, %478 : vector<32x1xf32>
    %cst_109 = arith.constant 0.000000e+00 : f32
    %480 = vector.broadcast %cst_109 : f32 to vector<32x1xf32>
    %481 = arith.subf %480, %474 : vector<32x1xf32>
    %482 = vector.broadcast %468 : vector<32x1xf32> to vector<32x16xf32>
    %483 = arith.cmpf oge, %466, %482 : vector<32x16xf32>
    %c16_i32_110 = arith.constant 16 : i32
    %484 = vector.broadcast %c16_i32_110 : i32 to vector<32x16xi32>
    %485 = arith.select %483, %0, %484 : vector<32x16xi1>, vector<32x16xi32>
    %cst_111 = arith.constant dense<2147483647> : vector<32xi32>
    %486 = vector.multi_reduction <minsi>, %485, %cst_111 [1] : vector<32x16xi32> to vector<32xi32>
    %487 = vector.shape_cast %486 : vector<32xi32> to vector<32x1xi32>
    %488 = vector.broadcast %487 : vector<32x1xi32> to vector<32x16xi32>
    %489 = arith.cmpi eq, %0, %488 : vector<32x16xi32>
    %490 = arith.extui %489 : vector<32x16xi1> to vector<32x16xi32>
    %491 = arith.sitofp %490 : vector<32x16xi32> to vector<32x16xf32>
    %492 = tpu.concatenate %491, %434 in 1 : vector<32x16xf32>, vector<32x64xf32> -> vector<32x80xf32>
    %cst_112 = arith.constant dense<0.000000e+00> : vector<32x64xf32>
    %493 = tpu.matmul %492, %4, %cst_112 {dimension_numbers = #tpu.dot_dimension_numbers<[1], [0], [0], [1], [0, 0, 1, 1], [], []>} : vector<32x80xf32>, vector<80x64xf32>, vector<32x64xf32> -> vector<32x64xf32>
    %494 = vector.broadcast %10 : vector<1x64xf32> to vector<32x64xf32>
    %495 = arith.addf %493, %494 : vector<32x64xf32>
    %496 = math.tanh %495 : vector<32x64xf32>
    %cst_113 = arith.constant 1.000000e+00 : f32
    %497 = vector.broadcast %cst_113 : f32 to vector<32x1xf32>
    %498 = arith.subf %497, %452 : vector<32x1xf32>
    %cst_114 = arith.constant 1.000000e+00 : f32
    %499 = vector.broadcast %cst_114 : f32 to vector<32x1xf32>
    %500 = arith.mulf %498, %499 : vector<32x1xf32>
    %501 = arith.mulf %479, %500 : vector<32x1xf32>
    %502 = arith.addf %440, %501 : vector<32x1xf32>
    %503 = arith.mulf %481, %498 : vector<32x1xf32>
    %504 = arith.addf %442, %503 : vector<32x1xf32>
    %cst_115 = arith.constant 1.000000e+00 : f32
    %505 = vector.broadcast %cst_115 : f32 to vector<32x1xf32>
    %506 = arith.mulf %505, %498 : vector<32x1xf32>
    %507 = arith.addf %445, %506 : vector<32x1xf32>
    %508 = arith.addf %446, %498 : vector<32x1xf32>
    %509 = vector.broadcast %498 : vector<32x1xf32> to vector<32x64xf32>
    %510 = arith.mulf %509, %496 : vector<32x64xf32>
    %511 = arith.addf %451, %510 : vector<32x64xf32>
    %c7_i32 = arith.constant 7 : i32
    %512 = vector.broadcast %c7_i32 : i32 to vector<32x8xi32>
    %513 = arith.cmpi eq, %2, %512 : vector<32x8xi32>
    %514 = arith.sitofp %487 : vector<32x1xi32> to vector<32x1xf32>
    %515 = vector.shape_cast %514 : vector<32x1xf32> to vector<32x1xf32>
    %516 = vector.broadcast %515 : vector<32x1xf32> to vector<32x8xf32>
    %517 = arith.select %513, %516, %458 : vector<32x8xi1>, vector<32x8xf32>
    %c7_i32_116 = arith.constant 7 : i32
    %518 = vector.broadcast %c7_i32_116 : i32 to vector<32x8xi32>
    %519 = arith.cmpi eq, %2, %518 : vector<32x8xi32>
    %520 = vector.shape_cast %479 : vector<32x1xf32> to vector<32x1xf32>
    %521 = vector.broadcast %520 : vector<32x1xf32> to vector<32x8xf32>
    %522 = arith.select %519, %521, %463 : vector<32x8xi1>, vector<32x8xf32>
    %cst_117 = arith.constant dense<0.000000e+00> : vector<32x16xf32>
    %523 = tpu.matmul %511, %7, %cst_117 {dimension_numbers = #tpu.dot_dimension_numbers<[1], [0], [0], [1], [0, 0, 1, 1], [], []>} : vector<32x64xf32>, vector<64x16xf32>, vector<32x16xf32> -> vector<32x16xf32>
    %524 = vector.broadcast %12 : vector<1x16xf32> to vector<32x16xf32>
    %525 = arith.addf %523, %524 : vector<32x16xf32>
    %cst_118 = arith.constant 0.000000e+00 : f32
    %526 = vector.broadcast %cst_118 : f32 to vector<32x1xf32>
    %cst_119 = arith.constant 0.000000e+00 : f32
    %527 = vector.broadcast %cst_119 : f32 to vector<32x1xf32>
    %c0_120 = arith.constant 0 : index
    %c0_121 = arith.constant 0 : index
    %528 = vector.load %arg2[%c0_120, %c0_121] : memref<32x1xi32, #tpu.memory_space<vmem>>, vector<32x1xi32>
    %529 = vector.broadcast %528 : vector<32x1xi32> to vector<32x16xi32>
    %530 = arith.cmpi eq, %1, %529 : vector<32x16xi32>
    %531 = arith.extui %530 : vector<32x16xi1> to vector<32x16xi32>
    %532 = arith.sitofp %531 : vector<32x16xi32> to vector<32x16xf32>
    %cst_122 = arith.constant dense<0xFF800000> : vector<32xf32>
    %533 = vector.multi_reduction <maximumf>, %525, %cst_122 [1] : vector<32x16xf32> to vector<32xf32>
    %534 = vector.shape_cast %533 : vector<32xf32> to vector<32x1xf32>
    %535 = vector.broadcast %534 : vector<32x1xf32> to vector<32x16xf32>
    %536 = arith.subf %525, %535 : vector<32x16xf32>
    %537 = math.exp %536 : vector<32x16xf32>
    %cst_123 = arith.constant dense<0.000000e+00> : vector<32xf32>
    %538 = vector.multi_reduction <add>, %537, %cst_123 [1] : vector<32x16xf32> to vector<32xf32>
    %539 = vector.shape_cast %538 : vector<32xf32> to vector<32x1xf32>
    %540 = math.log %539 : vector<32x1xf32>
    %541 = vector.broadcast %540 : vector<32x1xf32> to vector<32x16xf32>
    %542 = arith.subf %536, %541 : vector<32x16xf32>
    %543 = arith.mulf %532, %542 : vector<32x16xf32>
    %cst_124 = arith.constant dense<0.000000e+00> : vector<32xf32>
    %544 = vector.multi_reduction <add>, %543, %cst_124 [1] : vector<32x16xf32> to vector<32xf32>
    %545 = vector.shape_cast %544 : vector<32xf32> to vector<32x1xf32>
    %cst_125 = arith.constant 0.000000e+00 : f32
    %546 = vector.broadcast %cst_125 : f32 to vector<32x1xf32>
    %547 = arith.subf %546, %545 : vector<32x1xf32>
    %548 = vector.broadcast %534 : vector<32x1xf32> to vector<32x16xf32>
    %549 = arith.cmpf oge, %525, %548 : vector<32x16xf32>
    %c16_i32_126 = arith.constant 16 : i32
    %550 = vector.broadcast %c16_i32_126 : i32 to vector<32x16xi32>
    %551 = arith.select %549, %1, %550 : vector<32x16xi1>, vector<32x16xi32>
    %cst_127 = arith.constant dense<2147483647> : vector<32xi32>
    %552 = vector.multi_reduction <minsi>, %551, %cst_127 [1] : vector<32x16xi32> to vector<32xi32>
    %553 = vector.shape_cast %552 : vector<32xi32> to vector<32x1xi32>
    %554 = arith.cmpi eq, %553, %528 : vector<32x1xi32>
    %555 = arith.extui %554 : vector<32x1xi1> to vector<32x1xi32>
    %556 = arith.sitofp %555 : vector<32x1xi32> to vector<32x1xf32>
    %557 = arith.divf %502, %507 : vector<32x1xf32>
    %558 = arith.mulf %557, %547 : vector<32x1xf32>
    %559 = arith.addf %504, %526 : vector<32x1xf32>
    %cst_128 = arith.constant 0.000000e+00 : f32
    %560 = vector.broadcast %cst_128 : f32 to vector<32x1xf32>
    %561 = arith.mulf %547, %559 : vector<32x1xf32>
    %562 = arith.addf %547, %561 : vector<32x1xf32>
    %563 = arith.mulf %560, %504 : vector<32x1xf32>
    %564 = arith.addf %562, %563 : vector<32x1xf32>
    %cst_129 = arith.constant 1.000000e-01 : f32
    %565 = vector.broadcast %cst_129 : f32 to vector<32x1xf32>
    %566 = arith.mulf %558, %565 : vector<32x1xf32>
    %567 = arith.subf %564, %566 : vector<32x1xf32>
    %cst_130 = arith.constant 0.00999999977 : f32
    %568 = vector.broadcast %cst_130 : f32 to vector<32x1xf32>
    %569 = arith.mulf %527, %568 : vector<32x1xf32>
    %570 = arith.subf %567, %569 : vector<32x1xf32>
    %571 = vector.shape_cast %547 : vector<32x1xf32> to vector<1x32x1xf32>
    %cst_131 = arith.constant dense<0.000000e+00> : vector<1xf32>
    %572 = vector.multi_reduction <add>, %571, %cst_131 [1, 2] : vector<1x32x1xf32> to vector<1xf32>
    %573 = vector.shape_cast %572 : vector<1xf32> to vector<1x1x1xf32>
    %574 = vector.extract %573[0, 0, 0] : f32 from vector<1x1x1xf32>
    %575 = vector.broadcast %574 : f32 to vector<1x1xf32>
    %576 = vector.shape_cast %575 : vector<1x1xf32> to vector<1x1xf32>
    %577 = vector.broadcast %576 : vector<1x1xf32> to vector<32x1xf32>
    %578 = vector.shape_cast %556 : vector<32x1xf32> to vector<1x32x1xf32>
    %cst_132 = arith.constant dense<0.000000e+00> : vector<1xf32>
    %579 = vector.multi_reduction <add>, %578, %cst_132 [1, 2] : vector<1x32x1xf32> to vector<1xf32>
    %580 = vector.shape_cast %579 : vector<1xf32> to vector<1x1x1xf32>
    %581 = vector.extract %580[0, 0, 0] : f32 from vector<1x1x1xf32>
    %582 = vector.broadcast %581 : f32 to vector<1x1xf32>
    %583 = vector.shape_cast %582 : vector<1x1xf32> to vector<1x1xf32>
    %584 = vector.broadcast %583 : vector<1x1xf32> to vector<32x1xf32>
    %585 = vector.shape_cast %522 : vector<32x8xf32> to vector<1x32x8xf32>
    %cst_133 = arith.constant dense<0.000000e+00> : vector<1xf32>
    %586 = vector.multi_reduction <add>, %585, %cst_133 [1, 2] : vector<1x32x8xf32> to vector<1xf32>
    %587 = vector.shape_cast %586 : vector<1xf32> to vector<1x1x1xf32>
    %588 = vector.extract %587[0, 0, 0] : f32 from vector<1x1x1xf32>
    %589 = vector.broadcast %588 : f32 to vector<1x1xf32>
    %590 = vector.shape_cast %589 : vector<1x1xf32> to vector<1x1xf32>
    %591 = vector.broadcast %590 : vector<1x1xf32> to vector<32x1xf32>
    %592 = vector.shape_cast %508 : vector<32x1xf32> to vector<1x32x1xf32>
    %cst_134 = arith.constant dense<0.000000e+00> : vector<1xf32>
    %593 = vector.multi_reduction <add>, %592, %cst_134 [1, 2] : vector<1x32x1xf32> to vector<1xf32>
    %594 = vector.shape_cast %593 : vector<1xf32> to vector<1x1x1xf32>
    %595 = vector.extract %594[0, 0, 0] : f32 from vector<1x1x1xf32>
    %596 = vector.broadcast %595 : f32 to vector<1x1xf32>
    %597 = vector.shape_cast %596 : vector<1x1xf32> to vector<1x1xf32>
    %598 = vector.broadcast %597 : vector<1x1xf32> to vector<32x1xf32>
    %599 = vector.shape_cast %527 : vector<32x1xf32> to vector<1x32x1xf32>
    %cst_135 = arith.constant dense<0.000000e+00> : vector<1xf32>
    %600 = vector.multi_reduction <add>, %599, %cst_135 [1, 2] : vector<1x32x1xf32> to vector<1xf32>
    %601 = vector.shape_cast %600 : vector<1xf32> to vector<1x1x1xf32>
    %602 = vector.extract %601[0, 0, 0] : f32 from vector<1x1x1xf32>
    %603 = vector.broadcast %602 : f32 to vector<1x1xf32>
    %604 = vector.shape_cast %603 : vector<1x1xf32> to vector<1x1xf32>
    %605 = vector.broadcast %604 : vector<1x1xf32> to vector<32x1xf32>
    %606 = vector.shape_cast %570 : vector<32x1xf32> to vector<1x32x1xf32>
    %cst_136 = arith.constant dense<0.000000e+00> : vector<1xf32>
    %607 = vector.multi_reduction <add>, %606, %cst_136 [1, 2] : vector<1x32x1xf32> to vector<1xf32>
    %608 = vector.shape_cast %607 : vector<1xf32> to vector<1x1x1xf32>
    %609 = vector.extract %608[0, 0, 0] : f32 from vector<1x1x1xf32>
    %610 = vector.broadcast %609 : f32 to vector<1x1xf32>
    %611 = vector.shape_cast %610 : vector<1x1xf32> to vector<1x1xf32>
    %612 = vector.broadcast %611 : vector<1x1xf32> to vector<32x1xf32>
    %cst_137 = arith.constant 0.000000e+00 : f32
    %613 = vector.broadcast %cst_137 : f32 to vector<32x1xf32>
    %cst_138 = arith.constant 0.000000e+00 : f32
    %614 = vector.broadcast %cst_138 : f32 to vector<32x98xf32>
    %615 = tpu.concatenate %517, %522, %547, %558, %504, %526, %527, %508, %556, %613, %577, %584, %591, %598, %605, %612 in 1 : vector<32x8xf32>, vector<32x8xf32>, vector<32x1xf32>, vector<32x1xf32>, vector<32x1xf32>, vector<32x1xf32>, vector<32x1xf32>, vector<32x1xf32>, vector<32x1xf32>, vector<32x1xf32>, vector<32x1xf32>, vector<32x1xf32>, vector<32x1xf32>, vector<32x1xf32>, vector<32x1xf32>, vector<32x1xf32> -> vector<32x30xf32>
    %616 = tpu.concatenate %615, %614 in 1 : vector<32x30xf32>, vector<32x98xf32> -> vector<32x128xf32>
    %c0_139 = arith.constant 0 : index
    %c0_140 = arith.constant 0 : index
    %617 = vector.load %arg5[%c0_139, %c0_140] : memref<32x128xf32, #tpu.memory_space<vmem>>, vector<32x128xf32>
    tpu.vector_store %arg5[%c0_139, %c0_140], %616 {strides = array<i32>} : memref<32x128xf32, #tpu.memory_space<vmem>>, vector<32x128xf32>,
    return
  }
  func.func @transform_0(%arg0: i32) -> (i32, i32) {
    %c0_i32 = arith.constant 0 : i32
    %c0_i32_0 = arith.constant 0 : i32
    return %arg0, %c0_i32 : i32, i32
  }
  func.func @transform_1(%arg0: i32) -> (i32, i32) {
    %c0_i32 = arith.constant 0 : i32
    %c0_i32_0 = arith.constant 0 : i32
    return %arg0, %c0_i32 : i32, i32
  }
  func.func @transform_2(%arg0: i32) -> (i32, i32) {
    %c0_i32 = arith.constant 0 : i32
    %c0_i32_0 = arith.constant 0 : i32
    %c0_i32_1 = arith.constant 0 : i32
    return %c0_i32, %c0_i32_0 : i32, i32
  }
  func.func @transform_3(%arg0: i32) -> (i32, i32) {
    %c0_i32 = arith.constant 0 : i32
    %c0_i32_0 = arith.constant 0 : i32
    %c0_i32_1 = arith.constant 0 : i32
    return %c0_i32, %c0_i32_0 : i32, i32
  }
  func.func @transform_4(%arg0: i32) -> (i32, i32) {
    %c0_i32 = arith.constant 0 : i32
    %c0_i32_0 = arith.constant 0 : i32
    return %arg0, %c0_i32 : i32, i32
  }
}

</mosaic_0001>

<llo_original>
// kernel: tpu_custom_call.1
$region0: #{tpu_custom_call.1}
  #allocation0 [shape = 'u32[]', space=smem, size = 0x4, offset = 0x4, fixed_abs, tag = 'smem constant byte address 0x4 - core index']
  #allocation1 [shape = 'u32[144,128]{1,0:T(1,128)}', space=vmem, size = 0x12000, scoped, tag = 'internal scratch']
  %s0 = inlined_call_operand.vmem [shape: f32[64,16], index: 0, kind: input, shape index: {}]
  %s1 = inlined_call_operand.vmem [shape: s32[64,1], index: 1, kind: input, shape index: {}]
  %s2 = inlined_call_operand.vmem [shape: f32[224,64], index: 2, kind: input, shape index: {}]
  %s3 = inlined_call_operand.vmem [shape: f32[8,64], index: 3, kind: input, shape index: {}]
  %s4 = inlined_call_operand.hbm [shape: f32[64,128], index: 4, kind: output, shape index: {}]
  %s5 = sld [smem:[#allocation0]]
  $region49: #{tpu_custom_call.1} parent=0
    _
  %s7 = ssub.s32 1, %s5
  %s8 = scalar_select 0, %s7, %s5
  $region1: #{tpu_custom_call.1} parent=0
    #allocation2 [shape = 'u8[32768]{0}', space=vmem, size = 0x8000, scoped, tag = 'output window, operand 0']
    #allocation3 [shape = 's32[2]{0}', space=sflag, size = 0x8, scoped, tag = 'scoped memory for tpu_custom_call.1']
    %9 = vsyncpa [#allocation3], 0
    %s10 = scalar_lea.sflag [#allocation3], 1
    %11 = vsyncpa %s10, 0
    loop: start=0, step=1, limit=4
    $region2: #{tpu_custom_call.1} parent=1 // loop_pre_header
      _
    $region3: #{tpu_custom_call.1} parent=1 // loop_header
      %s13 = sphi 0, %s17
      %p14 = scmp.ge.s32.totalorder %s13, 4
      %s23 = sphi 0, %s25
      %s26 = sphi 0, %s23
      %s27 = sphi 0, %s26
      %s43 = sphi 0, %s27
      %s49 = sphi 0, %s51
      %s52 = sphi 0, %s49
      %s53 = sphi 0, %s52
      %s69 = sphi 0, %s53
      %s73 = sphi 0, %s73
      %s75 = sphi 0, %s73
      %s76 = sphi 0, %s75
      %s90 = sphi 0, %s76
      %s94 = sphi 0, %s94
      %s96 = sphi 0, %s94
      %s97 = sphi 0, %s96
      %s111 = sphi 0, %s97
      %s117 = sphi 0, %s119
      %s120 = sphi 0, %s117
      %s121 = sphi 0, %s120
      %s137 = sphi 0, %s121
    $region4: #{tpu_custom_call.1} parent=1 // loop_header_branch
      %16 = sbr.rel (%p14) target = $region8
    $region5: #{tpu_custom_call.1} parent=1 // loop_body
      %s18 = ssub.s32 %s13, 1
      %s19 = ssub.s32 %s13, 2
      %s20 = sadd.s32 %s13, 1
      %s21 = ssub.s32 %s13, %s20
      %p22 = scmp.eq.s32.totalorder %s21, 0
      %s24 = sadd.s32 %s23, 1
      %s25 = scalar_select %p22, %s23, %s24
      %p28 = pneg %p22
      %p29 = scmp.eq.s32.totalorder %s13, 1
      %p30 = por %p28, %p29
      %p31 = scmp.ne.s32.totalorder %s23, %s26
      %p32 = scmp.eq.s32.totalorder %s13, 0
      %p33 = por %p31, %p32
      %p34 = scmp.ne.s32.totalorder %s23, %s26
      %p35 = scmp.eq.s32.totalorder %s18, 1
      %p36 = por %p34, %p35
      %p37 = scmp.ne.s32.totalorder %s26, %s27
      %p38 = scmp.eq.s32.totalorder %s18, 0
      %p39 = por %p37, %p38
      %p40 = scmp.ne.s32.totalorder %s26, %s27
      %p41 = scmp.eq.s32.totalorder %s19, 1
      %p42 = por %p40, %p41
      %p44 = scmp.ne.s32.totalorder %s27, %s43
      %p45 = scmp.eq.s32.totalorder %s19, 0
      %p46 = por %p44, %p45
      %s47 = ssub.s32 %s13, %s20
      %p48 = scmp.eq.s32.totalorder %s47, 0
      %s50 = sadd.s32 %s49, 1
      %s51 = scalar_select %p48, %s49, %s50
      %p54 = pneg %p48
      %p55 = scmp.eq.s32.totalorder %s13, 1
      %p56 = por %p54, %p55
      %p57 = scmp.ne.s32.totalorder %s49, %s52
      %p58 = scmp.eq.s32.totalorder %s13, 0
      %p59 = por %p57, %p58
      %p60 = scmp.ne.s32.totalorder %s49, %s52
      %p61 = scmp.eq.s32.totalorder %s18, 1
      %p62 = por %p60, %p61
      %p63 = scmp.ne.s32.totalorder %s52, %s53
      %p64 = scmp.eq.s32.totalorder %s18, 0
      %p65 = por %p63, %p64
      %p66 = scmp.ne.s32.totalorder %s52, %s53
      %p67 = scmp.eq.s32.totalorder %s19, 1
      %p68 = por %p66, %p67
      %p70 = scmp.ne.s32.totalorder %s53, %s69
      %p71 = scmp.eq.s32.totalorder %s19, 0
      %p72 = por %p70, %p71
      %s74 = sadd.s32 %s73, 1
      %p77 = scmp.eq.s32.totalorder %s13, 1
      %p78 = scmp.ne.s32.totalorder %s73, %s75
      %p79 = scmp.eq.s32.totalorder %s13, 0
      %p80 = por %p78, %p79
      %p81 = scmp.ne.s32.totalorder %s73, %s75
      %p82 = scmp.eq.s32.totalorder %s18, 1
      %p83 = por %p81, %p82
      %p84 = scmp.ne.s32.totalorder %s75, %s76
      %p85 = scmp.eq.s32.totalorder %s18, 0
      %p86 = por %p84, %p85
      %p87 = scmp.ne.s32.totalorder %s75, %s76
      %p88 = scmp.eq.s32.totalorder %s19, 1
      %p89 = por %p87, %p88
      %p91 = scmp.ne.s32.totalorder %s76, %s90
      %p92 = scmp.eq.s32.totalorder %s19, 0
      %p93 = por %p91, %p92
      %s95 = sadd.s32 %s94, 1
      %p98 = scmp.eq.s32.totalorder %s13, 1
      %p99 = scmp.ne.s32.totalorder %s94, %s96
      %p100 = scmp.eq.s32.totalorder %s13, 0
      %p101 = por %p99, %p100
      %p102 = scmp.ne.s32.totalorder %s94, %s96
      %p103 = scmp.eq.s32.totalorder %s18, 1
      %p104 = por %p102, %p103
      %p105 = scmp.ne.s32.totalorder %s96, %s97
      %p106 = scmp.eq.s32.totalorder %s18, 0
      %p107 = por %p105, %p106
      %p108 = scmp.ne.s32.totalorder %s96, %s97
      %p109 = scmp.eq.s32.totalorder %s19, 1
      %p110 = por %p108, %p109
      %p112 = scmp.ne.s32.totalorder %s97, %s111
      %p113 = scmp.eq.s32.totalorder %s19, 0
      %p114 = por %p112, %p113
      %s115 = ssub.s32 %s13, %s20
      %p116 = scmp.eq.s32.totalorder %s115, 0
      %s118 = sadd.s32 %s117, 1
      %s119 = scalar_select %p116, %s117, %s118
      %p122 = pneg %p116
      %p123 = scmp.eq.s32.totalorder %s13, 1
      %p124 = por %p122, %p123
      %p125 = scmp.ne.s32.totalorder %s117, %s120
      %p126 = scmp.eq.s32.totalorder %s13, 0
      %p127 = por %p125, %p126
      %p128 = scmp.ne.s32.totalorder %s117, %s120
      %p129 = scmp.eq.s32.totalorder %s18, 1
      %p130 = por %p128, %p129
      %p131 = scmp.ne.s32.totalorder %s120, %s121
      %p132 = scmp.eq.s32.totalorder %s18, 0
      %p133 = por %p131, %p132
      %p134 = scmp.ne.s32.totalorder %s120, %s121
      %p135 = scmp.eq.s32.totalorder %s19, 1
      %p136 = por %p134, %p135
      %p138 = scmp.ne.s32.totalorder %s121, %s137
      %p139 = scmp.eq.s32.totalorder %s19, 0
      %p140 = por %p138, %p139
      %p141 = scmp.le.s32.totalorder 1, %s13
      %p142 = scmp.lt.s32.totalorder %s13, 3
      %p143 = pnand %p141, %p142
      %p144 = pneg %p143
      // Predicated region
      $region9: #{tpu_custom_call.1} parent=5 // pred_check
        _
      $region10: #{tpu_custom_call.1} parent=5 // pred_check_branch
        %146 = sbr.rel (%p143) target = $region12
      $region11: #{tpu_custom_call.1} parent=5 // pred_region
        %s147 = ssub.s32 %s13, 1
        // Predicated region
        $region13: #{tpu_custom_call.1} parent=11 // pred_check
          %p148 = pneg %p86
        $region14: #{tpu_custom_call.1} parent=11 // pred_check_branch
          %150 = sbr.rel (%p148) target = $region16
        $region15: #{tpu_custom_call.1} parent=11 // pred_region
          _
        $region16: #{tpu_custom_call.1} parent=11 // pred_fallthru
          _
        // Predicated region
        $region17: #{tpu_custom_call.1} parent=11 // pred_check
          %p151 = pneg %p107
        $region18: #{tpu_custom_call.1} parent=11 // pred_check_branch
          %153 = sbr.rel (%p151) target = $region20
        $region19: #{tpu_custom_call.1} parent=11 // pred_region
          _
        $region20: #{tpu_custom_call.1} parent=11 // pred_fallthru
          _
      $region12: #{tpu_custom_call.1} parent=5 // pred_fallthru
        _
      %p154 = scmp.lt.s32.totalorder %s13, 2
      // Predicated region
      $region21: #{tpu_custom_call.1} parent=5 // pred_check
        %p155 = pneg %p154
      $region22: #{tpu_custom_call.1} parent=5 // pred_check_branch
        %157 = sbr.rel (%p155) target = $region24
      $region23: #{tpu_custom_call.1} parent=5 // pred_region
        // Predicated region
        $region25: #{tpu_custom_call.1} parent=23 // pred_check
          %p158 = pneg %p33
        $region26: #{tpu_custom_call.1} parent=23 // pred_check_branch
          %160 = sbr.rel (%p158) target = $region28
        $region27: #{tpu_custom_call.1} parent=23 // pred_region
          %s161 = smul.u32 4, %s13
          %p162 = scmp.lt.s32.totalorder %s161, 7
          %s163 = scalar_select %p162, %s161, 7
          %s164 = smul.addr %s163, 8
          %s165 = scalar_lea.vmem %s0, %s164
          %s166 = smul.u32 4, %s13
        $region28: #{tpu_custom_call.1} parent=23 // pred_fallthru
          _
        // Predicated region
        $region29: #{tpu_custom_call.1} parent=23 // pred_check
          %p167 = pneg %p59
        $region30: #{tpu_custom_call.1} parent=23 // pred_check_branch
          %169 = sbr.rel (%p167) target = $region32
        $region31: #{tpu_custom_call.1} parent=23 // pred_region
          %s170 = smul.u32 4, %s13
          %p171 = scmp.lt.s32.totalorder %s170, 7
          %s172 = scalar_select %p171, %s170, 7
          %s173 = smul.addr %s172, 8
          %s174 = scalar_lea.vmem %s1, %s173
          %s175 = smul.u32 4, %s13
        $region32: #{tpu_custom_call.1} parent=23 // pred_fallthru
          _
      $region24: #{tpu_custom_call.1} parent=5 // pred_fallthru
        _
      %p176 = scmp.le.s32.totalorder 1, %s13
      %p177 = scmp.lt.s32.totalorder %s13, 3
      %p178 = pnand %p176, %p177
      %p179 = pneg %p178
      // Predicated region
      $region33: #{tpu_custom_call.1} parent=5 // pred_check
        _
      $region34: #{tpu_custom_call.1} parent=5 // pred_check_branch
        %181 = sbr.rel (%p178) target = $region36
      $region35: #{tpu_custom_call.1} parent=5 // pred_region
        %s182 = ssub.s32 %s13, 1
        %s183 = smul.u32 4, %s18
        %p184 = scmp.lt.s32.totalorder %s183, 7
        %s185 = scalar_select %p184, %s183, 7
        %s186 = smul.addr %s185, 8
        %s187 = scalar_lea.vmem %s0, %s186
        %p188 = pneg %p39
        %p189 = pneg %p36
        %s190 = smul.u32 4, %s18
        %p191 = scmp.lt.s32.totalorder %s190, 7
        %s192 = scalar_select %p191, %s190, 7
        %s193 = smul.addr %s192, 8
        %s194 = scalar_lea.vmem %s1, %s193
        %p195 = pneg %p65
        %p196 = pneg %p62
        %p197 = pneg %p86
        %p198 = pneg %p83
        %p199 = pneg %p107
        %p200 = pneg %p104
        %p201 = pneg %p133
        %p202 = pneg %p130
        %s203 = sand.u32 %s120, 1
        %s204 = scalar_lea.sflag [#allocation3], %s203
        %s205 = sand.u32 %s120, 1
        %s206 = smul.addr %s205, 32
        %s207 = scalar_lea.vmem [#allocation2], %s206
        %s208 = smul.u32 4, %s18
        %p209 = scmp.lt.s32.totalorder %s208, 7
        %s210 = scalar_select %p209, %s208, 7
        %s211 = smul.addr %s210, 8
        %s212 = scalar_lea.vmem %s0, %s211
        %s213 = smul.u32 4, %s18
        %s214 = smul.u32 4, %s18
        %p215 = scmp.lt.s32.totalorder %s214, 7
        %s216 = scalar_select %p215, %s214, 7
        %s217 = smul.addr %s216, 8
        %s218 = scalar_lea.vmem %s1, %s217
        %s219 = smul.u32 4, %s18
        %s220 = smul.u32 4, %s18
        %v221 = vlaneseq
        %v222 = vand.u32 %v221, 127
        %v223 = vld [vmem:[%s2] sm:$0xff]
        %v224 = vld [vmem:[%s2 + $0x8] sm:$0xff]
        %v225 = vld [vmem:[%s2 + $0x10] sm:$0xff]
        %v226 = vld [vmem:[%s2 + $0x18] sm:$0xff]
        %v227 = vld [vmem:[%s2 + $0x20] sm:$0xff]
        %v228 = vld [vmem:[%s2 + $0x28] sm:$0xff]
        %v229 = vld [vmem:[%s2 + $0x30] sm:$0xff]
        %v230 = vld [vmem:[%s2 + $0x38] sm:$0xff]
        %v231 = vld [vmem:[%s2 + $0x40] sm:$0xff]
        %v232 = vld [vmem:[%s2 + $0x48] sm:$0xff]
        %v233 = vld [vmem:[%s2 + $0x50] sm:$0xff]
        %v234 = vld [vmem:[%s2 + $0x58] sm:$0xff]
        %v235 = vld [vmem:[%s2 + $0x60] sm:$0xff]
        %v236 = vld [vmem:[%s2 + $0x68] sm:$0xff]
        %v237 = vld [vmem:[%s2 + $0x70] sm:$0xff]
        %v238 = vld [vmem:[%s2 + $0x78] sm:$0xff]
        %v239 = vld [vmem:[%s2 + $0x80] sm:$0xff]
        %v240 = vld [vmem:[%s2 + $0x88] sm:$0xff]
        %v241 = vld [vmem:[%s2 + $0x90] sm:$0xff]
        %v242 = vld [vmem:[%s2 + $0x98] sm:$0xff]
        %v243 = vld [vmem:[%s2 + $0xa0] sm:$0xff]
        %v244 = vld [vmem:[%s2 + $0xa8] sm:$0xff]
        %v245 = vld [vmem:[%s2 + $0xb0] sm:$0xff]
        %v246 = vld [vmem:[%s2 + $0xb8] sm:$0xff]
        %v247 = vld [vmem:[%s2 + $0xc0] sm:$0xff]
        %v248 = vld [vmem:[%s2 + $0xc8] sm:$0xff]
        %v249 = vld [vmem:[%s2 + $0xd0] sm:$0xff]
        %v250 = vld [vmem:[%s2 + $0xd8] sm:$0xff]
        %v251 = vld [vmem:[%s3] sm:$0x1]
        %v252 = vld [vmem:[%s3 + $0x1] sm:$0x1]
        %v253 = vld [vmem:[%s3 + $0x2] sm:$0x1]
        %v254 = vld [vmem:[%s3 + $0x3] sm:$0x1]
        %v255 = vld [vmem:[%s3 + $0x4] sm:$0x1]
        %v256 = vld [vmem:[%s212] sm:$0xff]
        %v257 = vld [vmem:[%s212 + $0x8] sm:$0xff]
        %v258 = vld [vmem:[%s212 + $0x10] sm:$0xff]
        %v259 = vld [vmem:[%s212 + $0x18] sm:$0xff]
        %v260 = vlaneseq
        %v261 = vshrl.u32 %v260, 7
        %v262 = vsub.s32 0, %v261
        %v263 = vrot.slane %v251, %v262
        %vm264 = vcmask 130048
        %v266 = vsel %vm264, %v256, 0
        %v269 = vsel %vm264, %v257, 0
        %v272 = vsel %vm264, %v258, 0
        %v275 = vsel %vm264, %v259, 0
        %277 = vmatprep.subr.mxu0 0.0
        %278 = vmatpush1.msra.mxu0 %v223
        %279 = vmatprep.subr.mxu0 0.0
        %280 = vmatpush1.msra.mxu0 %v224
        %281 = vmatprep.subr.mxu0 0.0
        %282 = vmatpush1.msra.mxu0 0.0
        %283 = vmatprep.subr.mxu0 0.0
        %284 = vmatpush1.msra.mxu0 0.0
        %285 = vmatprep.subr.mxu0 0.0
        %286 = vmatpush1.msra.mxu0 0.0
        %287 = vmatprep.subr.mxu0 0.0
        %288 = vmatpush1.msra.mxu0 0.0
        %289 = vmatprep.subr.mxu0 0.0
        %290 = vmatpush1.msra.mxu0 0.0
        %291 = vmatprep.subr.mxu0 0.0
        %292 = vmatpush1.msra.mxu0 0.0
        %293 = vmatprep.subr.mxu0 0.0
        %294 = vmatpush1.msra.mxu0 0.0
        %295 = vmatprep.subr.mxu0 0.0
        %296 = vmatpush1.msra.mxu0 0.0
        %297 = vmatprep.subr.mxu0 0.0
        %298 = vmatpush1.msra.mxu0 0.0
        %299 = vmatprep.subr.mxu0 0.0
        %300 = vmatpush1.msra.mxu0 0.0
        %301 = vmatprep.subr.mxu0 0.0
        %302 = vmatpush1.msra.mxu0 0.0
        %303 = vmatprep.subr.mxu0 0.0
        %304 = vmatpush1.msra.mxu0 0.0
        %305 = vmatprep.subr.mxu0 0.0
        %306 = vmatpush1.msra.mxu0 0.0
        %307 = vmatprep.subr.mxu0 0.0
        %308 = vmatpush1.msra.mxu0 0.0
        %309 = vmatprep.subr.mxu0 0.0
        %310 = vmatpush1.msra.mxu0 0.0
        %311 = vmatprep.subr.mxu0 0.0
        %312 = vmatpush1.msra.mxu0 0.0
        %313 = vmatprep.subr.mxu0 0.0
        %314 = vmatpush1.msra.mxu0 0.0
        %315 = vmatprep.subr.mxu0 0.0
        %316 = vmatpush1.msra.mxu0 0.0
        %317 = vmatprep.subr.mxu0 0.0
        %318 = vmatpush1.msra.mxu0 0.0
        %319 = vmatprep.subr.mxu0 0.0
        %320 = vmatpush1.msra.mxu0 0.0
        %321 = vmatprep.subr.mxu0 0.0
        %322 = vmatpush1.msra.mxu0 0.0
        %323 = vmatprep.subr.mxu0 0.0
        %324 = vmatpush1.msra.mxu0 0.0
        %325 = vmatprep.subr.mxu0 0.0
        %326 = vmatpush1.msra.mxu0 0.0
        %327 = vmatprep.subr.mxu0 0.0
        %328 = vmatpush1.msra.mxu0 0.0
        %329 = vmatprep.subr.mxu0 0.0
        %330 = vmatpush1.msra.mxu0 0.0
        %331 = vmatprep.subr.mxu0 0.0
        %332 = vmatpush1.msra.mxu0 0.0
        %333 = vmatprep.subr.mxu0 0.0
        %334 = vmatpush1.msra.mxu0 0.0
        %335 = vmatprep.subr.mxu0 0.0
        %336 = vmatpush1.msra.mxu0 0.0
        %337 = vmatprep.subr.mxu0 0.0
        %338 = vmatpush1.msra.mxu0 0.0
        %339 = vmatprep.subr.mxu0 0.0
        %340 = vmatpush1.msra.mxu0 0.0
        %341 = vmatprep.mubr.f32.mxu0 0.0
        %342 = vmatmul.mubr.f32.gmra.mrb[0].mxu0 %v266
        %v343 = vpop.f32.mrb[0].mxu0
        %v344 = vadd.f32 %v263, %v343
        %v345 = vpop.f32.mrb[0].mxu0
        %346 = vmatprep.mubr.f32.mxu0 0.0
        %347 = vmatmul.mubr.f32.gmra.mrb[0].mxu0 %v269
        %v348 = vpop.f32.mrb[0].mxu0
        %v349 = vadd.f32 %v263, %v348
        %v350 = vpop.f32.mrb[0].mxu0
        %351 = vmatprep.mubr.f32.mxu0 0.0
        %352 = vmatmul.mubr.f32.gmra.mrb[0].mxu0 %v272
        %v353 = vpop.f32.mrb[0].mxu0
        %v354 = vadd.f32 %v263, %v353
        %v355 = vpop.f32.mrb[0].mxu0
        %356 = vmatprep.mubr.f32.mxu0 0.0
        %357 = vmatmul.mubr.f32.gmra.mrb[0].mxu0 %v275
        %v358 = vpop.f32.mrb[0].mxu0
        %v359 = vadd.f32 %v263, %v358
        %v360 = vpop.f32.mrb[0].mxu0
        %361 = vdwg.mxu0
        %v362 = vtanh.pop %v344
        %v363 = vtanh.pop %v349
        %v364 = vtanh.pop %v354
        %v365 = vtanh.pop %v359
        %v366 = vlaneseq
        %v367 = vshrl.u32 %v366, 7
        %v368 = vsub.s32 0, %v367
        %v369 = vrot.slane %v252, %v368
        %vm370 = vcmask 261120
        %v372 = vsel %vm370, %v362, 0
        %v375 = vsel %vm370, %v363, 0
        %v378 = vsel %vm370, %v364, 0
        %v381 = vsel %vm370, %v365, 0
        %383 = vmatprep.subr.mxu0 0.0
        %384 = vmatpush1.msra.mxu0 %v227
        %385 = vmatprep.subr.mxu0 0.0
        %386 = vmatpush1.msra.mxu0 %v228
        %387 = vmatprep.subr.mxu0 0.0
        %388 = vmatpush1.msra.mxu0 %v229
        %389 = vmatprep.subr.mxu0 0.0
        %390 = vmatpush1.msra.mxu0 %v230
        %391 = vmatprep.subr.mxu0 0.0
        %392 = vmatpush1.msra.mxu0 0.0
        %393 = vmatprep.subr.mxu0 0.0
        %394 = vmatpush1.msra.mxu0 0.0
        %395 = vmatprep.subr.mxu0 0.0
        %396 = vmatpush1.msra.mxu0 0.0
        %397 = vmatprep.subr.mxu0 0.0
        %398 = vmatpush1.msra.mxu0 0.0
        %399 = vmatprep.subr.mxu0 0.0
        %400 = vmatpush1.msra.mxu0 0.0
        %401 = vmatprep.subr.mxu0 0.0
        %402 = vmatpush1.msra.mxu0 0.0
        %403 = vmatprep.subr.mxu0 0.0
        %404 = vmatpush1.msra.mxu0 0.0
        %405 = vmatprep.subr.mxu0 0.0
        %406 = vmatpush1.msra.mxu0 0.0
        %407 = vmatprep.subr.mxu0 0.0
        %408 = vmatpush1.msra.mxu0 0.0
        %409 = vmatprep.subr.mxu0 0.0
        %410 = vmatpush1.msra.mxu0 0.0
        %411 = vmatprep.subr.mxu0 0.0
        %412 = vmatpush1.msra.mxu0 0.0
        %413 = vmatprep.subr.mxu0 0.0
        %414 = vmatpush1.msra.mxu0 0.0
        %415 = vmatprep.subr.mxu0 0.0
        %416 = vmatpush1.msra.mxu0 0.0
        %417 = vmatprep.subr.mxu0 0.0
        %418 = vmatpush1.msra.mxu0 0.0
        %419 = vmatprep.subr.mxu0 0.0
        %420 = vmatpush1.msra.mxu0 0.0
        %421 = vmatprep.subr.mxu0 0.0
        %422 = vmatpush1.msra.mxu0 0.0
        %423 = vmatprep.subr.mxu0 0.0
        %424 = vmatpush1.msra.mxu0 0.0
        %425 = vmatprep.subr.mxu0 0.0
        %426 = vmatpush1.msra.mxu0 0.0
        %427 = vmatprep.subr.mxu0 0.0
        %428 = vmatpush1.msra.mxu0 0.0
        %429 = vmatprep.subr.mxu0 0.0
        %430 = vmatpush1.msra.mxu0 0.0
        %431 = vmatprep.subr.mxu0 0.0
        %432 = vmatpush1.msra.mxu0 0.0
        %433 = vmatprep.subr.mxu0 0.0
        %434 = vmatpush1.msra.mxu0 0.0
        %435 = vmatprep.subr.mxu0 0.0
        %436 = vmatpush1.msra.mxu0 0.0
        %437 = vmatprep.subr.mxu0 0.0
        %438 = vmatpush1.msra.mxu0 0.0
        %439 = vmatprep.subr.mxu0 0.0
        %440 = vmatpush1.msra.mxu0 0.0
        %441 = vmatprep.subr.mxu0 0.0
        %442 = vmatpush1.msra.mxu0 0.0
        %443 = vmatprep.subr.mxu0 0.0
        %444 = vmatpush1.msra.mxu0 0.0
        %445 = vmatprep.subr.mxu0 0.0
        %446 = vmatpush1.msra.mxu0 0.0
        %447 = vmatprep.mubr.f32.mxu0 0.0
        %448 = vmatmul.mubr.f32.gmra.mrb[0].mxu0 %v372
        %v449 = vpop.f32.mrb[0].mxu0
        %v450 = vadd.f32 %v369, %v449
        %v451 = vpop.f32.mrb[0].mxu0
        %452 = vmatprep.mubr.f32.mxu0 0.0
        %453 = vmatmul.mubr.f32.gmra.mrb[0].mxu0 %v375
        %v454 = vpop.f32.mrb[0].mxu0
        %v455 = vadd.f32 %v369, %v454
        %v456 = vpop.f32.mrb[0].mxu0
        %457 = vmatprep.mubr.f32.mxu0 0.0
        %458 = vmatmul.mubr.f32.gmra.mrb[0].mxu0 %v378
        %v459 = vpop.f32.mrb[0].mxu0
        %v460 = vadd.f32 %v369, %v459
        %v461 = vpop.f32.mrb[0].mxu0
        %462 = vmatprep.mubr.f32.mxu0 0.0
        %463 = vmatmul.mubr.f32.gmra.mrb[0].mxu0 %v381
        %v464 = vpop.f32.mrb[0].mxu0
        %v465 = vadd.f32 %v369, %v464
        %v466 = vpop.f32.mrb[0].mxu0
        %467 = vdwg.mxu0
        %v468 = vtanh.pop %v450
        %v469 = vtanh.pop %v455
        %v470 = vtanh.pop %v460
        %v471 = vtanh.pop %v465
        %v472 = vlaneseq
        %v473 = vshrl.u32 %v472, 7
        %v474 = vsub.s32 0, %v473
        %v475 = vrot.slane %v254, %v474
        %vm476 = vcmask 523264
        %v478 = vsel %vm476, %v468, 0
        %v481 = vsel %vm476, %v469, 0
        %v484 = vsel %vm476, %v470, 0
        %v487 = vsel %vm476, %v471, 0
        %489 = vmatprep.subr.mxu0 0.0
        %490 = vmatpush1.msra.mxu0 %v235
        %491 = vmatprep.subr.mxu0 0.0
        %492 = vmatpush1.msra.mxu0 %v236
        %493 = vmatprep.subr.mxu0 0.0
        %494 = vmatpush1.msra.mxu0 %v237
        %495 = vmatprep.subr.mxu0 0.0
        %496 = vmatpush1.msra.mxu0 %v238
        %497 = vmatprep.subr.mxu0 0.0
        %498 = vmatpush1.msra.mxu0 %v239
        %499 = vmatprep.subr.mxu0 0.0
        %500 = vmatpush1.msra.mxu0 %v240
        %501 = vmatprep.subr.mxu0 0.0
        %502 = vmatpush1.msra.mxu0 %v241
        %503 = vmatprep.subr.mxu0 0.0
        %504 = vmatpush1.msra.mxu0 %v242
        %505 = vmatprep.subr.mxu0 0.0
        %506 = vmatpush1.msra.mxu0 0.0
        %507 = vmatprep.subr.mxu0 0.0
        %508 = vmatpush1.msra.mxu0 0.0
        %509 = vmatprep.subr.mxu0 0.0
        %510 = vmatpush1.msra.mxu0 0.0
        %511 = vmatprep.subr.mxu0 0.0
        %512 = vmatpush1.msra.mxu0 0.0
        %513 = vmatprep.subr.mxu0 0.0
        %514 = vmatpush1.msra.mxu0 0.0
        %515 = vmatprep.subr.mxu0 0.0
        %516 = vmatpush1.msra.mxu0 0.0
        %517 = vmatprep.subr.mxu0 0.0
        %518 = vmatpush1.msra.mxu0 0.0
        %519 = vmatprep.subr.mxu0 0.0
        %520 = vmatpush1.msra.mxu0 0.0
        %521 = vmatprep.subr.mxu0 0.0
        %522 = vmatpush1.msra.mxu0 0.0
        %523 = vmatprep.subr.mxu0 0.0
        %524 = vmatpush1.msra.mxu0 0.0
        %525 = vmatprep.subr.mxu0 0.0
        %526 = vmatpush1.msra.mxu0 0.0
        %527 = vmatprep.subr.mxu0 0.0
        %528 = vmatpush1.msra.mxu0 0.0
        %529 = vmatprep.subr.mxu0 0.0
        %530 = vmatpush1.msra.mxu0 0.0
        %531 = vmatprep.subr.mxu0 0.0
        %532 = vmatpush1.msra.mxu0 0.0
        %533 = vmatprep.subr.mxu0 0.0
        %534 = vmatpush1.msra.mxu0 0.0
        %535 = vmatprep.subr.mxu0 0.0
        %536 = vmatpush1.msra.mxu0 0.0
        %537 = vmatprep.subr.mxu0 0.0
        %538 = vmatpush1.msra.mxu0 0.0
        %539 = vmatprep.subr.mxu0 0.0
        %540 = vmatpush1.msra.mxu0 0.0
        %541 = vmatprep.subr.mxu0 0.0
        %542 = vmatpush1.msra.mxu0 0.0
        %543 = vmatprep.subr.mxu0 0.0
        %544 = vmatpush1.msra.mxu0 0.0
        %545 = vmatprep.subr.mxu0 0.0
        %546 = vmatpush1.msra.mxu0 0.0
        %547 = vmatprep.subr.mxu0 0.0
        %548 = vmatpush1.msra.mxu0 0.0
        %549 = vmatprep.subr.mxu0 0.0
        %550 = vmatpush1.msra.mxu0 0.0
        %551 = vmatprep.subr.mxu0 0.0
        %552 = vmatpush1.msra.mxu0 0.0
        %553 = vmatprep.mubr.f32.mxu0 0.0
        %554 = vmatmul.mubr.f32.gmra.mrb[0].mxu0 %v478
        %v555 = vpop.f32.mrb[0].mxu0
        %v556 = vadd.f32 %v475, %v555
        %v557 = vpop.f32.mrb[0].mxu0
        %558 = vmatprep.mubr.f32.mxu0 0.0
        %559 = vmatmul.mubr.f32.gmra.mrb[0].mxu0 %v481
        %v560 = vpop.f32.mrb[0].mxu0
        %v561 = vadd.f32 %v475, %v560
        %v562 = vpop.f32.mrb[0].mxu0
        %563 = vmatprep.mubr.f32.mxu0 0.0
        %564 = vmatmul.mubr.f32.gmra.mrb[0].mxu0 %v484
        %v565 = vpop.f32.mrb[0].mxu0
        %v566 = vadd.f32 %v475, %v565
        %v567 = vpop.f32.mrb[0].mxu0
        %568 = vmatprep.mubr.f32.mxu0 0.0
        %569 = vmatmul.mubr.f32.gmra.mrb[0].mxu0 %v487
        %v570 = vpop.f32.mrb[0].mxu0
        %v571 = vadd.f32 %v475, %v570
        %v572 = vpop.f32.mrb[0].mxu0
        %573 = vdwg.mxu0
        %v574 = vsel %vm264, %v556, -inf
        %575 = vmax.xlane.f32.xlu0 %v574
        %v576 = vpop.xlane.xlu0 %575
        %v577 = vsel %vm264, %v561, -inf
        %578 = vmax.xlane.f32.xlu0 %v577
        %v579 = vpop.xlane.xlu0 %578
        %v580 = vsel %vm264, %v566, -inf
        %581 = vmax.xlane.f32.xlu0 %v580
        %v582 = vpop.xlane.xlu0 %581
        %v583 = vsel %vm264, %v571, -inf
        %584 = vmax.xlane.f32.xlu0 %v583
        %v585 = vpop.xlane.xlu0 %584
        %v586 = vsub.f32 %v556, %v576
        %v587 = vsub.f32 %v561, %v579
        %v588 = vsub.f32 %v566, %v582
        %v589 = vsub.f32 %v571, %v585
        %v590 = vmul.f32 %v586, 1.442695
        %v591 = vpow.pop %v590
        %v592 = vmul.f32 %v587, 1.442695
        %v593 = vpow.pop %v592
        %v594 = vmul.f32 %v588, 1.442695
        %v595 = vpow.pop %v594
        %v596 = vmul.f32 %v589, 1.442695
        %v597 = vpow.pop %v596
        %v598 = vsel %vm264, %v591, 0.0
        %599 = vadd.xlane.f32.xlu0 %v598
        %v600 = vpop.xlane.xlu0 %599
        %v601 = vsel %vm264, %v593, 0.0
        %602 = vadd.xlane.f32.xlu0 %v601
        %v603 = vpop.xlane.xlu0 %602
        %v604 = vsel %vm264, %v595, 0.0
        %605 = vadd.xlane.f32.xlu0 %v604
        %v606 = vpop.xlane.xlu0 %605
        %v607 = vsel %vm264, %v597, 0.0
        %608 = vadd.xlane.f32.xlu0 %v607
        %v609 = vpop.xlane.xlu0 %608
        %v610 = vlog2.pop %v600
        %v611 = vmul.f32 %v610, 0.6931472
        %v612 = vlog2.pop %v603
        %v613 = vmul.f32 %v612, 0.6931472
        %v614 = vlog2.pop %v606
        %v615 = vmul.f32 %v614, 0.6931472
        %v616 = vlog2.pop %v609
        %v617 = vmul.f32 %v616, 0.6931472
        %v618 = vmul.f32 %v591, %v586
        %v619 = vmul.f32 %v593, %v587
        %v620 = vmul.f32 %v595, %v588
        %v621 = vmul.f32 %v597, %v589
        %v622 = vsel %vm264, %v618, 0.0
        %623 = vadd.xlane.f32.xlu0 %v622
        %v624 = vpop.xlane.xlu0 %623
        %v625 = vsel %vm264, %v619, 0.0
        %626 = vadd.xlane.f32.xlu0 %v625
        %v627 = vpop.xlane.xlu0 %626
        %v628 = vsel %vm264, %v620, 0.0
        %629 = vadd.xlane.f32.xlu0 %v628
        %v630 = vpop.xlane.xlu0 %629
        %v631 = vsel %vm264, %v621, 0.0
        %632 = vadd.xlane.f32.xlu0 %v631
        %v633 = vpop.xlane.xlu0 %632
        %v634 = vrcp.pop %v600
        %v635 = vmul.f32 %v624, %v634
        %v636 = vrcp.pop %v603
        %v637 = vmul.f32 %v627, %v636
        %v638 = vrcp.pop %v606
        %v639 = vmul.f32 %v630, %v638
        %v640 = vrcp.pop %v609
        %v641 = vmul.f32 %v633, %v640
        %v642 = vsub.f32 %v611, %v635
        %v643 = vsub.f32 %v613, %v637
        %v644 = vsub.f32 %v615, %v639
        %v645 = vsub.f32 %v617, %v641
        %v646 = vsub.f32 0.0, %v611
        %v647 = vsub.f32 0.0, %v613
        %v648 = vsub.f32 0.0, %v615
        %v649 = vsub.f32 0.0, %v617
        %vm650 = vcmp.ge.f32.partialorder %v556, %v576
        %vm651 = vcmp.ge.f32.partialorder %v561, %v579
        %vm652 = vcmp.ge.f32.partialorder %v566, %v582
        %vm653 = vcmp.ge.f32.partialorder %v571, %v585
        %v654 = vsel %vm650, %v222, 16
        %v655 = vsel %vm651, %v222, 16
        %v656 = vsel %vm652, %v222, 16
        %v657 = vsel %vm653, %v222, 16
        %v658 = vsel %vm264, %v654, 2147483647
        %v659 = vand.u32 %v658, 65535
        %v660 = vshra.s32 %v658, 16
        %v661 = vcvt.s32.f32 %v659
        %v662 = vcvt.s32.f32 %v660
        %663 = vmin.xlane.f32.xlu0 %v662
        %v664 = vpop.xlane.xlu0 %663
        %vm665 = vcmp.eq.f32.partialorder %v662, %v664
        %v666 = vsel %vm665, %v661, inf
        %667 = vmin.xlane.f32.xlu0 %v666
        %v668 = vpop.xlane.xlu0 %667
        %v669 = vcvt.f32.s32 %v668
        %v670 = vcvt.f32.s32 %v664
        %v671 = vshll.u32 %v670, 16
        %v672 = vadd.s32 %v671, %v669
        %v673 = vsel %vm264, %v655, 2147483647
        %v674 = vand.u32 %v673, 65535
        %v675 = vshra.s32 %v673, 16
        %v676 = vcvt.s32.f32 %v674
        %v677 = vcvt.s32.f32 %v675
        %678 = vmin.xlane.f32.xlu0 %v677
        %v679 = vpop.xlane.xlu0 %678
        %vm680 = vcmp.eq.f32.partialorder %v677, %v679
        %v681 = vsel %vm680, %v676, inf
        %682 = vmin.xlane.f32.xlu0 %v681
        %v683 = vpop.xlane.xlu0 %682
        %v684 = vcvt.f32.s32 %v683
        %v685 = vcvt.f32.s32 %v679
        %v686 = vshll.u32 %v685, 16
        %v687 = vadd.s32 %v686, %v684
        %v688 = vsel %vm264, %v656, 2147483647
        %v689 = vand.u32 %v688, 65535
        %v690 = vshra.s32 %v688, 16
        %v691 = vcvt.s32.f32 %v689
        %v692 = vcvt.s32.f32 %v690
        %693 = vmin.xlane.f32.xlu0 %v692
        %v694 = vpop.xlane.xlu0 %693
        %vm695 = vcmp.eq.f32.partialorder %v692, %v694
        %v696 = vsel %vm695, %v691, inf
        %697 = vmin.xlane.f32.xlu0 %v696
        %v698 = vpop.xlane.xlu0 %697
        %v699 = vcvt.f32.s32 %v698
        %v700 = vcvt.f32.s32 %v694
        %v701 = vshll.u32 %v700, 16
        %v702 = vadd.s32 %v701, %v699
        %v703 = vsel %vm264, %v657, 2147483647
        %v704 = vand.u32 %v703, 65535
        %v705 = vshra.s32 %v703, 16
        %v706 = vcvt.s32.f32 %v704
        %v707 = vcvt.s32.f32 %v705
        %708 = vmin.xlane.f32.xlu0 %v707
        %v709 = vpop.xlane.xlu0 %708
        %vm710 = vcmp.eq.f32.partialorder %v707, %v709
        %v711 = vsel %vm710, %v706, inf
        %712 = vmin.xlane.f32.xlu0 %v711
        %v713 = vpop.xlane.xlu0 %712
        %v714 = vcvt.f32.s32 %v713
        %v715 = vcvt.f32.s32 %v709
        %v716 = vshll.u32 %v715, 16
        %v717 = vadd.s32 %v716, %v714
        %vm718 = vcmp.eq.s32.totalorder %v222, %v672
        %vm719 = vcmp.eq.s32.totalorder %v222, %v687
        %vm720 = vcmp.eq.s32.totalorder %v222, %v702
        %vm721 = vcmp.eq.s32.totalorder %v222, %v717
        %v722 = vsel %vm718, 1, 0
        %v723 = vsel %vm719, 1, 0
        %v724 = vsel %vm720, 1, 0
        %v725 = vsel %vm721, 1, 0
        %v726 = vcvt.s32.f32 %v722
        %v727 = vcvt.s32.f32 %v723
        %v728 = vcvt.s32.f32 %v724
        %v729 = vcvt.s32.f32 %v725
        %730 = vrot.lane.b32.xlu0 %v468, 16
        %v731 = vpop.permute.xlu0 %730
        %732 = vrot.lane.b32.xlu0 %v469, 16
        %v733 = vpop.permute.xlu0 %732
        %734 = vrot.lane.b32.xlu0 %v470, 16
        %v735 = vpop.permute.xlu0 %734
        %736 = vrot.lane.b32.xlu0 %v471, 16
        %v737 = vpop.permute.xlu0 %736
        %v742 = vsel %vm264, %v726, %v731
        %v743 = vsel %vm264, %v727, %v733
        %v744 = vsel %vm264, %v728, %v735
        %v745 = vsel %vm264, %v729, %v737
        %v746 = vlaneseq
        %v747 = vshrl.u32 %v746, 7
        %v748 = vsub.s32 0, %v747
        %v749 = vrot.slane %v253, %v748
        %vm750 = vcmask 654336
        %v752 = vsel %vm750, %v742, 0
        %v755 = vsel %vm750, %v743, 0
        %v758 = vsel %vm750, %v744, 0
        %v761 = vsel %vm750, %v745, 0
        %763 = vmatprep.subr.mxu0 0.0
        %764 = vmatpush1.msra.mxu0 %v225
        %765 = vmatprep.subr.mxu0 0.0
        %766 = vmatpush1.msra.mxu0 %v226
        %767 = vmatprep.subr.mxu0 0.0
        %768 = vmatpush1.msra.mxu0 %v227
        %769 = vmatprep.subr.mxu0 0.0
        %770 = vmatpush1.msra.mxu0 %v228
        %771 = vmatprep.subr.mxu0 0.0
        %772 = vmatpush1.msra.mxu0 %v229
        %773 = vmatprep.subr.mxu0 0.0
        %774 = vmatpush1.msra.mxu0 %v230
        %775 = vmatprep.subr.mxu0 0.0
        %776 = vmatpush1.msra.mxu0 %v231
        %777 = vmatprep.subr.mxu0 0.0
        %778 = vmatpush1.msra.mxu0 %v232
        %779 = vmatprep.subr.mxu0 0.0
        %780 = vmatpush1.msra.mxu0 %v233
        %781 = vmatprep.subr.mxu0 0.0
        %782 = vmatpush1.msra.mxu0 %v234
        %783 = vmatprep.subr.mxu0 0.0
        %784 = vmatpush1.msra.mxu0 0.0
        %785 = vmatprep.subr.mxu0 0.0
        %786 = vmatpush1.msra.mxu0 0.0
        %787 = vmatprep.subr.mxu0 0.0
        %788 = vmatpush1.msra.mxu0 0.0
        %789 = vmatprep.subr.mxu0 0.0
        %790 = vmatpush1.msra.mxu0 0.0
        %791 = vmatprep.subr.mxu0 0.0
        %792 = vmatpush1.msra.mxu0 0.0
        %793 = vmatprep.subr.mxu0 0.0
        %794 = vmatpush1.msra.mxu0 0.0
        %795 = vmatprep.subr.mxu0 0.0
        %796 = vmatpush1.msra.mxu0 0.0
        %797 = vmatprep.subr.mxu0 0.0
        %798 = vmatpush1.msra.mxu0 0.0
        %799 = vmatprep.subr.mxu0 0.0
        %800 = vmatpush1.msra.mxu0 0.0
        %801 = vmatprep.subr.mxu0 0.0
        %802 = vmatpush1.msra.mxu0 0.0
        %803 = vmatprep.subr.mxu0 0.0
        %804 = vmatpush1.msra.mxu0 0.0
        %805 = vmatprep.subr.mxu0 0.0
        %806 = vmatpush1.msra.mxu0 0.0
        %807 = vmatprep.subr.mxu0 0.0
        %808 = vmatpush1.msra.mxu0 0.0
        %809 = vmatprep.subr.mxu0 0.0
        %810 = vmatpush1.msra.mxu0 0.0
        %811 = vmatprep.subr.mxu0 0.0
        %812 = vmatpush1.msra.mxu0 0.0
        %813 = vmatprep.subr.mxu0 0.0
        %814 = vmatpush1.msra.mxu0 0.0
        %815 = vmatprep.subr.mxu0 0.0
        %816 = vmatpush1.msra.mxu0 0.0
        %817 = vmatprep.subr.mxu0 0.0
        %818 = vmatpush1.msra.mxu0 0.0
        %819 = vmatprep.subr.mxu0 0.0
        %820 = vmatpush1.msra.mxu0 0.0
        %821 = vmatprep.subr.mxu0 0.0
        %822 = vmatpush1.msra.mxu0 0.0
        %823 = vmatprep.subr.mxu0 0.0
        %824 = vmatpush1.msra.mxu0 0.0
        %825 = vmatprep.subr.mxu0 0.0
        %826 = vmatpush1.msra.mxu0 0.0
        %827 = vmatprep.mubr.f32.mxu0 0.0
        %828 = vmatmul.mubr.f32.gmra.mrb[0].mxu0 %v752
        %v829 = vpop.f32.mrb[0].mxu0
        %v830 = vadd.f32 %v749, %v829
        %v831 = vpop.f32.mrb[0].mxu0
        %832 = vmatprep.mubr.f32.mxu0 0.0
        %833 = vmatmul.mubr.f32.gmra.mrb[0].mxu0 %v755
        %v834 = vpop.f32.mrb[0].mxu0
        %v835 = vadd.f32 %v749, %v834
        %v836 = vpop.f32.mrb[0].mxu0
        %837 = vmatprep.mubr.f32.mxu0 0.0
        %838 = vmatmul.mubr.f32.gmra.mrb[0].mxu0 %v758
        %v839 = vpop.f32.mrb[0].mxu0
        %v840 = vadd.f32 %v749, %v839
        %v841 = vpop.f32.mrb[0].mxu0
        %842 = vmatprep.mubr.f32.mxu0 0.0
        %843 = vmatmul.mubr.f32.gmra.mrb[0].mxu0 %v761
        %v844 = vpop.f32.mrb[0].mxu0
        %v845 = vadd.f32 %v749, %v844
        %v846 = vpop.f32.mrb[0].mxu0
        %847 = vdwg.mxu0
        %v848 = vtanh.pop %v830
        %v849 = vtanh.pop %v835
        %v850 = vtanh.pop %v840
        %v851 = vtanh.pop %v845
        %v852 = vadd.f32 %v642, 0.0
        %v853 = vadd.f32 %v643, 0.0
        %v854 = vadd.f32 %v644, 0.0
        %v855 = vadd.f32 %v645, 0.0
        %v856 = vadd.f32 %v646, 0.0
        %v857 = vadd.f32 %v647, 0.0
        %v858 = vadd.f32 %v648, 0.0
        %v859 = vadd.f32 %v649, 0.0
        %861 = vset.pattern.permute.xlu0 0
        %862 = vperm.xlu0 %861, %v726
        %v863 = vpop.permute.xlu0 %862
        %866 = vset.pattern.permute.xlu0 0
        %867 = vperm.xlu0 %866, %v727
        %v868 = vpop.permute.xlu0 %867
        %871 = vset.pattern.permute.xlu0 0
        %872 = vperm.xlu0 %871, %v728
        %v873 = vpop.permute.xlu0 %872
        %876 = vset.pattern.permute.xlu0 0
        %877 = vperm.xlu0 %876, %v729
        %v878 = vpop.permute.xlu0 %877
        %v880 = vmul.f32 %v863, %v848
        %v881 = vmul.f32 %v868, %v849
        %v882 = vmul.f32 %v873, %v850
        %v883 = vmul.f32 %v878, %v851
        %v884 = vadd.f32 %v880, 0.0
        %v885 = vadd.f32 %v881, 0.0
        %v886 = vadd.f32 %v882, 0.0
        %v887 = vadd.f32 %v883, 0.0
        %v888 = vmax.f32 %v726, 0.0
        %v889 = vmax.f32 %v727, 0.0
        %v890 = vmax.f32 %v728, 0.0
        %v891 = vmax.f32 %v729, 0.0
        %vm892 = vcmp.eq.s32.totalorder %v222, 0
        %v893 = vcvt.s32.f32 %v672
        %v894 = vcvt.s32.f32 %v687
        %v895 = vcvt.s32.f32 %v702
        %v896 = vcvt.s32.f32 %v717
        %v897 = vsel %vm892, %v893, 0.0
        %v898 = vsel %vm892, %v894, 0.0
        %v899 = vsel %vm892, %v895, 0.0
        %v900 = vsel %vm892, %v896, 0.0
        %v901 = vsel %vm892, %v642, 0.0
        %v902 = vsel %vm892, %v643, 0.0
        %v903 = vsel %vm892, %v644, 0.0
        %v904 = vsel %vm892, %v645, 0.0
        %v906 = vsel %vm476, %v848, 0
        %v909 = vsel %vm476, %v849, 0
        %v912 = vsel %vm476, %v850, 0
        %v915 = vsel %vm476, %v851, 0
        %917 = vmatprep.subr.mxu0 0.0
        %918 = vmatpush1.msra.mxu0 %v235
        %919 = vmatprep.subr.mxu0 0.0
        %920 = vmatpush1.msra.mxu0 %v236
        %921 = vmatprep.subr.mxu0 0.0
        %922 = vmatpush1.msra.mxu0 %v237
        %923 = vmatprep.subr.mxu0 0.0
        %924 = vmatpush1.msra.mxu0 %v238
        %925 = vmatprep.subr.mxu0 0.0
        %926 = vmatpush1.msra.mxu0 %v239
        %927 = vmatprep.subr.mxu0 0.0
        %928 = vmatpush1.msra.mxu0 %v240
        %929 = vmatprep.subr.mxu0 0.0
        %930 = vmatpush1.msra.mxu0 %v241
        %931 = vmatprep.subr.mxu0 0.0
        %932 = vmatpush1.msra.mxu0 %v242
        %933 = vmatprep.subr.mxu0 0.0
        %934 = vmatpush1.msra.mxu0 0.0
        %935 = vmatprep.subr.mxu0 0.0
        %936 = vmatpush1.msra.mxu0 0.0
        %937 = vmatprep.subr.mxu0 0.0
        %938 = vmatpush1.msra.mxu0 0.0
        %939 = vmatprep.subr.mxu0 0.0
        %940 = vmatpush1.msra.mxu0 0.0
        %941 = vmatprep.subr.mxu0 0.0
        %942 = vmatpush1.msra.mxu0 0.0
        %943 = vmatprep.subr.mxu0 0.0
        %944 = vmatpush1.msra.mxu0 0.0
        %945 = vmatprep.subr.mxu0 0.0
        %946 = vmatpush1.msra.mxu0 0.0
        %947 = vmatprep.subr.mxu0 0.0
        %948 = vmatpush1.msra.mxu0 0.0
        %949 = vmatprep.subr.mxu0 0.0
        %950 = vmatpush1.msra.mxu0 0.0
        %951 = vmatprep.subr.mxu0 0.0
        %952 = vmatpush1.msra.mxu0 0.0
        %953 = vmatprep.subr.mxu0 0.0
        %954 = vmatpush1.msra.mxu0 0.0
        %955 = vmatprep.subr.mxu0 0.0
        %956 = vmatpush1.msra.mxu0 0.0
        %957 = vmatprep.subr.mxu0 0.0
        %958 = vmatpush1.msra.mxu0 0.0
        %959 = vmatprep.subr.mxu0 0.0
        %960 = vmatpush1.msra.mxu0 0.0
        %961 = vmatprep.subr.mxu0 0.0
        %962 = vmatpush1.msra.mxu0 0.0
        %963 = vmatprep.subr.mxu0 0.0
        %964 = vmatpush1.msra.mxu0 0.0
        %965 = vmatprep.subr.mxu0 0.0
        %966 = vmatpush1.msra.mxu0 0.0
        %967 = vmatprep.subr.mxu0 0.0
        %968 = vmatpush1.msra.mxu0 0.0
        %969 = vmatprep.subr.mxu0 0.0
        %970 = vmatpush1.msra.mxu0 0.0
        %971 = vmatprep.subr.mxu0 0.0
        %972 = vmatpush1.msra.mxu0 0.0
        %973 = vmatprep.subr.mxu0 0.0
        %974 = vmatpush1.msra.mxu0 0.0
        %975 = vmatprep.subr.mxu0 0.0
        %976 = vmatpush1.msra.mxu0 0.0
        %977 = vmatprep.subr.mxu0 0.0
        %978 = vmatpush1.msra.mxu0 0.0
        %979 = vmatprep.subr.mxu0 0.0
        %980 = vmatpush1.msra.mxu0 0.0
        %981 = vmatprep.mubr.f32.mxu0 0.0
        %982 = vmatmul.mubr.f32.gmra.mrb[0].mxu0 %v906
        %v983 = vpop.f32.mrb[0].mxu0
        %v984 = vadd.f32 %v475, %v983
        %v985 = vpop.f32.mrb[0].mxu0
        %986 = vmatprep.mubr.f32.mxu0 0.0
        %987 = vmatmul.mubr.f32.gmra.mrb[0].mxu0 %v909
        %v988 = vpop.f32.mrb[0].mxu0
        %v989 = vadd.f32 %v475, %v988
        %v990 = vpop.f32.mrb[0].mxu0
        %991 = vmatprep.mubr.f32.mxu0 0.0
        %992 = vmatmul.mubr.f32.gmra.mrb[0].mxu0 %v912
        %v993 = vpop.f32.mrb[0].mxu0
        %v994 = vadd.f32 %v475, %v993
        %v995 = vpop.f32.mrb[0].mxu0
        %996 = vmatprep.mubr.f32.mxu0 0.0
        %997 = vmatmul.mubr.f32.gmra.mrb[0].mxu0 %v915
        %v998 = vpop.f32.mrb[0].mxu0
        %v999 = vadd.f32 %v475, %v998
        %v1000 = vpop.f32.mrb[0].mxu0
        %1001 = vdwg.mxu0
        %v1002 = vsel %vm264, %v984, -inf
        %1003 = vmax.xlane.f32.xlu0 %v1002
        %v1004 = vpop.xlane.xlu0 %1003
        %v1005 = vsel %vm264, %v989, -inf
        %1006 = vmax.xlane.f32.xlu0 %v1005
        %v1007 = vpop.xlane.xlu0 %1006
        %v1008 = vsel %vm264, %v994, -inf
        %1009 = vmax.xlane.f32.xlu0 %v1008
        %v1010 = vpop.xlane.xlu0 %1009
        %v1011 = vsel %vm264, %v999, -inf
        %1012 = vmax.xlane.f32.xlu0 %v1011
        %v1013 = vpop.xlane.xlu0 %1012
        %v1014 = vsub.f32 %v984, %v1004
        %v1015 = vsub.f32 %v989, %v1007
        %v1016 = vsub.f32 %v994, %v1010
        %v1017 = vsub.f32 %v999, %v1013
        %v1018 = vmul.f32 %v1014, 1.442695
        %v1019 = vpow.pop %v1018
        %v1020 = vmul.f32 %v1015, 1.442695
        %v1021 = vpow.pop %v1020
        %v1022 = vmul.f32 %v1016, 1.442695
        %v1023 = vpow.pop %v1022
        %v1024 = vmul.f32 %v1017, 1.442695
        %v1025 = vpow.pop %v1024
        %v1026 = vsel %vm264, %v1019, 0.0
        %1027 = vadd.xlane.f32.xlu0 %v1026
        %v1028 = vpop.xlane.xlu0 %1027
        %v1029 = vsel %vm264, %v1021, 0.0
        %1030 = vadd.xlane.f32.xlu0 %v1029
        %v1031 = vpop.xlane.xlu0 %1030
        %v1032 = vsel %vm264, %v1023, 0.0
        %1033 = vadd.xlane.f32.xlu0 %v1032
        %v1034 = vpop.xlane.xlu0 %1033
        %v1035 = vsel %vm264, %v1025, 0.0
        %1036 = vadd.xlane.f32.xlu0 %v1035
        %v1037 = vpop.xlane.xlu0 %1036
        %v1038 = vlog2.pop %v1028
        %v1039 = vmul.f32 %v1038, 0.6931472
        %v1040 = vlog2.pop %v1031
        %v1041 = vmul.f32 %v1040, 0.6931472
        %v1042 = vlog2.pop %v1034
        %v1043 = vmul.f32 %v1042, 0.6931472
        %v1044 = vlog2.pop %v1037
        %v1045 = vmul.f32 %v1044, 0.6931472
        %v1046 = vmul.f32 %v1019, %v1014
        %v1047 = vmul.f32 %v1021, %v1015
        %v1048 = vmul.f32 %v1023, %v1016
        %v1049 = vmul.f32 %v1025, %v1017
        %v1050 = vsel %vm264, %v1046, 0.0
        %1051 = vadd.xlane.f32.xlu0 %v1050
        %v1052 = vpop.xlane.xlu0 %1051
        %v1053 = vsel %vm264, %v1047, 0.0
        %1054 = vadd.xlane.f32.xlu0 %v1053
        %v1055 = vpop.xlane.xlu0 %1054
        %v1056 = vsel %vm264, %v1048, 0.0
        %1057 = vadd.xlane.f32.xlu0 %v1056
        %v1058 = vpop.xlane.xlu0 %1057
        %v1059 = vsel %vm264, %v1049, 0.0
        %1060 = vadd.xlane.f32.xlu0 %v1059
        %v1061 = vpop.xlane.xlu0 %1060
        %v1062 = vrcp.pop %v1028
        %v1063 = vmul.f32 %v1052, %v1062
        %v1064 = vrcp.pop %v1031
        %v1065 = vmul.f32 %v1055, %v1064
        %v1066 = vrcp.pop %v1034
        %v1067 = vmul.f32 %v1058, %v1066
        %v1068 = vrcp.pop %v1037
        %v1069 = vmul.f32 %v1061, %v1068
        %v1070 = vsub.f32 %v1039, %v1063
        %v1071 = vsub.f32 %v1041, %v1065
        %v1072 = vsub.f32 %v1043, %v1067
        %v1073 = vsub.f32 %v1045, %v1069
        %v1074 = vsub.f32 0.0, %v1039
        %v1075 = vsub.f32 0.0, %v1041
        %v1076 = vsub.f32 0.0, %v1043
        %v1077 = vsub.f32 0.0, %v1045
        %vm1078 = vcmp.ge.f32.partialorder %v984, %v1004
        %vm1079 = vcmp.ge.f32.partialorder %v989, %v1007
        %vm1080 = vcmp.ge.f32.partialorder %v994, %v1010
        %vm1081 = vcmp.ge.f32.partialorder %v999, %v1013
        %v1082 = vsel %vm1078, %v222, 16
        %v1083 = vsel %vm1079, %v222, 16
        %v1084 = vsel %vm1080, %v222, 16
        %v1085 = vsel %vm1081, %v222, 16
        %v1086 = vsel %vm264, %v1082, 2147483647
        %v1087 = vand.u32 %v1086, 65535
        %v1088 = vshra.s32 %v1086, 16
        %v1089 = vcvt.s32.f32 %v1087
        %v1090 = vcvt.s32.f32 %v1088
        %1091 = vmin.xlane.f32.xlu0 %v1090
        %v1092 = vpop.xlane.xlu0 %1091
        %vm1093 = vcmp.eq.f32.partialorder %v1090, %v1092
        %v1094 = vsel %vm1093, %v1089, inf
        %1095 = vmin.xlane.f32.xlu0 %v1094
        %v1096 = vpop.xlane.xlu0 %1095
        %v1097 = vcvt.f32.s32 %v1096
        %v1098 = vcvt.f32.s32 %v1092
        %v1099 = vshll.u32 %v1098, 16
        %v1100 = vadd.s32 %v1099, %v1097
        %v1101 = vsel %vm264, %v1083, 2147483647
        %v1102 = vand.u32 %v1101, 65535
        %v1103 = vshra.s32 %v1101, 16
        %v1104 = vcvt.s32.f32 %v1102
        %v1105 = vcvt.s32.f32 %v1103
        %1106 = vmin.xlane.f32.xlu0 %v1105
        %v1107 = vpop.xlane.xlu0 %1106
        %vm1108 = vcmp.eq.f32.partialorder %v1105, %v1107
        %v1109 = vsel %vm1108, %v1104, inf
        %1110 = vmin.xlane.f32.xlu0 %v1109
        %v1111 = vpop.xlane.xlu0 %1110
        %v1112 = vcvt.f32.s32 %v1111
        %v1113 = vcvt.f32.s32 %v1107
        %v1114 = vshll.u32 %v1113, 16
        %v1115 = vadd.s32 %v1114, %v1112
        %v1116 = vsel %vm264, %v1084, 2147483647
        %v1117 = vand.u32 %v1116, 65535
        %v1118 = vshra.s32 %v1116, 16
        %v1119 = vcvt.s32.f32 %v1117
        %v1120 = vcvt.s32.f32 %v1118
        %1121 = vmin.xlane.f32.xlu0 %v1120
        %v1122 = vpop.xlane.xlu0 %1121
        %vm1123 = vcmp.eq.f32.partialorder %v1120, %v1122
        %v1124 = vsel %vm1123, %v1119, inf
        %1125 = vmin.xlane.f32.xlu0 %v1124
        %v1126 = vpop.xlane.xlu0 %1125
        %v1127 = vcvt.f32.s32 %v1126
        %v1128 = vcvt.f32.s32 %v1122
        %v1129 = vshll.u32 %v1128, 16
        %v1130 = vadd.s32 %v1129, %v1127
        %v1131 = vsel %vm264, %v1085, 2147483647
        %v1132 = vand.u32 %v1131, 65535
        %v1133 = vshra.s32 %v1131, 16
        %v1134 = vcvt.s32.f32 %v1132
        %v1135 = vcvt.s32.f32 %v1133
        %1136 = vmin.xlane.f32.xlu0 %v1135
        %v1137 = vpop.xlane.xlu0 %1136
        %vm1138 = vcmp.eq.f32.partialorder %v1135, %v1137
        %v1139 = vsel %vm1138, %v1134, inf
        %1140 = vmin.xlane.f32.xlu0 %v1139
        %v1141 = vpop.xlane.xlu0 %1140
        %v1142 = vcvt.f32.s32 %v1141
        %v1143 = vcvt.f32.s32 %v1137
        %v1144 = vshll.u32 %v1143, 16
        %v1145 = vadd.s32 %v1144, %v1142
        %vm1146 = vcmp.eq.s32.totalorder %v222, %v1100
        %vm1147 = vcmp.eq.s32.totalorder %v222, %v1115
        %vm1148 = vcmp.eq.s32.totalorder %v222, %v1130
        %vm1149 = vcmp.eq.s32.totalorder %v222, %v1145
        %v1150 = vsel %vm1146, 1, 0
        %v1151 = vsel %vm1147, 1, 0
        %v1152 = vsel %vm1148, 1, 0
        %v1153 = vsel %vm1149, 1, 0
        %v1154 = vcvt.s32.f32 %v1150
        %v1155 = vcvt.s32.f32 %v1151
        %v1156 = vcvt.s32.f32 %v1152
        %v1157 = vcvt.s32.f32 %v1153
        %1158 = vrot.lane.b32.xlu0 %v848, 16
        %v1159 = vpop.permute.xlu0 %1158
        %1160 = vrot.lane.b32.xlu0 %v849, 16
        %v1161 = vpop.permute.xlu0 %1160
        %1162 = vrot.lane.b32.xlu0 %v850, 16
        %v1163 = vpop.permute.xlu0 %1162
        %1164 = vrot.lane.b32.xlu0 %v851, 16
        %v1165 = vpop.permute.xlu0 %1164
        %v1170 = vsel %vm264, %v1154, %v1159
        %v1171 = vsel %vm264, %v1155, %v1161
        %v1172 = vsel %vm264, %v1156, %v1163
        %v1173 = vsel %vm264, %v1157, %v1165
        %v1175 = vsel %vm750, %v1170, 0
        %v1178 = vsel %vm750, %v1171, 0
        %v1181 = vsel %vm750, %v1172, 0
        %v1184 = vsel %vm750, %v1173, 0
        %1186 = vmatprep.subr.mxu0 0.0
        %1187 = vmatpush1.msra.mxu0 %v225
        %1188 = vmatprep.subr.mxu0 0.0
        %1189 = vmatpush1.msra.mxu0 %v226
        %1190 = vmatprep.subr.mxu0 0.0
        %1191 = vmatpush1.msra.mxu0 %v227
        %1192 = vmatprep.subr.mxu0 0.0
        %1193 = vmatpush1.msra.mxu0 %v228
        %1194 = vmatprep.subr.mxu0 0.0
        %1195 = vmatpush1.msra.mxu0 %v229
        %1196 = vmatprep.subr.mxu0 0.0
        %1197 = vmatpush1.msra.mxu0 %v230
        %1198 = vmatprep.subr.mxu0 0.0
        %1199 = vmatpush1.msra.mxu0 %v231
        %1200 = vmatprep.subr.mxu0 0.0
        %1201 = vmatpush1.msra.mxu0 %v232
        %1202 = vmatprep.subr.mxu0 0.0
        %1203 = vmatpush1.msra.mxu0 %v233
        %1204 = vmatprep.subr.mxu0 0.0
        %1205 = vmatpush1.msra.mxu0 %v234
        %1206 = vmatprep.subr.mxu0 0.0
        %1207 = vmatpush1.msra.mxu0 0.0
        %1208 = vmatprep.subr.mxu0 0.0
        %1209 = vmatpush1.msra.mxu0 0.0
        %1210 = vmatprep.subr.mxu0 0.0
        %1211 = vmatpush1.msra.mxu0 0.0
        %1212 = vmatprep.subr.mxu0 0.0
        %1213 = vmatpush1.msra.mxu0 0.0
        %1214 = vmatprep.subr.mxu0 0.0
        %1215 = vmatpush1.msra.mxu0 0.0
        %1216 = vmatprep.subr.mxu0 0.0
        %1217 = vmatpush1.msra.mxu0 0.0
        %1218 = vmatprep.subr.mxu0 0.0
        %1219 = vmatpush1.msra.mxu0 0.0
        %1220 = vmatprep.subr.mxu0 0.0
        %1221 = vmatpush1.msra.mxu0 0.0
        %1222 = vmatprep.subr.mxu0 0.0
        %1223 = vmatpush1.msra.mxu0 0.0
        %1224 = vmatprep.subr.mxu0 0.0
        %1225 = vmatpush1.msra.mxu0 0.0
        %1226 = vmatprep.subr.mxu0 0.0
        %1227 = vmatpush1.msra.mxu0 0.0
        %1228 = vmatprep.subr.mxu0 0.0
        %1229 = vmatpush1.msra.mxu0 0.0
        %1230 = vmatprep.subr.mxu0 0.0
        %1231 = vmatpush1.msra.mxu0 0.0
        %1232 = vmatprep.subr.mxu0 0.0
        %1233 = vmatpush1.msra.mxu0 0.0
        %1234 = vmatprep.subr.mxu0 0.0
        %1235 = vmatpush1.msra.mxu0 0.0
        %1236 = vmatprep.subr.mxu0 0.0
        %1237 = vmatpush1.msra.mxu0 0.0
        %1238 = vmatprep.subr.mxu0 0.0
        %1239 = vmatpush1.msra.mxu0 0.0
        %1240 = vmatprep.subr.mxu0 0.0
        %1241 = vmatpush1.msra.mxu0 0.0
        %1242 = vmatprep.subr.mxu0 0.0
        %1243 = vmatpush1.msra.mxu0 0.0
        %1244 = vmatprep.subr.mxu0 0.0
        %1245 = vmatpush1.msra.mxu0 0.0
        %1246 = vmatprep.subr.mxu0 0.0
        %1247 = vmatpush1.msra.mxu0 0.0
        %1248 = vmatprep.subr.mxu0 0.0
        %1249 = vmatpush1.msra.mxu0 0.0
        %1250 = vmatprep.mubr.f32.mxu0 0.0
        %1251 = vmatmul.mubr.f32.gmra.mrb[0].mxu0 %v1175
        %v1252 = vpop.f32.mrb[0].mxu0
        %v1253 = vadd.f32 %v749, %v1252
        %v1254 = vpop.f32.mrb[0].mxu0
        %1255 = vmatprep.mubr.f32.mxu0 0.0
        %1256 = vmatmul.mubr.f32.gmra.mrb[0].mxu0 %v1178
        %v1257 = vpop.f32.mrb[0].mxu0
        %v1258 = vadd.f32 %v749, %v1257
        %v1259 = vpop.f32.mrb[0].mxu0
        %1260 = vmatprep.mubr.f32.mxu0 0.0
        %1261 = vmatmul.mubr.f32.gmra.mrb[0].mxu0 %v1181
        %v1262 = vpop.f32.mrb[0].mxu0
        %v1263 = vadd.f32 %v749, %v1262
        %v1264 = vpop.f32.mrb[0].mxu0
        %1265 = vmatprep.mubr.f32.mxu0 0.0
        %1266 = vmatmul.mubr.f32.gmra.mrb[0].mxu0 %v1184
        %v1267 = vpop.f32.mrb[0].mxu0
        %v1268 = vadd.f32 %v749, %v1267
        %v1269 = vpop.f32.mrb[0].mxu0
        %1270 = vdwg.mxu0
        %v1271 = vtanh.pop %v1253
        %v1272 = vtanh.pop %v1258
        %v1273 = vtanh.pop %v1263
        %v1274 = vtanh.pop %v1268
        %v1275 = vsub.f32 1.0, %v888
        %v1276 = vsub.f32 1.0, %v889
        %v1277 = vsub.f32 1.0, %v890
        %v1278 = vsub.f32 1.0, %v891
        %v1279 = vmul.f32 %v1070, %v1275
        %v1280 = vmul.f32 %v1071, %v1276
        %v1281 = vmul.f32 %v1072, %v1277
        %v1282 = vmul.f32 %v1073, %v1278
        %v1283 = vadd.f32 %v852, %v1279
        %v1284 = vadd.f32 %v853, %v1280
        %v1285 = vadd.f32 %v854, %v1281
        %v1286 = vadd.f32 %v855, %v1282
        %v1287 = vmul.f32 %v1074, %v1275
        %v1288 = vmul.f32 %v1075, %v1276
        %v1289 = vmul.f32 %v1076, %v1277
        %v1290 = vmul.f32 %v1077, %v1278
        %v1291 = vadd.f32 %v856, %v1287
        %v1292 = vadd.f32 %v857, %v1288
        %v1293 = vadd.f32 %v858, %v1289
        %v1294 = vadd.f32 %v859, %v1290
        %v1295 = vadd.f32 %v1275, 1.0
        %v1296 = vadd.f32 %v1276, 1.0
        %v1297 = vadd.f32 %v1277, 1.0
        %v1298 = vadd.f32 %v1278, 1.0
        %v1299 = vmul.f32 %v1275, %v1154
        %v1300 = vmul.f32 %v1276, %v1155
        %v1301 = vmul.f32 %v1277, %v1156
        %v1302 = vmul.f32 %v1278, %v1157
        %1304 = vset.pattern.permute.xlu0 0
        %1305 = vperm.xlu0 %1304, %v1299
        %v1306 = vpop.permute.xlu0 %1305
        %1309 = vset.pattern.permute.xlu0 0
        %1310 = vperm.xlu0 %1309, %v1300
        %v1311 = vpop.permute.xlu0 %1310
        %1314 = vset.pattern.permute.xlu0 0
        %1315 = vperm.xlu0 %1314, %v1301
        %v1316 = vpop.permute.xlu0 %1315
        %1319 = vset.pattern.permute.xlu0 0
        %1320 = vperm.xlu0 %1319, %v1302
        %v1321 = vpop.permute.xlu0 %1320
        %v1323 = vmul.f32 %v1306, %v1271
        %v1324 = vmul.f32 %v1311, %v1272
        %v1325 = vmul.f32 %v1316, %v1273
        %v1326 = vmul.f32 %v1321, %v1274
        %v1327 = vadd.f32 %v884, %v1323
        %v1328 = vadd.f32 %v885, %v1324
        %v1329 = vadd.f32 %v886, %v1325
        %v1330 = vadd.f32 %v887, %v1326
        %v1331 = vmax.f32 %v888, %v1154
        %v1332 = vmax.f32 %v889, %v1155
        %v1333 = vmax.f32 %v890, %v1156
        %v1334 = vmax.f32 %v891, %v1157
        %vm1335 = vcmp.eq.s32.totalorder %v222, 1
        %v1336 = vcvt.s32.f32 %v1100
        %v1337 = vcvt.s32.f32 %v1115
        %v1338 = vcvt.s32.f32 %v1130
        %v1339 = vcvt.s32.f32 %v1145
        %v1340 = vsel %vm1335, %v1336, %v897
        %v1341 = vsel %vm1335, %v1337, %v898
        %v1342 = vsel %vm1335, %v1338, %v899
        %v1343 = vsel %vm1335, %v1339, %v900
        %v1344 = vsel %vm1335, %v1070, %v901
        %v1345 = vsel %vm1335, %v1071, %v902
        %v1346 = vsel %vm1335, %v1072, %v903
        %v1347 = vsel %vm1335, %v1073, %v904
        %v1349 = vsel %vm476, %v1271, 0
        %v1352 = vsel %vm476, %v1272, 0
        %v1355 = vsel %vm476, %v1273, 0
        %v1358 = vsel %vm476, %v1274, 0
        %1360 = vmatprep.subr.mxu0 0.0
        %1361 = vmatpush1.msra.mxu0 %v235
        %1362 = vmatprep.subr.mxu0 0.0
        %1363 = vmatpush1.msra.mxu0 %v236
        %1364 = vmatprep.subr.mxu0 0.0
        %1365 = vmatpush1.msra.mxu0 %v237
        %1366 = vmatprep.subr.mxu0 0.0
        %1367 = vmatpush1.msra.mxu0 %v238
        %1368 = vmatprep.subr.mxu0 0.0
        %1369 = vmatpush1.msra.mxu0 %v239
        %1370 = vmatprep.subr.mxu0 0.0
        %1371 = vmatpush1.msra.mxu0 %v240
        %1372 = vmatprep.subr.mxu0 0.0
        %1373 = vmatpush1.msra.mxu0 %v241
        %1374 = vmatprep.subr.mxu0 0.0
        %1375 = vmatpush1.msra.mxu0 %v242
        %1376 = vmatprep.subr.mxu0 0.0
        %1377 = vmatpush1.msra.mxu0 0.0
        %1378 = vmatprep.subr.mxu0 0.0
        %1379 = vmatpush1.msra.mxu0 0.0
        %1380 = vmatprep.subr.mxu0 0.0
        %1381 = vmatpush1.msra.mxu0 0.0
        %1382 = vmatprep.subr.mxu0 0.0
        %1383 = vmatpush1.msra.mxu0 0.0
        %1384 = vmatprep.subr.mxu0 0.0
        %1385 = vmatpush1.msra.mxu0 0.0
        %1386 = vmatprep.subr.mxu0 0.0
        %1387 = vmatpush1.msra.mxu0 0.0
        %1388 = vmatprep.subr.mxu0 0.0
        %1389 = vmatpush1.msra.mxu0 0.0
        %1390 = vmatprep.subr.mxu0 0.0
        %1391 = vmatpush1.msra.mxu0 0.0
        %1392 = vmatprep.subr.mxu0 0.0
        %1393 = vmatpush1.msra.mxu0 0.0
        %1394 = vmatprep.subr.mxu0 0.0
        %1395 = vmatpush1.msra.mxu0 0.0
        %1396 = vmatprep.subr.mxu0 0.0
        %1397 = vmatpush1.msra.mxu0 0.0
        %1398 = vmatprep.subr.mxu0 0.0
        %1399 = vmatpush1.msra.mxu0 0.0
        %1400 = vmatprep.subr.mxu0 0.0
        %1401 = vmatpush1.msra.mxu0 0.0
        %1402 = vmatprep.subr.mxu0 0.0
        %1403 = vmatpush1.msra.mxu0 0.0
        %1404 = vmatprep.subr.mxu0 0.0
        %1405 = vmatpush1.msra.mxu0 0.0
        %1406 = vmatprep.subr.mxu0 0.0
        %1407 = vmatpush1.msra.mxu0 0.0
        %1408 = vmatprep.subr.mxu0 0.0
        %1409 = vmatpush1.msra.mxu0 0.0
        %1410 = vmatprep.subr.mxu0 0.0
        %1411 = vmatpush1.msra.mxu0 0.0
        %1412 = vmatprep.subr.mxu0 0.0
        %1413 = vmatpush1.msra.mxu0 0.0
        %1414 = vmatprep.subr.mxu0 0.0
        %1415 = vmatpush1.msra.mxu0 0.0
        %1416 = vmatprep.subr.mxu0 0.0
        %1417 = vmatpush1.msra.mxu0 0.0
        %1418 = vmatprep.subr.mxu0 0.0
        %1419 = vmatpush1.msra.mxu0 0.0
        %1420 = vmatprep.subr.mxu0 0.0
        %1421 = vmatpush1.msra.mxu0 0.0
        %1422 = vmatprep.subr.mxu0 0.0
        %1423 = vmatpush1.msra.mxu0 0.0
        %1424 = vmatprep.mubr.f32.mxu0 0.0
        %1425 = vmatmul.mubr.f32.gmra.mrb[0].mxu0 %v1349
        %v1426 = vpop.f32.mrb[0].mxu0
        %v1427 = vadd.f32 %v475, %v1426
        %v1428 = vpop.f32.mrb[0].mxu0
        %1429 = vmatprep.mubr.f32.mxu0 0.0
        %1430 = vmatmul.mubr.f32.gmra.mrb[0].mxu0 %v1352
        %v1431 = vpop.f32.mrb[0].mxu0
        %v1432 = vadd.f32 %v475, %v1431
        %v1433 = vpop.f32.mrb[0].mxu0
        %1434 = vmatprep.mubr.f32.mxu0 0.0
        %1435 = vmatmul.mubr.f32.gmra.mrb[0].mxu0 %v1355
        %v1436 = vpop.f32.mrb[0].mxu0
        %v1437 = vadd.f32 %v475, %v1436
        %v1438 = vpop.f32.mrb[0].mxu0
        %1439 = vmatprep.mubr.f32.mxu0 0.0
        %1440 = vmatmul.mubr.f32.gmra.mrb[0].mxu0 %v1358
        %v1441 = vpop.f32.mrb[0].mxu0
        %v1442 = vadd.f32 %v475, %v1441
        %v1443 = vpop.f32.mrb[0].mxu0
        %1444 = vdwg.mxu0
        %v1445 = vsel %vm264, %v1427, -inf
        %1446 = vmax.xlane.f32.xlu0 %v1445
        %v1447 = vpop.xlane.xlu0 %1446
        %v1448 = vsel %vm264, %v1432, -inf
        %1449 = vmax.xlane.f32.xlu0 %v1448
        %v1450 = vpop.xlane.xlu0 %1449
        %v1451 = vsel %vm264, %v1437, -inf
        %1452 = vmax.xlane.f32.xlu0 %v1451
        %v1453 = vpop.xlane.xlu0 %1452
        %v1454 = vsel %vm264, %v1442, -inf
        %1455 = vmax.xlane.f32.xlu0 %v1454
        %v1456 = vpop.xlane.xlu0 %1455
        %v1457 = vsub.f32 %v1427, %v1447
        %v1458 = vsub.f32 %v1432, %v1450
        %v1459 = vsub.f32 %v1437, %v1453
        %v1460 = vsub.f32 %v1442, %v1456
        %v1461 = vmul.f32 %v1457, 1.442695
        %v1462 = vpow.pop %v1461
        %v1463 = vmul.f32 %v1458, 1.442695
        %v1464 = vpow.pop %v1463
        %v1465 = vmul.f32 %v1459, 1.442695
        %v1466 = vpow.pop %v1465
        %v1467 = vmul.f32 %v1460, 1.442695
        %v1468 = vpow.pop %v1467
        %v1469 = vsel %vm264, %v1462, 0.0
        %1470 = vadd.xlane.f32.xlu0 %v1469
        %v1471 = vpop.xlane.xlu0 %1470
        %v1472 = vsel %vm264, %v1464, 0.0
        %1473 = vadd.xlane.f32.xlu0 %v1472
        %v1474 = vpop.xlane.xlu0 %1473
        %v1475 = vsel %vm264, %v1466, 0.0
        %1476 = vadd.xlane.f32.xlu0 %v1475
        %v1477 = vpop.xlane.xlu0 %1476
        %v1478 = vsel %vm264, %v1468, 0.0
        %1479 = vadd.xlane.f32.xlu0 %v1478
        %v1480 = vpop.xlane.xlu0 %1479
        %v1481 = vlog2.pop %v1471
        %v1482 = vmul.f32 %v1481, 0.6931472
        %v1483 = vlog2.pop %v1474
        %v1484 = vmul.f32 %v1483, 0.6931472
        %v1485 = vlog2.pop %v1477
        %v1486 = vmul.f32 %v1485, 0.6931472
        %v1487 = vlog2.pop %v1480
        %v1488 = vmul.f32 %v1487, 0.6931472
        %v1489 = vmul.f32 %v1462, %v1457
        %v1490 = vmul.f32 %v1464, %v1458
        %v1491 = vmul.f32 %v1466, %v1459
        %v1492 = vmul.f32 %v1468, %v1460
        %v1493 = vsel %vm264, %v1489, 0.0
        %1494 = vadd.xlane.f32.xlu0 %v1493
        %v1495 = vpop.xlane.xlu0 %1494
        %v1496 = vsel %vm264, %v1490, 0.0
        %1497 = vadd.xlane.f32.xlu0 %v1496
        %v1498 = vpop.xlane.xlu0 %1497
        %v1499 = vsel %vm264, %v1491, 0.0
        %1500 = vadd.xlane.f32.xlu0 %v1499
        %v1501 = vpop.xlane.xlu0 %1500
        %v1502 = vsel %vm264, %v1492, 0.0
        %1503 = vadd.xlane.f32.xlu0 %v1502
        %v1504 = vpop.xlane.xlu0 %1503
        %v1505 = vrcp.pop %v1471
        %v1506 = vmul.f32 %v1495, %v1505
        %v1507 = vrcp.pop %v1474
        %v1508 = vmul.f32 %v1498, %v1507
        %v1509 = vrcp.pop %v1477
        %v1510 = vmul.f32 %v1501, %v1509
        %v1511 = vrcp.pop %v1480
        %v1512 = vmul.f32 %v1504, %v1511
        %v1513 = vsub.f32 %v1482, %v1506
        %v1514 = vsub.f32 %v1484, %v1508
        %v1515 = vsub.f32 %v1486, %v1510
        %v1516 = vsub.f32 %v1488, %v1512
        %v1517 = vsub.f32 0.0, %v1482
        %v1518 = vsub.f32 0.0, %v1484
        %v1519 = vsub.f32 0.0, %v1486
        %v1520 = vsub.f32 0.0, %v1488
        %vm1521 = vcmp.ge.f32.partialorder %v1427, %v1447
        %vm1522 = vcmp.ge.f32.partialorder %v1432, %v1450
        %vm1523 = vcmp.ge.f32.partialorder %v1437, %v1453
        %vm1524 = vcmp.ge.f32.partialorder %v1442, %v1456
        %v1525 = vsel %vm1521, %v222, 16
        %v1526 = vsel %vm1522, %v222, 16
        %v1527 = vsel %vm1523, %v222, 16
        %v1528 = vsel %vm1524, %v222, 16
        %v1529 = vsel %vm264, %v1525, 2147483647
        %v1530 = vand.u32 %v1529, 65535
        %v1531 = vshra.s32 %v1529, 16
        %v1532 = vcvt.s32.f32 %v1530
        %v1533 = vcvt.s32.f32 %v1531
        %1534 = vmin.xlane.f32.xlu0 %v1533
        %v1535 = vpop.xlane.xlu0 %1534
        %vm1536 = vcmp.eq.f32.partialorder %v1533, %v1535
        %v1537 = vsel %vm1536, %v1532, inf
        %1538 = vmin.xlane.f32.xlu0 %v1537
        %v1539 = vpop.xlane.xlu0 %1538
        %v1540 = vcvt.f32.s32 %v1539
        %v1541 = vcvt.f32.s32 %v1535
        %v1542 = vshll.u32 %v1541, 16
        %v1543 = vadd.s32 %v1542, %v1540
        %v1544 = vsel %vm264, %v1526, 2147483647
        %v1545 = vand.u32 %v1544, 65535
        %v1546 = vshra.s32 %v1544, 16
        %v1547 = vcvt.s32.f32 %v1545
        %v1548 = vcvt.s32.f32 %v1546
        %1549 = vmin.xlane.f32.xlu0 %v1548
        %v1550 = vpop.xlane.xlu0 %1549
        %vm1551 = vcmp.eq.f32.partialorder %v1548, %v1550
        %v1552 = vsel %vm1551, %v1547, inf
        %1553 = vmin.xlane.f32.xlu0 %v1552
        %v1554 = vpop.xlane.xlu0 %1553
        %v1555 = vcvt.f32.s32 %v1554
        %v1556 = vcvt.f32.s32 %v1550
        %v1557 = vshll.u32 %v1556, 16
        %v1558 = vadd.s32 %v1557, %v1555
        %v1559 = vsel %vm264, %v1527, 2147483647
        %v1560 = vand.u32 %v1559, 65535
        %v1561 = vshra.s32 %v1559, 16
        %v1562 = vcvt.s32.f32 %v1560
        %v1563 = vcvt.s32.f32 %v1561
        %1564 = vmin.xlane.f32.xlu0 %v1563
        %v1565 = vpop.xlane.xlu0 %1564
        %vm1566 = vcmp.eq.f32.partialorder %v1563, %v1565
        %v1567 = vsel %vm1566, %v1562, inf
        %1568 = vmin.xlane.f32.xlu0 %v1567
        %v1569 = vpop.xlane.xlu0 %1568
        %v1570 = vcvt.f32.s32 %v1569
        %v1571 = vcvt.f32.s32 %v1565
        %v1572 = vshll.u32 %v1571, 16
        %v1573 = vadd.s32 %v1572, %v1570
        %v1574 = vsel %vm264, %v1528, 2147483647
        %v1575 = vand.u32 %v1574, 65535
        %v1576 = vshra.s32 %v1574, 16
        %v1577 = vcvt.s32.f32 %v1575
        %v1578 = vcvt.s32.f32 %v1576
        %1579 = vmin.xlane.f32.xlu0 %v1578
        %v1580 = vpop.xlane.xlu0 %1579
        %vm1581 = vcmp.eq.f32.partialorder %v1578, %v1580
        %v1582 = vsel %vm1581, %v1577, inf
        %1583 = vmin.xlane.f32.xlu0 %v1582
        %v1584 = vpop.xlane.xlu0 %1583
        %v1585 = vcvt.f32.s32 %v1584
        %v1586 = vcvt.f32.s32 %v1580
        %v1587 = vshll.u32 %v1586, 16
        %v1588 = vadd.s32 %v1587, %v1585
        %vm1589 = vcmp.eq.s32.totalorder %v222, %v1543
        %vm1590 = vcmp.eq.s32.totalorder %v222, %v1558
        %vm1591 = vcmp.eq.s32.totalorder %v222, %v1573
        %vm1592 = vcmp.eq.s32.totalorder %v222, %v1588
        %v1593 = vsel %vm1589, 1, 0
        %v1594 = vsel %vm1590, 1, 0
        %v1595 = vsel %vm1591, 1, 0
        %v1596 = vsel %vm1592, 1, 0
        %v1597 = vcvt.s32.f32 %v1593
        %v1598 = vcvt.s32.f32 %v1594
        %v1599 = vcvt.s32.f32 %v1595
        %v1600 = vcvt.s32.f32 %v1596
        %1601 = vrot.lane.b32.xlu0 %v1271, 16
        %v1602 = vpop.permute.xlu0 %1601
        %1603 = vrot.lane.b32.xlu0 %v1272, 16
        %v1604 = vpop.permute.xlu0 %1603
        %1605 = vrot.lane.b32.xlu0 %v1273, 16
        %v1606 = vpop.permute.xlu0 %1605
        %1607 = vrot.lane.b32.xlu0 %v1274, 16
        %v1608 = vpop.permute.xlu0 %1607
        %v1613 = vsel %vm264, %v1597, %v1602
        %v1614 = vsel %vm264, %v1598, %v1604
        %v1615 = vsel %vm264, %v1599, %v1606
        %v1616 = vsel %vm264, %v1600, %v1608
        %v1618 = vsel %vm750, %v1613, 0
        %v1621 = vsel %vm750, %v1614, 0
        %v1624 = vsel %vm750, %v1615, 0
        %v1627 = vsel %vm750, %v1616, 0
        %1629 = vmatprep.subr.mxu0 0.0
        %1630 = vmatpush1.msra.mxu0 %v225
        %1631 = vmatprep.subr.mxu0 0.0
        %1632 = vmatpush1.msra.mxu0 %v226
        %1633 = vmatprep.subr.mxu0 0.0
        %1634 = vmatpush1.msra.mxu0 %v227
        %1635 = vmatprep.subr.mxu0 0.0
        %1636 = vmatpush1.msra.mxu0 %v228
        %1637 = vmatprep.subr.mxu0 0.0
        %1638 = vmatpush1.msra.mxu0 %v229
        %1639 = vmatprep.subr.mxu0 0.0
        %1640 = vmatpush1.msra.mxu0 %v230
        %1641 = vmatprep.subr.mxu0 0.0
        %1642 = vmatpush1.msra.mxu0 %v231
        %1643 = vmatprep.subr.mxu0 0.0
        %1644 = vmatpush1.msra.mxu0 %v232
        %1645 = vmatprep.subr.mxu0 0.0
        %1646 = vmatpush1.msra.mxu0 %v233
        %1647 = vmatprep.subr.mxu0 0.0
        %1648 = vmatpush1.msra.mxu0 %v234
        %1649 = vmatprep.subr.mxu0 0.0
        %1650 = vmatpush1.msra.mxu0 0.0
        %1651 = vmatprep.subr.mxu0 0.0
        %1652 = vmatpush1.msra.mxu0 0.0
        %1653 = vmatprep.subr.mxu0 0.0
        %1654 = vmatpush1.msra.mxu0 0.0
        %1655 = vmatprep.subr.mxu0 0.0
        %1656 = vmatpush1.msra.mxu0 0.0
        %1657 = vmatprep.subr.mxu0 0.0
        %1658 = vmatpush1.msra.mxu0 0.0
        %1659 = vmatprep.subr.mxu0 0.0
        %1660 = vmatpush1.msra.mxu0 0.0
        %1661 = vmatprep.subr.mxu0 0.0
        %1662 = vmatpush1.msra.mxu0 0.0
        %1663 = vmatprep.subr.mxu0 0.0
        %1664 = vmatpush1.msra.mxu0 0.0
        %1665 = vmatprep.subr.mxu0 0.0
        %1666 = vmatpush1.msra.mxu0 0.0
        %1667 = vmatprep.subr.mxu0 0.0
        %1668 = vmatpush1.msra.mxu0 0.0
        %1669 = vmatprep.subr.mxu0 0.0
        %1670 = vmatpush1.msra.mxu0 0.0
        %1671 = vmatprep.subr.mxu0 0.0
        %1672 = vmatpush1.msra.mxu0 0.0
        %1673 = vmatprep.subr.mxu0 0.0
        %1674 = vmatpush1.msra.mxu0 0.0
        %1675 = vmatprep.subr.mxu0 0.0
        %1676 = vmatpush1.msra.mxu0 0.0
        %1677 = vmatprep.subr.mxu0 0.0
        %1678 = vmatpush1.msra.mxu0 0.0
        %1679 = vmatprep.subr.mxu0 0.0
        %1680 = vmatpush1.msra.mxu0 0.0
        %1681 = vmatprep.subr.mxu0 0.0
        %1682 = vmatpush1.msra.mxu0 0.0
        %1683 = vmatprep.subr.mxu0 0.0
        %1684 = vmatpush1.msra.mxu0 0.0
        %1685 = vmatprep.subr.mxu0 0.0
        %1686 = vmatpush1.msra.mxu0 0.0
        %1687 = vmatprep.subr.mxu0 0.0
        %1688 = vmatpush1.msra.mxu0 0.0
        %1689 = vmatprep.subr.mxu0 0.0
        %1690 = vmatpush1.msra.mxu0 0.0
        %1691 = vmatprep.subr.mxu0 0.0
        %1692 = vmatpush1.msra.mxu0 0.0
        %1693 = vmatprep.mubr.f32.mxu0 0.0
        %1694 = vmatmul.mubr.f32.gmra.mrb[0].mxu0 %v1618
        %v1695 = vpop.f32.mrb[0].mxu0
        %v1696 = vadd.f32 %v749, %v1695
        %v1697 = vpop.f32.mrb[0].mxu0
        %1698 = vmatprep.mubr.f32.mxu0 0.0
        %1699 = vmatmul.mubr.f32.gmra.mrb[0].mxu0 %v1621
        %v1700 = vpop.f32.mrb[0].mxu0
        %v1701 = vadd.f32 %v749, %v1700
        %v1702 = vpop.f32.mrb[0].mxu0
        %1703 = vmatprep.mubr.f32.mxu0 0.0
        %1704 = vmatmul.mubr.f32.gmra.mrb[0].mxu0 %v1624
        %v1705 = vpop.f32.mrb[0].mxu0
        %v1706 = vadd.f32 %v749, %v1705
        %v1707 = vpop.f32.mrb[0].mxu0
        %1708 = vmatprep.mubr.f32.mxu0 0.0
        %1709 = vmatmul.mubr.f32.gmra.mrb[0].mxu0 %v1627
        %v1710 = vpop.f32.mrb[0].mxu0
        %v1711 = vadd.f32 %v749, %v1710
        %v1712 = vpop.f32.mrb[0].mxu0
        %1713 = vdwg.mxu0
        %v1714 = vtanh.pop %v1696
        %v1715 = vtanh.pop %v1701
        %v1716 = vtanh.pop %v1706
        %v1717 = vtanh.pop %v1711
        %v1718 = vsub.f32 1.0, %v1331
        %v1719 = vsub.f32 1.0, %v1332
        %v1720 = vsub.f32 1.0, %v1333
        %v1721 = vsub.f32 1.0, %v1334
        %v1722 = vmul.f32 %v1513, %v1718
        %v1723 = vmul.f32 %v1514, %v1719
        %v1724 = vmul.f32 %v1515, %v1720
        %v1725 = vmul.f32 %v1516, %v1721
        %v1726 = vadd.f32 %v1283, %v1722
        %v1727 = vadd.f32 %v1284, %v1723
        %v1728 = vadd.f32 %v1285, %v1724
        %v1729 = vadd.f32 %v1286, %v1725
        %v1730 = vmul.f32 %v1517, %v1718
        %v1731 = vmul.f32 %v1518, %v1719
        %v1732 = vmul.f32 %v1519, %v1720
        %v1733 = vmul.f32 %v1520, %v1721
        %v1734 = vadd.f32 %v1291, %v1730
        %v1735 = vadd.f32 %v1292, %v1731
        %v1736 = vadd.f32 %v1293, %v1732
        %v1737 = vadd.f32 %v1294, %v1733
        %v1738 = vadd.f32 %v1295, %v1718
        %v1739 = vadd.f32 %v1296, %v1719
        %v1740 = vadd.f32 %v1297, %v1720
        %v1741 = vadd.f32 %v1298, %v1721
        %v1742 = vmul.f32 %v1718, %v1597
        %v1743 = vmul.f32 %v1719, %v1598
        %v1744 = vmul.f32 %v1720, %v1599
        %v1745 = vmul.f32 %v1721, %v1600
        %1747 = vset.pattern.permute.xlu0 0
        %1748 = vperm.xlu0 %1747, %v1742
        %v1749 = vpop.permute.xlu0 %1748
        %1752 = vset.pattern.permute.xlu0 0
        %1753 = vperm.xlu0 %1752, %v1743
        %v1754 = vpop.permute.xlu0 %1753
        %1757 = vset.pattern.permute.xlu0 0
        %1758 = vperm.xlu0 %1757, %v1744
        %v1759 = vpop.permute.xlu0 %1758
        %1762 = vset.pattern.permute.xlu0 0
        %1763 = vperm.xlu0 %1762, %v1745
        %v1764 = vpop.permute.xlu0 %1763
        %v1766 = vmul.f32 %v1749, %v1714
        %v1767 = vmul.f32 %v1754, %v1715
        %v1768 = vmul.f32 %v1759, %v1716
        %v1769 = vmul.f32 %v1764, %v1717
        %v1770 = vadd.f32 %v1327, %v1766
        %v1771 = vadd.f32 %v1328, %v1767
        %v1772 = vadd.f32 %v1329, %v1768
        %v1773 = vadd.f32 %v1330, %v1769
        %v1774 = vmax.f32 %v1331, %v1597
        %v1775 = vmax.f32 %v1332, %v1598
        %v1776 = vmax.f32 %v1333, %v1599
        %v1777 = vmax.f32 %v1334, %v1600
        %vm1778 = vcmp.eq.s32.totalorder %v222, 2
        %v1779 = vcvt.s32.f32 %v1543
        %v1780 = vcvt.s32.f32 %v1558
        %v1781 = vcvt.s32.f32 %v1573
        %v1782 = vcvt.s32.f32 %v1588
        %v1783 = vsel %vm1778, %v1779, %v1340
        %v1784 = vsel %vm1778, %v1780, %v1341
        %v1785 = vsel %vm1778, %v1781, %v1342
        %v1786 = vsel %vm1778, %v1782, %v1343
        %v1787 = vsel %vm1778, %v1513, %v1344
        %v1788 = vsel %vm1778, %v1514, %v1345
        %v1789 = vsel %vm1778, %v1515, %v1346
        %v1790 = vsel %vm1778, %v1516, %v1347
        %v1792 = vsel %vm476, %v1714, 0
        %v1795 = vsel %vm476, %v1715, 0
        %v1798 = vsel %vm476, %v1716, 0
        %v1801 = vsel %vm476, %v1717, 0
        %1803 = vmatprep.subr.mxu0 0.0
        %1804 = vmatpush1.msra.mxu0 %v235
        %1805 = vmatprep.subr.mxu0 0.0
        %1806 = vmatpush1.msra.mxu0 %v236
        %1807 = vmatprep.subr.mxu0 0.0
        %1808 = vmatpush1.msra.mxu0 %v237
        %1809 = vmatprep.subr.mxu0 0.0
        %1810 = vmatpush1.msra.mxu0 %v238
        %1811 = vmatprep.subr.mxu0 0.0
        %1812 = vmatpush1.msra.mxu0 %v239
        %1813 = vmatprep.subr.mxu0 0.0
        %1814 = vmatpush1.msra.mxu0 %v240
        %1815 = vmatprep.subr.mxu0 0.0
        %1816 = vmatpush1.msra.mxu0 %v241
        %1817 = vmatprep.subr.mxu0 0.0
        %1818 = vmatpush1.msra.mxu0 %v242
        %1819 = vmatprep.subr.mxu0 0.0
        %1820 = vmatpush1.msra.mxu0 0.0
        %1821 = vmatprep.subr.mxu0 0.0
        %1822 = vmatpush1.msra.mxu0 0.0
        %1823 = vmatprep.subr.mxu0 0.0
        %1824 = vmatpush1.msra.mxu0 0.0
        %1825 = vmatprep.subr.mxu0 0.0
        %1826 = vmatpush1.msra.mxu0 0.0
        %1827 = vmatprep.subr.mxu0 0.0
        %1828 = vmatpush1.msra.mxu0 0.0
        %1829 = vmatprep.subr.mxu0 0.0
        %1830 = vmatpush1.msra.mxu0 0.0
        %1831 = vmatprep.subr.mxu0 0.0
        %1832 = vmatpush1.msra.mxu0 0.0
        %1833 = vmatprep.subr.mxu0 0.0
        %1834 = vmatpush1.msra.mxu0 0.0
        %1835 = vmatprep.subr.mxu0 0.0
        %1836 = vmatpush1.msra.mxu0 0.0
        %1837 = vmatprep.subr.mxu0 0.0
        %1838 = vmatpush1.msra.mxu0 0.0
        %1839 = vmatprep.subr.mxu0 0.0
        %1840 = vmatpush1.msra.mxu0 0.0
        %1841 = vmatprep.subr.mxu0 0.0
        %1842 = vmatpush1.msra.mxu0 0.0
        %1843 = vmatprep.subr.mxu0 0.0
        %1844 = vmatpush1.msra.mxu0 0.0
        %1845 = vmatprep.subr.mxu0 0.0
        %1846 = vmatpush1.msra.mxu0 0.0
        %1847 = vmatprep.subr.mxu0 0.0
        %1848 = vmatpush1.msra.mxu0 0.0
        %1849 = vmatprep.subr.mxu0 0.0
        %1850 = vmatpush1.msra.mxu0 0.0
        %1851 = vmatprep.subr.mxu0 0.0
        %1852 = vmatpush1.msra.mxu0 0.0
        %1853 = vmatprep.subr.mxu0 0.0
        %1854 = vmatpush1.msra.mxu0 0.0
        %1855 = vmatprep.subr.mxu0 0.0
        %1856 = vmatpush1.msra.mxu0 0.0
        %1857 = vmatprep.subr.mxu0 0.0
        %1858 = vmatpush1.msra.mxu0 0.0
        %1859 = vmatprep.subr.mxu0 0.0
        %1860 = vmatpush1.msra.mxu0 0.0
        %1861 = vmatprep.subr.mxu0 0.0
        %1862 = vmatpush1.msra.mxu0 0.0
        %1863 = vmatprep.subr.mxu0 0.0
        %1864 = vmatpush1.msra.mxu0 0.0
        %1865 = vmatprep.subr.mxu0 0.0
        %1866 = vmatpush1.msra.mxu0 0.0
        %1867 = vmatprep.mubr.f32.mxu0 0.0
        %1868 = vmatmul.mubr.f32.gmra.mrb[0].mxu0 %v1792
        %v1869 = vpop.f32.mrb[0].mxu0
        %v1870 = vadd.f32 %v475, %v1869
        %v1871 = vpop.f32.mrb[0].mxu0
        %1872 = vmatprep.mubr.f32.mxu0 0.0
        %1873 = vmatmul.mubr.f32.gmra.mrb[0].mxu0 %v1795
        %v1874 = vpop.f32.mrb[0].mxu0
        %v1875 = vadd.f32 %v475, %v1874
        %v1876 = vpop.f32.mrb[0].mxu0
        %1877 = vmatprep.mubr.f32.mxu0 0.0
        %1878 = vmatmul.mubr.f32.gmra.mrb[0].mxu0 %v1798
        %v1879 = vpop.f32.mrb[0].mxu0
        %v1880 = vadd.f32 %v475, %v1879
        %v1881 = vpop.f32.mrb[0].mxu0
        %1882 = vmatprep.mubr.f32.mxu0 0.0
        %1883 = vmatmul.mubr.f32.gmra.mrb[0].mxu0 %v1801
        %v1884 = vpop.f32.mrb[0].mxu0
        %v1885 = vadd.f32 %v475, %v1884
        %v1886 = vpop.f32.mrb[0].mxu0
        %1887 = vdwg.mxu0
        %v1888 = vsel %vm264, %v1870, -inf
        %1889 = vmax.xlane.f32.xlu0 %v1888
        %v1890 = vpop.xlane.xlu0 %1889
        %v1891 = vsel %vm264, %v1875, -inf
        %1892 = vmax.xlane.f32.xlu0 %v1891
        %v1893 = vpop.xlane.xlu0 %1892
        %v1894 = vsel %vm264, %v1880, -inf
        %1895 = vmax.xlane.f32.xlu0 %v1894
        %v1896 = vpop.xlane.xlu0 %1895
        %v1897 = vsel %vm264, %v1885, -inf
        %1898 = vmax.xlane.f32.xlu0 %v1897
        %v1899 = vpop.xlane.xlu0 %1898
        %v1900 = vsub.f32 %v1870, %v1890
        %v1901 = vsub.f32 %v1875, %v1893
        %v1902 = vsub.f32 %v1880, %v1896
        %v1903 = vsub.f32 %v1885, %v1899
        %v1904 = vmul.f32 %v1900, 1.442695
        %v1905 = vpow.pop %v1904
        %v1906 = vmul.f32 %v1901, 1.442695
        %v1907 = vpow.pop %v1906
        %v1908 = vmul.f32 %v1902, 1.442695
        %v1909 = vpow.pop %v1908
        %v1910 = vmul.f32 %v1903, 1.442695
        %v1911 = vpow.pop %v1910
        %v1912 = vsel %vm264, %v1905, 0.0
        %1913 = vadd.xlane.f32.xlu0 %v1912
        %v1914 = vpop.xlane.xlu0 %1913
        %v1915 = vsel %vm264, %v1907, 0.0
        %1916 = vadd.xlane.f32.xlu0 %v1915
        %v1917 = vpop.xlane.xlu0 %1916
        %v1918 = vsel %vm264, %v1909, 0.0
        %1919 = vadd.xlane.f32.xlu0 %v1918
        %v1920 = vpop.xlane.xlu0 %1919
        %v1921 = vsel %vm264, %v1911, 0.0
        %1922 = vadd.xlane.f32.xlu0 %v1921
        %v1923 = vpop.xlane.xlu0 %1922
        %v1924 = vlog2.pop %v1914
        %v1925 = vmul.f32 %v1924, 0.6931472
        %v1926 = vlog2.pop %v1917
        %v1927 = vmul.f32 %v1926, 0.6931472
        %v1928 = vlog2.pop %v1920
        %v1929 = vmul.f32 %v1928, 0.6931472
        %v1930 = vlog2.pop %v1923
        %v1931 = vmul.f32 %v1930, 0.6931472
        %v1932 = vmul.f32 %v1905, %v1900
        %v1933 = vmul.f32 %v1907, %v1901
        %v1934 = vmul.f32 %v1909, %v1902
        %v1935 = vmul.f32 %v1911, %v1903
        %v1936 = vsel %vm264, %v1932, 0.0
        %1937 = vadd.xlane.f32.xlu0 %v1936
        %v1938 = vpop.xlane.xlu0 %1937
        %v1939 = vsel %vm264, %v1933, 0.0
        %1940 = vadd.xlane.f32.xlu0 %v1939
        %v1941 = vpop.xlane.xlu0 %1940
        %v1942 = vsel %vm264, %v1934, 0.0
        %1943 = vadd.xlane.f32.xlu0 %v1942
        %v1944 = vpop.xlane.xlu0 %1943
        %v1945 = vsel %vm264, %v1935, 0.0
        %1946 = vadd.xlane.f32.xlu0 %v1945
        %v1947 = vpop.xlane.xlu0 %1946
        %v1948 = vrcp.pop %v1914
        %v1949 = vmul.f32 %v1938, %v1948
        %v1950 = vrcp.pop %v1917
        %v1951 = vmul.f32 %v1941, %v1950
        %v1952 = vrcp.pop %v1920
        %v1953 = vmul.f32 %v1944, %v1952
        %v1954 = vrcp.pop %v1923
        %v1955 = vmul.f32 %v1947, %v1954
        %v1956 = vsub.f32 %v1925, %v1949
        %v1957 = vsub.f32 %v1927, %v1951
        %v1958 = vsub.f32 %v1929, %v1953
        %v1959 = vsub.f32 %v1931, %v1955
        %v1960 = vsub.f32 0.0, %v1925
        %v1961 = vsub.f32 0.0, %v1927
        %v1962 = vsub.f32 0.0, %v1929
        %v1963 = vsub.f32 0.0, %v1931
        %vm1964 = vcmp.ge.f32.partialorder %v1870, %v1890
        %vm1965 = vcmp.ge.f32.partialorder %v1875, %v1893
        %vm1966 = vcmp.ge.f32.partialorder %v1880, %v1896
        %vm1967 = vcmp.ge.f32.partialorder %v1885, %v1899
        %v1968 = vsel %vm1964, %v222, 16
        %v1969 = vsel %vm1965, %v222, 16
        %v1970 = vsel %vm1966, %v222, 16
        %v1971 = vsel %vm1967, %v222, 16
        %v1972 = vsel %vm264, %v1968, 2147483647
        %v1973 = vand.u32 %v1972, 65535
        %v1974 = vshra.s32 %v1972, 16
        %v1975 = vcvt.s32.f32 %v1973
        %v1976 = vcvt.s32.f32 %v1974
        %1977 = vmin.xlane.f32.xlu0 %v1976
        %v1978 = vpop.xlane.xlu0 %1977
        %vm1979 = vcmp.eq.f32.partialorder %v1976, %v1978
        %v1980 = vsel %vm1979, %v1975, inf
        %1981 = vmin.xlane.f32.xlu0 %v1980
        %v1982 = vpop.xlane.xlu0 %1981
        %v1983 = vcvt.f32.s32 %v1982
        %v1984 = vcvt.f32.s32 %v1978
        %v1985 = vshll.u32 %v1984, 16
        %v1986 = vadd.s32 %v1985, %v1983
        %v1987 = vsel %vm264, %v1969, 2147483647
        %v1988 = vand.u32 %v1987, 65535
        %v1989 = vshra.s32 %v1987, 16
        %v1990 = vcvt.s32.f32 %v1988
        %v1991 = vcvt.s32.f32 %v1989
        %1992 = vmin.xlane.f32.xlu0 %v1991
        %v1993 = vpop.xlane.xlu0 %1992
        %vm1994 = vcmp.eq.f32.partialorder %v1991, %v1993
        %v1995 = vsel %vm1994, %v1990, inf
        %1996 = vmin.xlane.f32.xlu0 %v1995
        %v1997 = vpop.xlane.xlu0 %1996
        %v1998 = vcvt.f32.s32 %v1997
        %v1999 = vcvt.f32.s32 %v1993
        %v2000 = vshll.u32 %v1999, 16
        %v2001 = vadd.s32 %v2000, %v1998
        %v2002 = vsel %vm264, %v1970, 2147483647
        %v2003 = vand.u32 %v2002, 65535
        %v2004 = vshra.s32 %v2002, 16
        %v2005 = vcvt.s32.f32 %v2003
        %v2006 = vcvt.s32.f32 %v2004
        %2007 = vmin.xlane.f32.xlu0 %v2006
        %v2008 = vpop.xlane.xlu0 %2007
        %vm2009 = vcmp.eq.f32.partialorder %v2006, %v2008
        %v2010 = vsel %vm2009, %v2005, inf
        %2011 = vmin.xlane.f32.xlu0 %v2010
        %v2012 = vpop.xlane.xlu0 %2011
        %v2013 = vcvt.f32.s32 %v2012
        %v2014 = vcvt.f32.s32 %v2008
        %v2015 = vshll.u32 %v2014, 16
        %v2016 = vadd.s32 %v2015, %v2013
        %v2017 = vsel %vm264, %v1971, 2147483647
        %v2018 = vand.u32 %v2017, 65535
        %v2019 = vshra.s32 %v2017, 16
        %v2020 = vcvt.s32.f32 %v2018
        %v2021 = vcvt.s32.f32 %v2019
        %2022 = vmin.xlane.f32.xlu0 %v2021
        %v2023 = vpop.xlane.xlu0 %2022
        %vm2024 = vcmp.eq.f32.partialorder %v2021, %v2023
        %v2025 = vsel %vm2024, %v2020, inf
        %2026 = vmin.xlane.f32.xlu0 %v2025
        %v2027 = vpop.xlane.xlu0 %2026
        %v2028 = vcvt.f32.s32 %v2027
        %v2029 = vcvt.f32.s32 %v2023
        %v2030 = vshll.u32 %v2029, 16
        %v2031 = vadd.s32 %v2030, %v2028
        %vm2032 = vcmp.eq.s32.totalorder %v222, %v1986
        %vm2033 = vcmp.eq.s32.totalorder %v222, %v2001
        %vm2034 = vcmp.eq.s32.totalorder %v222, %v2016
        %vm2035 = vcmp.eq.s32.totalorder %v222, %v2031
        %v2036 = vsel %vm2032, 1, 0
        %v2037 = vsel %vm2033, 1, 0
        %v2038 = vsel %vm2034, 1, 0
        %v2039 = vsel %vm2035, 1, 0
        %v2040 = vcvt.s32.f32 %v2036
        %v2041 = vcvt.s32.f32 %v2037
        %v2042 = vcvt.s32.f32 %v2038
        %v2043 = vcvt.s32.f32 %v2039
        %2044 = vrot.lane.b32.xlu0 %v1714, 16
        %v2045 = vpop.permute.xlu0 %2044
        %2046 = vrot.lane.b32.xlu0 %v1715, 16
        %v2047 = vpop.permute.xlu0 %2046
        %2048 = vrot.lane.b32.xlu0 %v1716, 16
        %v2049 = vpop.permute.xlu0 %2048
        %2050 = vrot.lane.b32.xlu0 %v1717, 16
        %v2051 = vpop.permute.xlu0 %2050
        %v2056 = vsel %vm264, %v2040, %v2045
        %v2057 = vsel %vm264, %v2041, %v2047
        %v2058 = vsel %vm264, %v2042, %v2049
        %v2059 = vsel %vm264, %v2043, %v2051
        %v2061 = vsel %vm750, %v2056, 0
        %v2064 = vsel %vm750, %v2057, 0
        %v2067 = vsel %vm750, %v2058, 0
        %v2070 = vsel %vm750, %v2059, 0
        %2072 = vmatprep.subr.mxu0 0.0
        %2073 = vmatpush1.msra.mxu0 %v225
        %2074 = vmatprep.subr.mxu0 0.0
        %2075 = vmatpush1.msra.mxu0 %v226
        %2076 = vmatprep.subr.mxu0 0.0
        %2077 = vmatpush1.msra.mxu0 %v227
        %2078 = vmatprep.subr.mxu0 0.0
        %2079 = vmatpush1.msra.mxu0 %v228
        %2080 = vmatprep.subr.mxu0 0.0
        %2081 = vmatpush1.msra.mxu0 %v229
        %2082 = vmatprep.subr.mxu0 0.0
        %2083 = vmatpush1.msra.mxu0 %v230
        %2084 = vmatprep.subr.mxu0 0.0
        %2085 = vmatpush1.msra.mxu0 %v231
        %2086 = vmatprep.subr.mxu0 0.0
        %2087 = vmatpush1.msra.mxu0 %v232
        %2088 = vmatprep.subr.mxu0 0.0
        %2089 = vmatpush1.msra.mxu0 %v233
        %2090 = vmatprep.subr.mxu0 0.0
        %2091 = vmatpush1.msra.mxu0 %v234
        %2092 = vmatprep.subr.mxu0 0.0
        %2093 = vmatpush1.msra.mxu0 0.0
        %2094 = vmatprep.subr.mxu0 0.0
        %2095 = vmatpush1.msra.mxu0 0.0
        %2096 = vmatprep.subr.mxu0 0.0
        %2097 = vmatpush1.msra.mxu0 0.0
        %2098 = vmatprep.subr.mxu0 0.0
        %2099 = vmatpush1.msra.mxu0 0.0
        %2100 = vmatprep.subr.mxu0 0.0
        %2101 = vmatpush1.msra.mxu0 0.0
        %2102 = vmatprep.subr.mxu0 0.0
        %2103 = vmatpush1.msra.mxu0 0.0
        %2104 = vmatprep.subr.mxu0 0.0
        %2105 = vmatpush1.msra.mxu0 0.0
        %2106 = vmatprep.subr.mxu0 0.0
        %2107 = vmatpush1.msra.mxu0 0.0
        %2108 = vmatprep.subr.mxu0 0.0
        %2109 = vmatpush1.msra.mxu0 0.0
        %2110 = vmatprep.subr.mxu0 0.0
        %2111 = vmatpush1.msra.mxu0 0.0
        %2112 = vmatprep.subr.mxu0 0.0
        %2113 = vmatpush1.msra.mxu0 0.0
        %2114 = vmatprep.subr.mxu0 0.0
        %2115 = vmatpush1.msra.mxu0 0.0
        %2116 = vmatprep.subr.mxu0 0.0
        %2117 = vmatpush1.msra.mxu0 0.0
        %2118 = vmatprep.subr.mxu0 0.0
        %2119 = vmatpush1.msra.mxu0 0.0
        %2120 = vmatprep.subr.mxu0 0.0
        %2121 = vmatpush1.msra.mxu0 0.0
        %2122 = vmatprep.subr.mxu0 0.0
        %2123 = vmatpush1.msra.mxu0 0.0
        %2124 = vmatprep.subr.mxu0 0.0
        %2125 = vmatpush1.msra.mxu0 0.0
        %2126 = vmatprep.subr.mxu0 0.0
        %2127 = vmatpush1.msra.mxu0 0.0
        %2128 = vmatprep.subr.mxu0 0.0
        %2129 = vmatpush1.msra.mxu0 0.0
        %2130 = vmatprep.subr.mxu0 0.0
        %2131 = vmatpush1.msra.mxu0 0.0
        %2132 = vmatprep.subr.mxu0 0.0
        %2133 = vmatpush1.msra.mxu0 0.0
        %2134 = vmatprep.subr.mxu0 0.0
        %2135 = vmatpush1.msra.mxu0 0.0
        %2136 = vmatprep.mubr.f32.mxu0 0.0
        %2137 = vmatmul.mubr.f32.gmra.mrb[0].mxu0 %v2061
        %v2138 = vpop.f32.mrb[0].mxu0
        %v2139 = vadd.f32 %v749, %v2138
        %v2140 = vpop.f32.mrb[0].mxu0
        %2141 = vmatprep.mubr.f32.mxu0 0.0
        %2142 = vmatmul.mubr.f32.gmra.mrb[0].mxu0 %v2064
        %v2143 = vpop.f32.mrb[0].mxu0
        %v2144 = vadd.f32 %v749, %v2143
        %v2145 = vpop.f32.mrb[0].mxu0
        %2146 = vmatprep.mubr.f32.mxu0 0.0
        %2147 = vmatmul.mubr.f32.gmra.mrb[0].mxu0 %v2067
        %v2148 = vpop.f32.mrb[0].mxu0
        %v2149 = vadd.f32 %v749, %v2148
        %v2150 = vpop.f32.mrb[0].mxu0
        %2151 = vmatprep.mubr.f32.mxu0 0.0
        %2152 = vmatmul.mubr.f32.gmra.mrb[0].mxu0 %v2070
        %v2153 = vpop.f32.mrb[0].mxu0
        %v2154 = vadd.f32 %v749, %v2153
        %v2155 = vpop.f32.mrb[0].mxu0
        %2156 = vdwg.mxu0
        %v2157 = vtanh.pop %v2139
        %v2158 = vtanh.pop %v2144
        %v2159 = vtanh.pop %v2149
        %v2160 = vtanh.pop %v2154
        %v2161 = vsub.f32 1.0, %v1774
        %v2162 = vsub.f32 1.0, %v1775
        %v2163 = vsub.f32 1.0, %v1776
        %v2164 = vsub.f32 1.0, %v1777
        %v2165 = vmul.f32 %v1956, %v2161
        %v2166 = vmul.f32 %v1957, %v2162
        %v2167 = vmul.f32 %v1958, %v2163
        %v2168 = vmul.f32 %v1959, %v2164
        %v2169 = vadd.f32 %v1726, %v2165
        %v2170 = vadd.f32 %v1727, %v2166
        %v2171 = vadd.f32 %v1728, %v2167
        %v2172 = vadd.f32 %v1729, %v2168
        %v2173 = vmul.f32 %v1960, %v2161
        %v2174 = vmul.f32 %v1961, %v2162
        %v2175 = vmul.f32 %v1962, %v2163
        %v2176 = vmul.f32 %v1963, %v2164
        %v2177 = vadd.f32 %v1734, %v2173
        %v2178 = vadd.f32 %v1735, %v2174
        %v2179 = vadd.f32 %v1736, %v2175
        %v2180 = vadd.f32 %v1737, %v2176
        %v2181 = vadd.f32 %v1738, %v2161
        %v2182 = vadd.f32 %v1739, %v2162
        %v2183 = vadd.f32 %v1740, %v2163
        %v2184 = vadd.f32 %v1741, %v2164
        %v2185 = vmul.f32 %v2161, %v2040
        %v2186 = vmul.f32 %v2162, %v2041
        %v2187 = vmul.f32 %v2163, %v2042
        %v2188 = vmul.f32 %v2164, %v2043
        %2190 = vset.pattern.permute.xlu0 0
        %2191 = vperm.xlu0 %2190, %v2185
        %v2192 = vpop.permute.xlu0 %2191
        %2195 = vset.pattern.permute.xlu0 0
        %2196 = vperm.xlu0 %2195, %v2186
        %v2197 = vpop.permute.xlu0 %2196
        %2200 = vset.pattern.permute.xlu0 0
        %2201 = vperm.xlu0 %2200, %v2187
        %v2202 = vpop.permute.xlu0 %2201
        %2205 = vset.pattern.permute.xlu0 0
        %2206 = vperm.xlu0 %2205, %v2188
        %v2207 = vpop.permute.xlu0 %2206
        %v2209 = vmul.f32 %v2192, %v2157
        %v2210 = vmul.f32 %v2197, %v2158
        %v2211 = vmul.f32 %v2202, %v2159
        %v2212 = vmul.f32 %v2207, %v2160
        %v2213 = vadd.f32 %v1770, %v2209
        %v2214 = vadd.f32 %v1771, %v2210
        %v2215 = vadd.f32 %v1772, %v2211
        %v2216 = vadd.f32 %v1773, %v2212
        %v2217 = vmax.f32 %v1774, %v2040
        %v2218 = vmax.f32 %v1775, %v2041
        %v2219 = vmax.f32 %v1776, %v2042
        %v2220 = vmax.f32 %v1777, %v2043
        %vm2221 = vcmp.eq.s32.totalorder %v222, 3
        %v2222 = vcvt.s32.f32 %v1986
        %v2223 = vcvt.s32.f32 %v2001
        %v2224 = vcvt.s32.f32 %v2016
        %v2225 = vcvt.s32.f32 %v2031
        %v2226 = vsel %vm2221, %v2222, %v1783
        %v2227 = vsel %vm2221, %v2223, %v1784
        %v2228 = vsel %vm2221, %v2224, %v1785
        %v2229 = vsel %vm2221, %v2225, %v1786
        %v2230 = vsel %vm2221, %v1956, %v1787
        %v2231 = vsel %vm2221, %v1957, %v1788
        %v2232 = vsel %vm2221, %v1958, %v1789
        %v2233 = vsel %vm2221, %v1959, %v1790
        %v2235 = vsel %vm476, %v2157, 0
        %v2238 = vsel %vm476, %v2158, 0
        %v2241 = vsel %vm476, %v2159, 0
        %v2244 = vsel %vm476, %v2160, 0
        %2246 = vmatprep.subr.mxu0 0.0
        %2247 = vmatpush1.msra.mxu0 %v235
        %2248 = vmatprep.subr.mxu0 0.0
        %2249 = vmatpush1.msra.mxu0 %v236
        %2250 = vmatprep.subr.mxu0 0.0
        %2251 = vmatpush1.msra.mxu0 %v237
        %2252 = vmatprep.subr.mxu0 0.0
        %2253 = vmatpush1.msra.mxu0 %v238
        %2254 = vmatprep.subr.mxu0 0.0
        %2255 = vmatpush1.msra.mxu0 %v239
        %2256 = vmatprep.subr.mxu0 0.0
        %2257 = vmatpush1.msra.mxu0 %v240
        %2258 = vmatprep.subr.mxu0 0.0
        %2259 = vmatpush1.msra.mxu0 %v241
        %2260 = vmatprep.subr.mxu0 0.0
        %2261 = vmatpush1.msra.mxu0 %v242
        %2262 = vmatprep.subr.mxu0 0.0
        %2263 = vmatpush1.msra.mxu0 0.0
        %2264 = vmatprep.subr.mxu0 0.0
        %2265 = vmatpush1.msra.mxu0 0.0
        %2266 = vmatprep.subr.mxu0 0.0
        %2267 = vmatpush1.msra.mxu0 0.0
        %2268 = vmatprep.subr.mxu0 0.0
        %2269 = vmatpush1.msra.mxu0 0.0
        %2270 = vmatprep.subr.mxu0 0.0
        %2271 = vmatpush1.msra.mxu0 0.0
        %2272 = vmatprep.subr.mxu0 0.0
        %2273 = vmatpush1.msra.mxu0 0.0
        %2274 = vmatprep.subr.mxu0 0.0
        %2275 = vmatpush1.msra.mxu0 0.0
        %2276 = vmatprep.subr.mxu0 0.0
        %2277 = vmatpush1.msra.mxu0 0.0
        %2278 = vmatprep.subr.mxu0 0.0
        %2279 = vmatpush1.msra.mxu0 0.0
        %2280 = vmatprep.subr.mxu0 0.0
        %2281 = vmatpush1.msra.mxu0 0.0
        %2282 = vmatprep.subr.mxu0 0.0
        %2283 = vmatpush1.msra.mxu0 0.0
        %2284 = vmatprep.subr.mxu0 0.0
        %2285 = vmatpush1.msra.mxu0 0.0
        %2286 = vmatprep.subr.mxu0 0.0
        %2287 = vmatpush1.msra.mxu0 0.0
        %2288 = vmatprep.subr.mxu0 0.0
        %2289 = vmatpush1.msra.mxu0 0.0
        %2290 = vmatprep.subr.mxu0 0.0
        %2291 = vmatpush1.msra.mxu0 0.0
        %2292 = vmatprep.subr.mxu0 0.0
        %2293 = vmatpush1.msra.mxu0 0.0
        %2294 = vmatprep.subr.mxu0 0.0
        %2295 = vmatpush1.msra.mxu0 0.0
        %2296 = vmatprep.subr.mxu0 0.0
        %2297 = vmatpush1.msra.mxu0 0.0
        %2298 = vmatprep.subr.mxu0 0.0
        %2299 = vmatpush1.msra.mxu0 0.0
        %2300 = vmatprep.subr.mxu0 0.0
        %2301 = vmatpush1.msra.mxu0 0.0
        %2302 = vmatprep.subr.mxu0 0.0
        %2303 = vmatpush1.msra.mxu0 0.0
        %2304 = vmatprep.subr.mxu0 0.0
        %2305 = vmatpush1.msra.mxu0 0.0
        %2306 = vmatprep.subr.mxu0 0.0
        %2307 = vmatpush1.msra.mxu0 0.0
        %2308 = vmatprep.subr.mxu0 0.0
        %2309 = vmatpush1.msra.mxu0 0.0
        %2310 = vmatprep.mubr.f32.mxu0 0.0
        %2311 = vmatmul.mubr.f32.gmra.mrb[0].mxu0 %v2235
        %v2312 = vpop.f32.mrb[0].mxu0
        %v2313 = vadd.f32 %v475, %v2312
        %v2314 = vpop.f32.mrb[0].mxu0
        %2315 = vmatprep.mubr.f32.mxu0 0.0
        %2316 = vmatmul.mubr.f32.gmra.mrb[0].mxu0 %v2238
        %v2317 = vpop.f32.mrb[0].mxu0
        %v2318 = vadd.f32 %v475, %v2317
        %v2319 = vpop.f32.mrb[0].mxu0
        %2320 = vmatprep.mubr.f32.mxu0 0.0
        %2321 = vmatmul.mubr.f32.gmra.mrb[0].mxu0 %v2241
        %v2322 = vpop.f32.mrb[0].mxu0
        %v2323 = vadd.f32 %v475, %v2322
        %v2324 = vpop.f32.mrb[0].mxu0
        %2325 = vmatprep.mubr.f32.mxu0 0.0
        %2326 = vmatmul.mubr.f32.gmra.mrb[0].mxu0 %v2244
        %v2327 = vpop.f32.mrb[0].mxu0
        %v2328 = vadd.f32 %v475, %v2327
        %v2329 = vpop.f32.mrb[0].mxu0
        %2330 = vdwg.mxu0
        %v2331 = vsel %vm264, %v2313, -inf
        %2332 = vmax.xlane.f32.xlu0 %v2331
        %v2333 = vpop.xlane.xlu0 %2332
        %v2334 = vsel %vm264, %v2318, -inf
        %2335 = vmax.xlane.f32.xlu0 %v2334
        %v2336 = vpop.xlane.xlu0 %2335
        %v2337 = vsel %vm264, %v2323, -inf
        %2338 = vmax.xlane.f32.xlu0 %v2337
        %v2339 = vpop.xlane.xlu0 %2338
        %v2340 = vsel %vm264, %v2328, -inf
        %2341 = vmax.xlane.f32.xlu0 %v2340
        %v2342 = vpop.xlane.xlu0 %2341
        %v2343 = vsub.f32 %v2313, %v2333
        %v2344 = vsub.f32 %v2318, %v2336
        %v2345 = vsub.f32 %v2323, %v2339
        %v2346 = vsub.f32 %v2328, %v2342
        %v2347 = vmul.f32 %v2343, 1.442695
        %v2348 = vpow.pop %v2347
        %v2349 = vmul.f32 %v2344, 1.442695
        %v2350 = vpow.pop %v2349
        %v2351 = vmul.f32 %v2345, 1.442695
        %v2352 = vpow.pop %v2351
        %v2353 = vmul.f32 %v2346, 1.442695
        %v2354 = vpow.pop %v2353
        %v2355 = vsel %vm264, %v2348, 0.0
        %2356 = vadd.xlane.f32.xlu0 %v2355
        %v2357 = vpop.xlane.xlu0 %2356
        %v2358 = vsel %vm264, %v2350, 0.0
        %2359 = vadd.xlane.f32.xlu0 %v2358
        %v2360 = vpop.xlane.xlu0 %2359
        %v2361 = vsel %vm264, %v2352, 0.0
        %2362 = vadd.xlane.f32.xlu0 %v2361
        %v2363 = vpop.xlane.xlu0 %2362
        %v2364 = vsel %vm264, %v2354, 0.0
        %2365 = vadd.xlane.f32.xlu0 %v2364
        %v2366 = vpop.xlane.xlu0 %2365
        %v2367 = vlog2.pop %v2357
        %v2368 = vmul.f32 %v2367, 0.6931472
        %v2369 = vlog2.pop %v2360
        %v2370 = vmul.f32 %v2369, 0.6931472
        %v2371 = vlog2.pop %v2363
        %v2372 = vmul.f32 %v2371, 0.6931472
        %v2373 = vlog2.pop %v2366
        %v2374 = vmul.f32 %v2373, 0.6931472
        %v2375 = vmul.f32 %v2348, %v2343
        %v2376 = vmul.f32 %v2350, %v2344
        %v2377 = vmul.f32 %v2352, %v2345
        %v2378 = vmul.f32 %v2354, %v2346
        %v2379 = vsel %vm264, %v2375, 0.0
        %2380 = vadd.xlane.f32.xlu0 %v2379
        %v2381 = vpop.xlane.xlu0 %2380
        %v2382 = vsel %vm264, %v2376, 0.0
        %2383 = vadd.xlane.f32.xlu0 %v2382
        %v2384 = vpop.xlane.xlu0 %2383
        %v2385 = vsel %vm264, %v2377, 0.0
        %2386 = vadd.xlane.f32.xlu0 %v2385
        %v2387 = vpop.xlane.xlu0 %2386
        %v2388 = vsel %vm264, %v2378, 0.0
        %2389 = vadd.xlane.f32.xlu0 %v2388
        %v2390 = vpop.xlane.xlu0 %2389
        %v2391 = vrcp.pop %v2357
        %v2392 = vmul.f32 %v2381, %v2391
        %v2393 = vrcp.pop %v2360
        %v2394 = vmul.f32 %v2384, %v2393
        %v2395 = vrcp.pop %v2363
        %v2396 = vmul.f32 %v2387, %v2395
        %v2397 = vrcp.pop %v2366
        %v2398 = vmul.f32 %v2390, %v2397
        %v2399 = vsub.f32 %v2368, %v2392
        %v2400 = vsub.f32 %v2370, %v2394
        %v2401 = vsub.f32 %v2372, %v2396
        %v2402 = vsub.f32 %v2374, %v2398
        %v2403 = vsub.f32 0.0, %v2368
        %v2404 = vsub.f32 0.0, %v2370
        %v2405 = vsub.f32 0.0, %v2372
        %v2406 = vsub.f32 0.0, %v2374
        %vm2407 = vcmp.ge.f32.partialorder %v2313, %v2333
        %vm2408 = vcmp.ge.f32.partialorder %v2318, %v2336
        %vm2409 = vcmp.ge.f32.partialorder %v2323, %v2339
        %vm2410 = vcmp.ge.f32.partialorder %v2328, %v2342
        %v2411 = vsel %vm2407, %v222, 16
        %v2412 = vsel %vm2408, %v222, 16
        %v2413 = vsel %vm2409, %v222, 16
        %v2414 = vsel %vm2410, %v222, 16
        %v2415 = vsel %vm264, %v2411, 2147483647
        %v2416 = vand.u32 %v2415, 65535
        %v2417 = vshra.s32 %v2415, 16
        %v2418 = vcvt.s32.f32 %v2416
        %v2419 = vcvt.s32.f32 %v2417
        %2420 = vmin.xlane.f32.xlu0 %v2419
        %v2421 = vpop.xlane.xlu0 %2420
        %vm2422 = vcmp.eq.f32.partialorder %v2419, %v2421
        %v2423 = vsel %vm2422, %v2418, inf
        %2424 = vmin.xlane.f32.xlu0 %v2423
        %v2425 = vpop.xlane.xlu0 %2424
        %v2426 = vcvt.f32.s32 %v2425
        %v2427 = vcvt.f32.s32 %v2421
        %v2428 = vshll.u32 %v2427, 16
        %v2429 = vadd.s32 %v2428, %v2426
        %v2430 = vsel %vm264, %v2412, 2147483647
        %v2431 = vand.u32 %v2430, 65535
        %v2432 = vshra.s32 %v2430, 16
        %v2433 = vcvt.s32.f32 %v2431
        %v2434 = vcvt.s32.f32 %v2432
        %2435 = vmin.xlane.f32.xlu0 %v2434
        %v2436 = vpop.xlane.xlu0 %2435
        %vm2437 = vcmp.eq.f32.partialorder %v2434, %v2436
        %v2438 = vsel %vm2437, %v2433, inf
        %2439 = vmin.xlane.f32.xlu0 %v2438
        %v2440 = vpop.xlane.xlu0 %2439
        %v2441 = vcvt.f32.s32 %v2440
        %v2442 = vcvt.f32.s32 %v2436
        %v2443 = vshll.u32 %v2442, 16
        %v2444 = vadd.s32 %v2443, %v2441
        %v2445 = vsel %vm264, %v2413, 2147483647
        %v2446 = vand.u32 %v2445, 65535
        %v2447 = vshra.s32 %v2445, 16
        %v2448 = vcvt.s32.f32 %v2446
        %v2449 = vcvt.s32.f32 %v2447
        %2450 = vmin.xlane.f32.xlu0 %v2449
        %v2451 = vpop.xlane.xlu0 %2450
        %vm2452 = vcmp.eq.f32.partialorder %v2449, %v2451
        %v2453 = vsel %vm2452, %v2448, inf
        %2454 = vmin.xlane.f32.xlu0 %v2453
        %v2455 = vpop.xlane.xlu0 %2454
        %v2456 = vcvt.f32.s32 %v2455
        %v2457 = vcvt.f32.s32 %v2451
        %v2458 = vshll.u32 %v2457, 16
        %v2459 = vadd.s32 %v2458, %v2456
        %v2460 = vsel %vm264, %v2414, 2147483647
        %v2461 = vand.u32 %v2460, 65535
        %v2462 = vshra.s32 %v2460, 16
        %v2463 = vcvt.s32.f32 %v2461
        %v2464 = vcvt.s32.f32 %v2462
        %2465 = vmin.xlane.f32.xlu0 %v2464
        %v2466 = vpop.xlane.xlu0 %2465
        %vm2467 = vcmp.eq.f32.partialorder %v2464, %v2466
        %v2468 = vsel %vm2467, %v2463, inf
        %2469 = vmin.xlane.f32.xlu0 %v2468
        %v2470 = vpop.xlane.xlu0 %2469
        %v2471 = vcvt.f32.s32 %v2470
        %v2472 = vcvt.f32.s32 %v2466
        %v2473 = vshll.u32 %v2472, 16
        %v2474 = vadd.s32 %v2473, %v2471
        %vm2475 = vcmp.eq.s32.totalorder %v222, %v2429
        %vm2476 = vcmp.eq.s32.totalorder %v222, %v2444
        %vm2477 = vcmp.eq.s32.totalorder %v222, %v2459
        %vm2478 = vcmp.eq.s32.totalorder %v222, %v2474
        %v2479 = vsel %vm2475, 1, 0
        %v2480 = vsel %vm2476, 1, 0
        %v2481 = vsel %vm2477, 1, 0
        %v2482 = vsel %vm2478, 1, 0
        %v2483 = vcvt.s32.f32 %v2479
        %v2484 = vcvt.s32.f32 %v2480
        %v2485 = vcvt.s32.f32 %v2481
        %v2486 = vcvt.s32.f32 %v2482
        %2487 = vrot.lane.b32.xlu0 %v2157, 16
        %v2488 = vpop.permute.xlu0 %2487
        %2489 = vrot.lane.b32.xlu0 %v2158, 16
        %v2490 = vpop.permute.xlu0 %2489
        %2491 = vrot.lane.b32.xlu0 %v2159, 16
        %v2492 = vpop.permute.xlu0 %2491
        %2493 = vrot.lane.b32.xlu0 %v2160, 16
        %v2494 = vpop.permute.xlu0 %2493
        %v2499 = vsel %vm264, %v2483, %v2488
        %v2500 = vsel %vm264, %v2484, %v2490
        %v2501 = vsel %vm264, %v2485, %v2492
        %v2502 = vsel %vm264, %v2486, %v2494
        %v2504 = vsel %vm750, %v2499, 0
        %v2507 = vsel %vm750, %v2500, 0
        %v2510 = vsel %vm750, %v2501, 0
        %v2513 = vsel %vm750, %v2502, 0
        %2515 = vmatprep.subr.mxu0 0.0
        %2516 = vmatpush1.msra.mxu0 %v225
        %2517 = vmatprep.subr.mxu0 0.0
        %2518 = vmatpush1.msra.mxu0 %v226
        %2519 = vmatprep.subr.mxu0 0.0
        %2520 = vmatpush1.msra.mxu0 %v227
        %2521 = vmatprep.subr.mxu0 0.0
        %2522 = vmatpush1.msra.mxu0 %v228
        %2523 = vmatprep.subr.mxu0 0.0
        %2524 = vmatpush1.msra.mxu0 %v229
        %2525 = vmatprep.subr.mxu0 0.0
        %2526 = vmatpush1.msra.mxu0 %v230
        %2527 = vmatprep.subr.mxu0 0.0
        %2528 = vmatpush1.msra.mxu0 %v231
        %2529 = vmatprep.subr.mxu0 0.0
        %2530 = vmatpush1.msra.mxu0 %v232
        %2531 = vmatprep.subr.mxu0 0.0
        %2532 = vmatpush1.msra.mxu0 %v233
        %2533 = vmatprep.subr.mxu0 0.0
        %2534 = vmatpush1.msra.mxu0 %v234
        %2535 = vmatprep.subr.mxu0 0.0
        %2536 = vmatpush1.msra.mxu0 0.0
        %2537 = vmatprep.subr.mxu0 0.0
        %2538 = vmatpush1.msra.mxu0 0.0
        %2539 = vmatprep.subr.mxu0 0.0
        %2540 = vmatpush1.msra.mxu0 0.0
        %2541 = vmatprep.subr.mxu0 0.0
        %2542 = vmatpush1.msra.mxu0 0.0
        %2543 = vmatprep.subr.mxu0 0.0
        %2544 = vmatpush1.msra.mxu0 0.0
        %2545 = vmatprep.subr.mxu0 0.0
        %2546 = vmatpush1.msra.mxu0 0.0
        %2547 = vmatprep.subr.mxu0 0.0
        %2548 = vmatpush1.msra.mxu0 0.0
        %2549 = vmatprep.subr.mxu0 0.0
        %2550 = vmatpush1.msra.mxu0 0.0
        %2551 = vmatprep.subr.mxu0 0.0
        %2552 = vmatpush1.msra.mxu0 0.0
        %2553 = vmatprep.subr.mxu0 0.0
        %2554 = vmatpush1.msra.mxu0 0.0
        %2555 = vmatprep.subr.mxu0 0.0
        %2556 = vmatpush1.msra.mxu0 0.0
        %2557 = vmatprep.subr.mxu0 0.0
        %2558 = vmatpush1.msra.mxu0 0.0
        %2559 = vmatprep.subr.mxu0 0.0
        %2560 = vmatpush1.msra.mxu0 0.0
        %2561 = vmatprep.subr.mxu0 0.0
        %2562 = vmatpush1.msra.mxu0 0.0
        %2563 = vmatprep.subr.mxu0 0.0
        %2564 = vmatpush1.msra.mxu0 0.0
        %2565 = vmatprep.subr.mxu0 0.0
        %2566 = vmatpush1.msra.mxu0 0.0
        %2567 = vmatprep.subr.mxu0 0.0
        %2568 = vmatpush1.msra.mxu0 0.0
        %2569 = vmatprep.subr.mxu0 0.0
        %2570 = vmatpush1.msra.mxu0 0.0
        %2571 = vmatprep.subr.mxu0 0.0
        %2572 = vmatpush1.msra.mxu0 0.0
        %2573 = vmatprep.subr.mxu0 0.0
        %2574 = vmatpush1.msra.mxu0 0.0
        %2575 = vmatprep.subr.mxu0 0.0
        %2576 = vmatpush1.msra.mxu0 0.0
        %2577 = vmatprep.subr.mxu0 0.0
        %2578 = vmatpush1.msra.mxu0 0.0
        %2579 = vmatprep.mubr.f32.mxu0 0.0
        %2580 = vmatmul.mubr.f32.gmra.mrb[0].mxu0 %v2504
        %v2581 = vpop.f32.mrb[0].mxu0
        %v2582 = vadd.f32 %v749, %v2581
        %v2583 = vpop.f32.mrb[0].mxu0
        %2584 = vmatprep.mubr.f32.mxu0 0.0
        %2585 = vmatmul.mubr.f32.gmra.mrb[0].mxu0 %v2507
        %v2586 = vpop.f32.mrb[0].mxu0
        %v2587 = vadd.f32 %v749, %v2586
        %v2588 = vpop.f32.mrb[0].mxu0
        %2589 = vmatprep.mubr.f32.mxu0 0.0
        %2590 = vmatmul.mubr.f32.gmra.mrb[0].mxu0 %v2510
        %v2591 = vpop.f32.mrb[0].mxu0
        %v2592 = vadd.f32 %v749, %v2591
        %v2593 = vpop.f32.mrb[0].mxu0
        %2594 = vmatprep.mubr.f32.mxu0 0.0
        %2595 = vmatmul.mubr.f32.gmra.mrb[0].mxu0 %v2513
        %v2596 = vpop.f32.mrb[0].mxu0
        %v2597 = vadd.f32 %v749, %v2596
        %v2598 = vpop.f32.mrb[0].mxu0
        %2599 = vdwg.mxu0
        %v2600 = vtanh.pop %v2582
        %v2601 = vtanh.pop %v2587
        %v2602 = vtanh.pop %v2592
        %v2603 = vtanh.pop %v2597
        %v2604 = vsub.f32 1.0, %v2217
        %v2605 = vsub.f32 1.0, %v2218
        %v2606 = vsub.f32 1.0, %v2219
        %v2607 = vsub.f32 1.0, %v2220
        %v2608 = vmul.f32 %v2399, %v2604
        %v2609 = vmul.f32 %v2400, %v2605
        %v2610 = vmul.f32 %v2401, %v2606
        %v2611 = vmul.f32 %v2402, %v2607
        %v2612 = vadd.f32 %v2169, %v2608
        %v2613 = vadd.f32 %v2170, %v2609
        %v2614 = vadd.f32 %v2171, %v2610
        %v2615 = vadd.f32 %v2172, %v2611
        %v2616 = vmul.f32 %v2403, %v2604
        %v2617 = vmul.f32 %v2404, %v2605
        %v2618 = vmul.f32 %v2405, %v2606
        %v2619 = vmul.f32 %v2406, %v2607
        %v2620 = vadd.f32 %v2177, %v2616
        %v2621 = vadd.f32 %v2178, %v2617
        %v2622 = vadd.f32 %v2179, %v2618
        %v2623 = vadd.f32 %v2180, %v2619
        %v2624 = vadd.f32 %v2181, %v2604
        %v2625 = vadd.f32 %v2182, %v2605
        %v2626 = vadd.f32 %v2183, %v2606
        %v2627 = vadd.f32 %v2184, %v2607
        %v2628 = vmul.f32 %v2604, %v2483
        %v2629 = vmul.f32 %v2605, %v2484
        %v2630 = vmul.f32 %v2606, %v2485
        %v2631 = vmul.f32 %v2607, %v2486
        %2633 = vset.pattern.permute.xlu0 0
        %2634 = vperm.xlu0 %2633, %v2628
        %v2635 = vpop.permute.xlu0 %2634
        %2638 = vset.pattern.permute.xlu0 0
        %2639 = vperm.xlu0 %2638, %v2629
        %v2640 = vpop.permute.xlu0 %2639
        %2643 = vset.pattern.permute.xlu0 0
        %2644 = vperm.xlu0 %2643, %v2630
        %v2645 = vpop.permute.xlu0 %2644
        %2648 = vset.pattern.permute.xlu0 0
        %2649 = vperm.xlu0 %2648, %v2631
        %v2650 = vpop.permute.xlu0 %2649
        %v2652 = vmul.f32 %v2635, %v2600
        %v2653 = vmul.f32 %v2640, %v2601
        %v2654 = vmul.f32 %v2645, %v2602
        %v2655 = vmul.f32 %v2650, %v2603
        %v2656 = vadd.f32 %v2213, %v2652
        %v2657 = vadd.f32 %v2214, %v2653
        %v2658 = vadd.f32 %v2215, %v2654
        %v2659 = vadd.f32 %v2216, %v2655
        %v2660 = vmax.f32 %v2217, %v2483
        %v2661 = vmax.f32 %v2218, %v2484
        %v2662 = vmax.f32 %v2219, %v2485
        %v2663 = vmax.f32 %v2220, %v2486
        %vm2664 = vcmp.eq.s32.totalorder %v222, 4
        %v2665 = vcvt.s32.f32 %v2429
        %v2666 = vcvt.s32.f32 %v2444
        %v2667 = vcvt.s32.f32 %v2459
        %v2668 = vcvt.s32.f32 %v2474
        %v2669 = vsel %vm2664, %v2665, %v2226
        %v2670 = vsel %vm2664, %v2666, %v2227
        %v2671 = vsel %vm2664, %v2667, %v2228
        %v2672 = vsel %vm2664, %v2668, %v2229
        %v2673 = vsel %vm2664, %v2399, %v2230
        %v2674 = vsel %vm2664, %v2400, %v2231
        %v2675 = vsel %vm2664, %v2401, %v2232
        %v2676 = vsel %vm2664, %v2402, %v2233
        %v2678 = vsel %vm476, %v2600, 0
        %v2681 = vsel %vm476, %v2601, 0
        %v2684 = vsel %vm476, %v2602, 0
        %v2687 = vsel %vm476, %v2603, 0
        %2689 = vmatprep.subr.mxu0 0.0
        %2690 = vmatpush1.msra.mxu0 %v235
        %2691 = vmatprep.subr.mxu0 0.0
        %2692 = vmatpush1.msra.mxu0 %v236
        %2693 = vmatprep.subr.mxu0 0.0
        %2694 = vmatpush1.msra.mxu0 %v237
        %2695 = vmatprep.subr.mxu0 0.0
        %2696 = vmatpush1.msra.mxu0 %v238
        %2697 = vmatprep.subr.mxu0 0.0
        %2698 = vmatpush1.msra.mxu0 %v239
        %2699 = vmatprep.subr.mxu0 0.0
        %2700 = vmatpush1.msra.mxu0 %v240
        %2701 = vmatprep.subr.mxu0 0.0
        %2702 = vmatpush1.msra.mxu0 %v241
        %2703 = vmatprep.subr.mxu0 0.0
        %2704 = vmatpush1.msra.mxu0 %v242
        %2705 = vmatprep.subr.mxu0 0.0
        %2706 = vmatpush1.msra.mxu0 0.0
        %2707 = vmatprep.subr.mxu0 0.0
        %2708 = vmatpush1.msra.mxu0 0.0
        %2709 = vmatprep.subr.mxu0 0.0
        %2710 = vmatpush1.msra.mxu0 0.0
        %2711 = vmatprep.subr.mxu0 0.0
        %2712 = vmatpush1.msra.mxu0 0.0
        %2713 = vmatprep.subr.mxu0 0.0
        %2714 = vmatpush1.msra.mxu0 0.0
        %2715 = vmatprep.subr.mxu0 0.0
        %2716 = vmatpush1.msra.mxu0 0.0
        %2717 = vmatprep.subr.mxu0 0.0
        %2718 = vmatpush1.msra.mxu0 0.0
        %2719 = vmatprep.subr.mxu0 0.0
        %2720 = vmatpush1.msra.mxu0 0.0
        %2721 = vmatprep.subr.mxu0 0.0
        %2722 = vmatpush1.msra.mxu0 0.0
        %2723 = vmatprep.subr.mxu0 0.0
        %2724 = vmatpush1.msra.mxu0 0.0
        %2725 = vmatprep.subr.mxu0 0.0
        %2726 = vmatpush1.msra.mxu0 0.0
        %2727 = vmatprep.subr.mxu0 0.0
        %2728 = vmatpush1.msra.mxu0 0.0
        %2729 = vmatprep.subr.mxu0 0.0
        %2730 = vmatpush1.msra.mxu0 0.0
        %2731 = vmatprep.subr.mxu0 0.0
        %2732 = vmatpush1.msra.mxu0 0.0
        %2733 = vmatprep.subr.mxu0 0.0
        %2734 = vmatpush1.msra.mxu0 0.0
        %2735 = vmatprep.subr.mxu0 0.0
        %2736 = vmatpush1.msra.mxu0 0.0
        %2737 = vmatprep.subr.mxu0 0.0
        %2738 = vmatpush1.msra.mxu0 0.0
        %2739 = vmatprep.subr.mxu0 0.0
        %2740 = vmatpush1.msra.mxu0 0.0
        %2741 = vmatprep.subr.mxu0 0.0
        %2742 = vmatpush1.msra.mxu0 0.0
        %2743 = vmatprep.subr.mxu0 0.0
        %2744 = vmatpush1.msra.mxu0 0.0
        %2745 = vmatprep.subr.mxu0 0.0
        %2746 = vmatpush1.msra.mxu0 0.0
        %2747 = vmatprep.subr.mxu0 0.0
        %2748 = vmatpush1.msra.mxu0 0.0
        %2749 = vmatprep.subr.mxu0 0.0
        %2750 = vmatpush1.msra.mxu0 0.0
        %2751 = vmatprep.subr.mxu0 0.0
        %2752 = vmatpush1.msra.mxu0 0.0
        %2753 = vmatprep.mubr.f32.mxu0 0.0
        %2754 = vmatmul.mubr.f32.gmra.mrb[0].mxu0 %v2678
        %v2755 = vpop.f32.mrb[0].mxu0
        %v2756 = vadd.f32 %v475, %v2755
        %v2757 = vpop.f32.mrb[0].mxu0
        %2758 = vmatprep.mubr.f32.mxu0 0.0
        %2759 = vmatmul.mubr.f32.gmra.mrb[0].mxu0 %v2681
        %v2760 = vpop.f32.mrb[0].mxu0
        %v2761 = vadd.f32 %v475, %v2760
        %v2762 = vpop.f32.mrb[0].mxu0
        %2763 = vmatprep.mubr.f32.mxu0 0.0
        %2764 = vmatmul.mubr.f32.gmra.mrb[0].mxu0 %v2684
        %v2765 = vpop.f32.mrb[0].mxu0
        %v2766 = vadd.f32 %v475, %v2765
        %v2767 = vpop.f32.mrb[0].mxu0
        %2768 = vmatprep.mubr.f32.mxu0 0.0
        %2769 = vmatmul.mubr.f32.gmra.mrb[0].mxu0 %v2687
        %v2770 = vpop.f32.mrb[0].mxu0
        %v2771 = vadd.f32 %v475, %v2770
        %v2772 = vpop.f32.mrb[0].mxu0
        %2773 = vdwg.mxu0
        %v2774 = vsel %vm264, %v2756, -inf
        %2775 = vmax.xlane.f32.xlu0 %v2774
        %v2776 = vpop.xlane.xlu0 %2775
        %v2777 = vsel %vm264, %v2761, -inf
        %2778 = vmax.xlane.f32.xlu0 %v2777
        %v2779 = vpop.xlane.xlu0 %2778
        %v2780 = vsel %vm264, %v2766, -inf
        %2781 = vmax.xlane.f32.xlu0 %v2780
        %v2782 = vpop.xlane.xlu0 %2781
        %v2783 = vsel %vm264, %v2771, -inf
        %2784 = vmax.xlane.f32.xlu0 %v2783
        %v2785 = vpop.xlane.xlu0 %2784
        %v2786 = vsub.f32 %v2756, %v2776
        %v2787 = vsub.f32 %v2761, %v2779
        %v2788 = vsub.f32 %v2766, %v2782
        %v2789 = vsub.f32 %v2771, %v2785
        %v2790 = vmul.f32 %v2786, 1.442695
        %v2791 = vpow.pop %v2790
        %v2792 = vmul.f32 %v2787, 1.442695
        %v2793 = vpow.pop %v2792
        %v2794 = vmul.f32 %v2788, 1.442695
        %v2795 = vpow.pop %v2794
        %v2796 = vmul.f32 %v2789, 1.442695
        %v2797 = vpow.pop %v2796
        %v2798 = vsel %vm264, %v2791, 0.0
        %2799 = vadd.xlane.f32.xlu0 %v2798
        %v2800 = vpop.xlane.xlu0 %2799
        %v2801 = vsel %vm264, %v2793, 0.0
        %2802 = vadd.xlane.f32.xlu0 %v2801
        %v2803 = vpop.xlane.xlu0 %2802
        %v2804 = vsel %vm264, %v2795, 0.0
        %2805 = vadd.xlane.f32.xlu0 %v2804
        %v2806 = vpop.xlane.xlu0 %2805
        %v2807 = vsel %vm264, %v2797, 0.0
        %2808 = vadd.xlane.f32.xlu0 %v2807
        %v2809 = vpop.xlane.xlu0 %2808
        %v2810 = vlog2.pop %v2800
        %v2811 = vmul.f32 %v2810, 0.6931472
        %v2812 = vlog2.pop %v2803
        %v2813 = vmul.f32 %v2812, 0.6931472
        %v2814 = vlog2.pop %v2806
        %v2815 = vmul.f32 %v2814, 0.6931472
        %v2816 = vlog2.pop %v2809
        %v2817 = vmul.f32 %v2816, 0.6931472
        %v2818 = vmul.f32 %v2791, %v2786
        %v2819 = vmul.f32 %v2793, %v2787
        %v2820 = vmul.f32 %v2795, %v2788
        %v2821 = vmul.f32 %v2797, %v2789
        %v2822 = vsel %vm264, %v2818, 0.0
        %2823 = vadd.xlane.f32.xlu0 %v2822
        %v2824 = vpop.xlane.xlu0 %2823
        %v2825 = vsel %vm264, %v2819, 0.0
        %2826 = vadd.xlane.f32.xlu0 %v2825
        %v2827 = vpop.xlane.xlu0 %2826
        %v2828 = vsel %vm264, %v2820, 0.0
        %2829 = vadd.xlane.f32.xlu0 %v2828
        %v2830 = vpop.xlane.xlu0 %2829
        %v2831 = vsel %vm264, %v2821, 0.0
        %2832 = vadd.xlane.f32.xlu0 %v2831
        %v2833 = vpop.xlane.xlu0 %2832
        %v2834 = vrcp.pop %v2800
        %v2835 = vmul.f32 %v2824, %v2834
        %v2836 = vrcp.pop %v2803
        %v2837 = vmul.f32 %v2827, %v2836
        %v2838 = vrcp.pop %v2806
        %v2839 = vmul.f32 %v2830, %v2838
        %v2840 = vrcp.pop %v2809
        %v2841 = vmul.f32 %v2833, %v2840
        %v2842 = vsub.f32 %v2811, %v2835
        %v2843 = vsub.f32 %v2813, %v2837
        %v2844 = vsub.f32 %v2815, %v2839
        %v2845 = vsub.f32 %v2817, %v2841
        %v2846 = vsub.f32 0.0, %v2811
        %v2847 = vsub.f32 0.0, %v2813
        %v2848 = vsub.f32 0.0, %v2815
        %v2849 = vsub.f32 0.0, %v2817
        %vm2850 = vcmp.ge.f32.partialorder %v2756, %v2776
        %vm2851 = vcmp.ge.f32.partialorder %v2761, %v2779
        %vm2852 = vcmp.ge.f32.partialorder %v2766, %v2782
        %vm2853 = vcmp.ge.f32.partialorder %v2771, %v2785
        %v2854 = vsel %vm2850, %v222, 16
        %v2855 = vsel %vm2851, %v222, 16
        %v2856 = vsel %vm2852, %v222, 16
        %v2857 = vsel %vm2853, %v222, 16
        %v2858 = vsel %vm264, %v2854, 2147483647
        %v2859 = vand.u32 %v2858, 65535
        %v2860 = vshra.s32 %v2858, 16
        %v2861 = vcvt.s32.f32 %v2859
        %v2862 = vcvt.s32.f32 %v2860
        %2863 = vmin.xlane.f32.xlu0 %v2862
        %v2864 = vpop.xlane.xlu0 %2863
        %vm2865 = vcmp.eq.f32.partialorder %v2862, %v2864
        %v2866 = vsel %vm2865, %v2861, inf
        %2867 = vmin.xlane.f32.xlu0 %v2866
        %v2868 = vpop.xlane.xlu0 %2867
        %v2869 = vcvt.f32.s32 %v2868
        %v2870 = vcvt.f32.s32 %v2864
        %v2871 = vshll.u32 %v2870, 16
        %v2872 = vadd.s32 %v2871, %v2869
        %v2873 = vsel %vm264, %v2855, 2147483647
        %v2874 = vand.u32 %v2873, 65535
        %v2875 = vshra.s32 %v2873, 16
        %v2876 = vcvt.s32.f32 %v2874
        %v2877 = vcvt.s32.f32 %v2875
        %2878 = vmin.xlane.f32.xlu0 %v2877
        %v2879 = vpop.xlane.xlu0 %2878
        %vm2880 = vcmp.eq.f32.partialorder %v2877, %v2879
        %v2881 = vsel %vm2880, %v2876, inf
        %2882 = vmin.xlane.f32.xlu0 %v2881
        %v2883 = vpop.xlane.xlu0 %2882
        %v2884 = vcvt.f32.s32 %v2883
        %v2885 = vcvt.f32.s32 %v2879
        %v2886 = vshll.u32 %v2885, 16
        %v2887 = vadd.s32 %v2886, %v2884
        %v2888 = vsel %vm264, %v2856, 2147483647
        %v2889 = vand.u32 %v2888, 65535
        %v2890 = vshra.s32 %v2888, 16
        %v2891 = vcvt.s32.f32 %v2889
        %v2892 = vcvt.s32.f32 %v2890
        %2893 = vmin.xlane.f32.xlu0 %v2892
        %v2894 = vpop.xlane.xlu0 %2893
        %vm2895 = vcmp.eq.f32.partialorder %v2892, %v2894
        %v2896 = vsel %vm2895, %v2891, inf
        %2897 = vmin.xlane.f32.xlu0 %v2896
        %v2898 = vpop.xlane.xlu0 %2897
        %v2899 = vcvt.f32.s32 %v2898
        %v2900 = vcvt.f32.s32 %v2894
        %v2901 = vshll.u32 %v2900, 16
        %v2902 = vadd.s32 %v2901, %v2899
        %v2903 = vsel %vm264, %v2857, 2147483647
        %v2904 = vand.u32 %v2903, 65535
        %v2905 = vshra.s32 %v2903, 16
        %v2906 = vcvt.s32.f32 %v2904
        %v2907 = vcvt.s32.f32 %v2905
        %2908 = vmin.xlane.f32.xlu0 %v2907
        %v2909 = vpop.xlane.xlu0 %2908
        %vm2910 = vcmp.eq.f32.partialorder %v2907, %v2909
        %v2911 = vsel %vm2910, %v2906, inf
        %2912 = vmin.xlane.f32.xlu0 %v2911
        %v2913 = vpop.xlane.xlu0 %2912
        %v2914 = vcvt.f32.s32 %v2913
        %v2915 = vcvt.f32.s32 %v2909
        %v2916 = vshll.u32 %v2915, 16
        %v2917 = vadd.s32 %v2916, %v2914
        %vm2918 = vcmp.eq.s32.totalorder %v222, %v2872
        %vm2919 = vcmp.eq.s32.totalorder %v222, %v2887
        %vm2920 = vcmp.eq.s32.totalorder %v222, %v2902
        %vm2921 = vcmp.eq.s32.totalorder %v222, %v2917
        %v2922 = vsel %vm2918, 1, 0
        %v2923 = vsel %vm2919, 1, 0
        %v2924 = vsel %vm2920, 1, 0
        %v2925 = vsel %vm2921, 1, 0
        %v2926 = vcvt.s32.f32 %v2922
        %v2927 = vcvt.s32.f32 %v2923
        %v2928 = vcvt.s32.f32 %v2924
        %v2929 = vcvt.s32.f32 %v2925
        %2930 = vrot.lane.b32.xlu0 %v2600, 16
        %v2931 = vpop.permute.xlu0 %2930
        %2932 = vrot.lane.b32.xlu0 %v2601, 16
        %v2933 = vpop.permute.xlu0 %2932
        %2934 = vrot.lane.b32.xlu0 %v2602, 16
        %v2935 = vpop.permute.xlu0 %2934
        %2936 = vrot.lane.b32.xlu0 %v2603, 16
        %v2937 = vpop.permute.xlu0 %2936
        %v2942 = vsel %vm264, %v2926, %v2931
        %v2943 = vsel %vm264, %v2927, %v2933
        %v2944 = vsel %vm264, %v2928, %v2935
        %v2945 = vsel %vm264, %v2929, %v2937
        %v2947 = vsel %vm750, %v2942, 0
        %v2950 = vsel %vm750, %v2943, 0
        %v2953 = vsel %vm750, %v2944, 0
        %v2956 = vsel %vm750, %v2945, 0
        %2958 = vmatprep.subr.mxu0 0.0
        %2959 = vmatpush1.msra.mxu0 %v225
        %2960 = vmatprep.subr.mxu0 0.0
        %2961 = vmatpush1.msra.mxu0 %v226
        %2962 = vmatprep.subr.mxu0 0.0
        %2963 = vmatpush1.msra.mxu0 %v227
        %2964 = vmatprep.subr.mxu0 0.0
        %2965 = vmatpush1.msra.mxu0 %v228
        %2966 = vmatprep.subr.mxu0 0.0
        %2967 = vmatpush1.msra.mxu0 %v229
        %2968 = vmatprep.subr.mxu0 0.0
        %2969 = vmatpush1.msra.mxu0 %v230
        %2970 = vmatprep.subr.mxu0 0.0
        %2971 = vmatpush1.msra.mxu0 %v231
        %2972 = vmatprep.subr.mxu0 0.0
        %2973 = vmatpush1.msra.mxu0 %v232
        %2974 = vmatprep.subr.mxu0 0.0
        %2975 = vmatpush1.msra.mxu0 %v233
        %2976 = vmatprep.subr.mxu0 0.0
        %2977 = vmatpush1.msra.mxu0 %v234
        %2978 = vmatprep.subr.mxu0 0.0
        %2979 = vmatpush1.msra.mxu0 0.0
        %2980 = vmatprep.subr.mxu0 0.0
        %2981 = vmatpush1.msra.mxu0 0.0
        %2982 = vmatprep.subr.mxu0 0.0
        %2983 = vmatpush1.msra.mxu0 0.0
        %2984 = vmatprep.subr.mxu0 0.0
        %2985 = vmatpush1.msra.mxu0 0.0
        %2986 = vmatprep.subr.mxu0 0.0
        %2987 = vmatpush1.msra.mxu0 0.0
        %2988 = vmatprep.subr.mxu0 0.0
        %2989 = vmatpush1.msra.mxu0 0.0
        %2990 = vmatprep.subr.mxu0 0.0
        %2991 = vmatpush1.msra.mxu0 0.0
        %2992 = vmatprep.subr.mxu0 0.0
        %2993 = vmatpush1.msra.mxu0 0.0
        %2994 = vmatprep.subr.mxu0 0.0
        %2995 = vmatpush1.msra.mxu0 0.0
        %2996 = vmatprep.subr.mxu0 0.0
        %2997 = vmatpush1.msra.mxu0 0.0
        %2998 = vmatprep.subr.mxu0 0.0
        %2999 = vmatpush1.msra.mxu0 0.0
        %3000 = vmatprep.subr.mxu0 0.0
        %3001 = vmatpush1.msra.mxu0 0.0
        %3002 = vmatprep.subr.mxu0 0.0
        %3003 = vmatpush1.msra.mxu0 0.0
        %3004 = vmatprep.subr.mxu0 0.0
        %3005 = vmatpush1.msra.mxu0 0.0
        %3006 = vmatprep.subr.mxu0 0.0
        %3007 = vmatpush1.msra.mxu0 0.0
        %3008 = vmatprep.subr.mxu0 0.0
        %3009 = vmatpush1.msra.mxu0 0.0
        %3010 = vmatprep.subr.mxu0 0.0
        %3011 = vmatpush1.msra.mxu0 0.0
        %3012 = vmatprep.subr.mxu0 0.0
        %3013 = vmatpush1.msra.mxu0 0.0
        %3014 = vmatprep.subr.mxu0 0.0
        %3015 = vmatpush1.msra.mxu0 0.0
        %3016 = vmatprep.subr.mxu0 0.0
        %3017 = vmatpush1.msra.mxu0 0.0
        %3018 = vmatprep.subr.mxu0 0.0
        %3019 = vmatpush1.msra.mxu0 0.0
        %3020 = vmatprep.subr.mxu0 0.0
        %3021 = vmatpush1.msra.mxu0 0.0
        %3022 = vmatprep.mubr.f32.mxu0 0.0
        %3023 = vmatmul.mubr.f32.gmra.mrb[0].mxu0 %v2947
        %v3024 = vpop.f32.mrb[0].mxu0
        %v3025 = vadd.f32 %v749, %v3024
        %v3026 = vpop.f32.mrb[0].mxu0
        %3027 = vmatprep.mubr.f32.mxu0 0.0
        %3028 = vmatmul.mubr.f32.gmra.mrb[0].mxu0 %v2950
        %v3029 = vpop.f32.mrb[0].mxu0
        %v3030 = vadd.f32 %v749, %v3029
        %v3031 = vpop.f32.mrb[0].mxu0
        %3032 = vmatprep.mubr.f32.mxu0 0.0
        %3033 = vmatmul.mubr.f32.gmra.mrb[0].mxu0 %v2953
        %v3034 = vpop.f32.mrb[0].mxu0
        %v3035 = vadd.f32 %v749, %v3034
        %v3036 = vpop.f32.mrb[0].mxu0
        %3037 = vmatprep.mubr.f32.mxu0 0.0
        %3038 = vmatmul.mubr.f32.gmra.mrb[0].mxu0 %v2956
        %v3039 = vpop.f32.mrb[0].mxu0
        %v3040 = vadd.f32 %v749, %v3039
        %v3041 = vpop.f32.mrb[0].mxu0
        %3042 = vdwg.mxu0
        %v3043 = vtanh.pop %v3025
        %v3044 = vtanh.pop %v3030
        %v3045 = vtanh.pop %v3035
        %v3046 = vtanh.pop %v3040
        %v3047 = vsub.f32 1.0, %v2660
        %v3048 = vsub.f32 1.0, %v2661
        %v3049 = vsub.f32 1.0, %v2662
        %v3050 = vsub.f32 1.0, %v2663
        %v3051 = vmul.f32 %v2842, %v3047
        %v3052 = vmul.f32 %v2843, %v3048
        %v3053 = vmul.f32 %v2844, %v3049
        %v3054 = vmul.f32 %v2845, %v3050
        %v3055 = vadd.f32 %v2612, %v3051
        %v3056 = vadd.f32 %v2613, %v3052
        %v3057 = vadd.f32 %v2614, %v3053
        %v3058 = vadd.f32 %v2615, %v3054
        %v3059 = vmul.f32 %v2846, %v3047
        %v3060 = vmul.f32 %v2847, %v3048
        %v3061 = vmul.f32 %v2848, %v3049
        %v3062 = vmul.f32 %v2849, %v3050
        %v3063 = vadd.f32 %v2620, %v3059
        %v3064 = vadd.f32 %v2621, %v3060
        %v3065 = vadd.f32 %v2622, %v3061
        %v3066 = vadd.f32 %v2623, %v3062
        %v3067 = vadd.f32 %v2624, %v3047
        %v3068 = vadd.f32 %v2625, %v3048
        %v3069 = vadd.f32 %v2626, %v3049
        %v3070 = vadd.f32 %v2627, %v3050
        %v3071 = vmul.f32 %v3047, %v2926
        %v3072 = vmul.f32 %v3048, %v2927
        %v3073 = vmul.f32 %v3049, %v2928
        %v3074 = vmul.f32 %v3050, %v2929
        %3076 = vset.pattern.permute.xlu0 0
        %3077 = vperm.xlu0 %3076, %v3071
        %v3078 = vpop.permute.xlu0 %3077
        %3081 = vset.pattern.permute.xlu0 0
        %3082 = vperm.xlu0 %3081, %v3072
        %v3083 = vpop.permute.xlu0 %3082
        %3086 = vset.pattern.permute.xlu0 0
        %3087 = vperm.xlu0 %3086, %v3073
        %v3088 = vpop.permute.xlu0 %3087
        %3091 = vset.pattern.permute.xlu0 0
        %3092 = vperm.xlu0 %3091, %v3074
        %v3093 = vpop.permute.xlu0 %3092
        %v3095 = vmul.f32 %v3078, %v3043
        %v3096 = vmul.f32 %v3083, %v3044
        %v3097 = vmul.f32 %v3088, %v3045
        %v3098 = vmul.f32 %v3093, %v3046
        %v3099 = vadd.f32 %v2656, %v3095
        %v3100 = vadd.f32 %v2657, %v3096
        %v3101 = vadd.f32 %v2658, %v3097
        %v3102 = vadd.f32 %v2659, %v3098
        %v3103 = vmax.f32 %v2660, %v2926
        %v3104 = vmax.f32 %v2661, %v2927
        %v3105 = vmax.f32 %v2662, %v2928
        %v3106 = vmax.f32 %v2663, %v2929
        %vm3107 = vcmp.eq.s32.totalorder %v222, 5
        %v3108 = vcvt.s32.f32 %v2872
        %v3109 = vcvt.s32.f32 %v2887
        %v3110 = vcvt.s32.f32 %v2902
        %v3111 = vcvt.s32.f32 %v2917
        %v3112 = vsel %vm3107, %v3108, %v2669
        %v3113 = vsel %vm3107, %v3109, %v2670
        %v3114 = vsel %vm3107, %v3110, %v2671
        %v3115 = vsel %vm3107, %v3111, %v2672
        %v3116 = vsel %vm3107, %v2842, %v2673
        %v3117 = vsel %vm3107, %v2843, %v2674
        %v3118 = vsel %vm3107, %v2844, %v2675
        %v3119 = vsel %vm3107, %v2845, %v2676
        %v3121 = vsel %vm476, %v3043, 0
        %v3124 = vsel %vm476, %v3044, 0
        %v3127 = vsel %vm476, %v3045, 0
        %v3130 = vsel %vm476, %v3046, 0
        %3132 = vmatprep.subr.mxu0 0.0
        %3133 = vmatpush1.msra.mxu0 %v235
        %3134 = vmatprep.subr.mxu0 0.0
        %3135 = vmatpush1.msra.mxu0 %v236
        %3136 = vmatprep.subr.mxu0 0.0
        %3137 = vmatpush1.msra.mxu0 %v237
        %3138 = vmatprep.subr.mxu0 0.0
        %3139 = vmatpush1.msra.mxu0 %v238
        %3140 = vmatprep.subr.mxu0 0.0
        %3141 = vmatpush1.msra.mxu0 %v239
        %3142 = vmatprep.subr.mxu0 0.0
        %3143 = vmatpush1.msra.mxu0 %v240
        %3144 = vmatprep.subr.mxu0 0.0
        %3145 = vmatpush1.msra.mxu0 %v241
        %3146 = vmatprep.subr.mxu0 0.0
        %3147 = vmatpush1.msra.mxu0 %v242
        %3148 = vmatprep.subr.mxu0 0.0
        %3149 = vmatpush1.msra.mxu0 0.0
        %3150 = vmatprep.subr.mxu0 0.0
        %3151 = vmatpush1.msra.mxu0 0.0
        %3152 = vmatprep.subr.mxu0 0.0
        %3153 = vmatpush1.msra.mxu0 0.0
        %3154 = vmatprep.subr.mxu0 0.0
        %3155 = vmatpush1.msra.mxu0 0.0
        %3156 = vmatprep.subr.mxu0 0.0
        %3157 = vmatpush1.msra.mxu0 0.0
        %3158 = vmatprep.subr.mxu0 0.0
        %3159 = vmatpush1.msra.mxu0 0.0
        %3160 = vmatprep.subr.mxu0 0.0
        %3161 = vmatpush1.msra.mxu0 0.0
        %3162 = vmatprep.subr.mxu0 0.0
        %3163 = vmatpush1.msra.mxu0 0.0
        %3164 = vmatprep.subr.mxu0 0.0
        %3165 = vmatpush1.msra.mxu0 0.0
        %3166 = vmatprep.subr.mxu0 0.0
        %3167 = vmatpush1.msra.mxu0 0.0
        %3168 = vmatprep.subr.mxu0 0.0
        %3169 = vmatpush1.msra.mxu0 0.0
        %3170 = vmatprep.subr.mxu0 0.0
        %3171 = vmatpush1.msra.mxu0 0.0
        %3172 = vmatprep.subr.mxu0 0.0
        %3173 = vmatpush1.msra.mxu0 0.0
        %3174 = vmatprep.subr.mxu0 0.0
        %3175 = vmatpush1.msra.mxu0 0.0
        %3176 = vmatprep.subr.mxu0 0.0
        %3177 = vmatpush1.msra.mxu0 0.0
        %3178 = vmatprep.subr.mxu0 0.0
        %3179 = vmatpush1.msra.mxu0 0.0
        %3180 = vmatprep.subr.mxu0 0.0
        %3181 = vmatpush1.msra.mxu0 0.0
        %3182 = vmatprep.subr.mxu0 0.0
        %3183 = vmatpush1.msra.mxu0 0.0
        %3184 = vmatprep.subr.mxu0 0.0
        %3185 = vmatpush1.msra.mxu0 0.0
        %3186 = vmatprep.subr.mxu0 0.0
        %3187 = vmatpush1.msra.mxu0 0.0
        %3188 = vmatprep.subr.mxu0 0.0
        %3189 = vmatpush1.msra.mxu0 0.0
        %3190 = vmatprep.subr.mxu0 0.0
        %3191 = vmatpush1.msra.mxu0 0.0
        %3192 = vmatprep.subr.mxu0 0.0
        %3193 = vmatpush1.msra.mxu0 0.0
        %3194 = vmatprep.subr.mxu0 0.0
        %3195 = vmatpush1.msra.mxu0 0.0
        %3196 = vmatprep.mubr.f32.mxu0 0.0
        %3197 = vmatmul.mubr.f32.gmra.mrb[0].mxu0 %v3121
        %v3198 = vpop.f32.mrb[0].mxu0
        %v3199 = vadd.f32 %v475, %v3198
        %v3200 = vpop.f32.mrb[0].mxu0
        %3201 = vmatprep.mubr.f32.mxu0 0.0
        %3202 = vmatmul.mubr.f32.gmra.mrb[0].mxu0 %v3124
        %v3203 = vpop.f32.mrb[0].mxu0
        %v3204 = vadd.f32 %v475, %v3203
        %v3205 = vpop.f32.mrb[0].mxu0
        %3206 = vmatprep.mubr.f32.mxu0 0.0
        %3207 = vmatmul.mubr.f32.gmra.mrb[0].mxu0 %v3127
        %v3208 = vpop.f32.mrb[0].mxu0
        %v3209 = vadd.f32 %v475, %v3208
        %v3210 = vpop.f32.mrb[0].mxu0
        %3211 = vmatprep.mubr.f32.mxu0 0.0
        %3212 = vmatmul.mubr.f32.gmra.mrb[0].mxu0 %v3130
        %v3213 = vpop.f32.mrb[0].mxu0
        %v3214 = vadd.f32 %v475, %v3213
        %v3215 = vpop.f32.mrb[0].mxu0
        %3216 = vdwg.mxu0
        %v3217 = vsel %vm264, %v3199, -inf
        %3218 = vmax.xlane.f32.xlu0 %v3217
        %v3219 = vpop.xlane.xlu0 %3218
        %v3220 = vsel %vm264, %v3204, -inf
        %3221 = vmax.xlane.f32.xlu0 %v3220
        %v3222 = vpop.xlane.xlu0 %3221
        %v3223 = vsel %vm264, %v3209, -inf
        %3224 = vmax.xlane.f32.xlu0 %v3223
        %v3225 = vpop.xlane.xlu0 %3224
        %v3226 = vsel %vm264, %v3214, -inf
        %3227 = vmax.xlane.f32.xlu0 %v3226
        %v3228 = vpop.xlane.xlu0 %3227
        %v3229 = vsub.f32 %v3199, %v3219
        %v3230 = vsub.f32 %v3204, %v3222
        %v3231 = vsub.f32 %v3209, %v3225
        %v3232 = vsub.f32 %v3214, %v3228
        %v3233 = vmul.f32 %v3229, 1.442695
        %v3234 = vpow.pop %v3233
        %v3235 = vmul.f32 %v3230, 1.442695
        %v3236 = vpow.pop %v3235
        %v3237 = vmul.f32 %v3231, 1.442695
        %v3238 = vpow.pop %v3237
        %v3239 = vmul.f32 %v3232, 1.442695
        %v3240 = vpow.pop %v3239
        %v3241 = vsel %vm264, %v3234, 0.0
        %3242 = vadd.xlane.f32.xlu0 %v3241
        %v3243 = vpop.xlane.xlu0 %3242
        %v3244 = vsel %vm264, %v3236, 0.0
        %3245 = vadd.xlane.f32.xlu0 %v3244
        %v3246 = vpop.xlane.xlu0 %3245
        %v3247 = vsel %vm264, %v3238, 0.0
        %3248 = vadd.xlane.f32.xlu0 %v3247
        %v3249 = vpop.xlane.xlu0 %3248
        %v3250 = vsel %vm264, %v3240, 0.0
        %3251 = vadd.xlane.f32.xlu0 %v3250
        %v3252 = vpop.xlane.xlu0 %3251
        %v3253 = vlog2.pop %v3243
        %v3254 = vmul.f32 %v3253, 0.6931472
        %v3255 = vlog2.pop %v3246
        %v3256 = vmul.f32 %v3255, 0.6931472
        %v3257 = vlog2.pop %v3249
        %v3258 = vmul.f32 %v3257, 0.6931472
        %v3259 = vlog2.pop %v3252
        %v3260 = vmul.f32 %v3259, 0.6931472
        %v3261 = vmul.f32 %v3234, %v3229
        %v3262 = vmul.f32 %v3236, %v3230
        %v3263 = vmul.f32 %v3238, %v3231
        %v3264 = vmul.f32 %v3240, %v3232
        %v3265 = vsel %vm264, %v3261, 0.0
        %3266 = vadd.xlane.f32.xlu0 %v3265
        %v3267 = vpop.xlane.xlu0 %3266
        %v3268 = vsel %vm264, %v3262, 0.0
        %3269 = vadd.xlane.f32.xlu0 %v3268
        %v3270 = vpop.xlane.xlu0 %3269
        %v3271 = vsel %vm264, %v3263, 0.0
        %3272 = vadd.xlane.f32.xlu0 %v3271
        %v3273 = vpop.xlane.xlu0 %3272
        %v3274 = vsel %vm264, %v3264, 0.0
        %3275 = vadd.xlane.f32.xlu0 %v3274
        %v3276 = vpop.xlane.xlu0 %3275
        %v3277 = vrcp.pop %v3243
        %v3278 = vmul.f32 %v3267, %v3277
        %v3279 = vrcp.pop %v3246
        %v3280 = vmul.f32 %v3270, %v3279
        %v3281 = vrcp.pop %v3249
        %v3282 = vmul.f32 %v3273, %v3281
        %v3283 = vrcp.pop %v3252
        %v3284 = vmul.f32 %v3276, %v3283
        %v3285 = vsub.f32 %v3254, %v3278
        %v3286 = vsub.f32 %v3256, %v3280
        %v3287 = vsub.f32 %v3258, %v3282
        %v3288 = vsub.f32 %v3260, %v3284
        %v3289 = vsub.f32 0.0, %v3254
        %v3290 = vsub.f32 0.0, %v3256
        %v3291 = vsub.f32 0.0, %v3258
        %v3292 = vsub.f32 0.0, %v3260
        %vm3293 = vcmp.ge.f32.partialorder %v3199, %v3219
        %vm3294 = vcmp.ge.f32.partialorder %v3204, %v3222
        %vm3295 = vcmp.ge.f32.partialorder %v3209, %v3225
        %vm3296 = vcmp.ge.f32.partialorder %v3214, %v3228
        %v3297 = vsel %vm3293, %v222, 16
        %v3298 = vsel %vm3294, %v222, 16
        %v3299 = vsel %vm3295, %v222, 16
        %v3300 = vsel %vm3296, %v222, 16
        %v3301 = vsel %vm264, %v3297, 2147483647
        %v3302 = vand.u32 %v3301, 65535
        %v3303 = vshra.s32 %v3301, 16
        %v3304 = vcvt.s32.f32 %v3302
        %v3305 = vcvt.s32.f32 %v3303
        %3306 = vmin.xlane.f32.xlu0 %v3305
        %v3307 = vpop.xlane.xlu0 %3306
        %vm3308 = vcmp.eq.f32.partialorder %v3305, %v3307
        %v3309 = vsel %vm3308, %v3304, inf
        %3310 = vmin.xlane.f32.xlu0 %v3309
        %v3311 = vpop.xlane.xlu0 %3310
        %v3312 = vcvt.f32.s32 %v3311
        %v3313 = vcvt.f32.s32 %v3307
        %v3314 = vshll.u32 %v3313, 16
        %v3315 = vadd.s32 %v3314, %v3312
        %v3316 = vsel %vm264, %v3298, 2147483647
        %v3317 = vand.u32 %v3316, 65535
        %v3318 = vshra.s32 %v3316, 16
        %v3319 = vcvt.s32.f32 %v3317
        %v3320 = vcvt.s32.f32 %v3318
        %3321 = vmin.xlane.f32.xlu0 %v3320
        %v3322 = vpop.xlane.xlu0 %3321
        %vm3323 = vcmp.eq.f32.partialorder %v3320, %v3322
        %v3324 = vsel %vm3323, %v3319, inf
        %3325 = vmin.xlane.f32.xlu0 %v3324
        %v3326 = vpop.xlane.xlu0 %3325
        %v3327 = vcvt.f32.s32 %v3326
        %v3328 = vcvt.f32.s32 %v3322
        %v3329 = vshll.u32 %v3328, 16
        %v3330 = vadd.s32 %v3329, %v3327
        %v3331 = vsel %vm264, %v3299, 2147483647
        %v3332 = vand.u32 %v3331, 65535
        %v3333 = vshra.s32 %v3331, 16
        %v3334 = vcvt.s32.f32 %v3332
        %v3335 = vcvt.s32.f32 %v3333
        %3336 = vmin.xlane.f32.xlu0 %v3335
        %v3337 = vpop.xlane.xlu0 %3336
        %vm3338 = vcmp.eq.f32.partialorder %v3335, %v3337
        %v3339 = vsel %vm3338, %v3334, inf
        %3340 = vmin.xlane.f32.xlu0 %v3339
        %v3341 = vpop.xlane.xlu0 %3340
        %v3342 = vcvt.f32.s32 %v3341
        %v3343 = vcvt.f32.s32 %v3337
        %v3344 = vshll.u32 %v3343, 16
        %v3345 = vadd.s32 %v3344, %v3342
        %v3346 = vsel %vm264, %v3300, 2147483647
        %v3347 = vand.u32 %v3346, 65535
        %v3348 = vshra.s32 %v3346, 16
        %v3349 = vcvt.s32.f32 %v3347
        %v3350 = vcvt.s32.f32 %v3348
        %3351 = vmin.xlane.f32.xlu0 %v3350
        %v3352 = vpop.xlane.xlu0 %3351
        %vm3353 = vcmp.eq.f32.partialorder %v3350, %v3352
        %v3354 = vsel %vm3353, %v3349, inf
        %3355 = vmin.xlane.f32.xlu0 %v3354
        %v3356 = vpop.xlane.xlu0 %3355
        %v3357 = vcvt.f32.s32 %v3356
        %v3358 = vcvt.f32.s32 %v3352
        %v3359 = vshll.u32 %v3358, 16
        %v3360 = vadd.s32 %v3359, %v3357
        %vm3361 = vcmp.eq.s32.totalorder %v222, %v3315
        %vm3362 = vcmp.eq.s32.totalorder %v222, %v3330
        %vm3363 = vcmp.eq.s32.totalorder %v222, %v3345
        %vm3364 = vcmp.eq.s32.totalorder %v222, %v3360
        %v3365 = vsel %vm3361, 1, 0
        %v3366 = vsel %vm3362, 1, 0
        %v3367 = vsel %vm3363, 1, 0
        %v3368 = vsel %vm3364, 1, 0
        %v3369 = vcvt.s32.f32 %v3365
        %v3370 = vcvt.s32.f32 %v3366
        %v3371 = vcvt.s32.f32 %v3367
        %v3372 = vcvt.s32.f32 %v3368
        %3373 = vrot.lane.b32.xlu0 %v3043, 16
        %v3374 = vpop.permute.xlu0 %3373
        %3375 = vrot.lane.b32.xlu0 %v3044, 16
        %v3376 = vpop.permute.xlu0 %3375
        %3377 = vrot.lane.b32.xlu0 %v3045, 16
        %v3378 = vpop.permute.xlu0 %3377
        %3379 = vrot.lane.b32.xlu0 %v3046, 16
        %v3380 = vpop.permute.xlu0 %3379
        %v3385 = vsel %vm264, %v3369, %v3374
        %v3386 = vsel %vm264, %v3370, %v3376
        %v3387 = vsel %vm264, %v3371, %v3378
        %v3388 = vsel %vm264, %v3372, %v3380
        %v3390 = vsel %vm750, %v3385, 0
        %v3393 = vsel %vm750, %v3386, 0
        %v3396 = vsel %vm750, %v3387, 0
        %v3399 = vsel %vm750, %v3388, 0
        %3401 = vmatprep.subr.mxu0 0.0
        %3402 = vmatpush1.msra.mxu0 %v225
        %3403 = vmatprep.subr.mxu0 0.0
        %3404 = vmatpush1.msra.mxu0 %v226
        %3405 = vmatprep.subr.mxu0 0.0
        %3406 = vmatpush1.msra.mxu0 %v227
        %3407 = vmatprep.subr.mxu0 0.0
        %3408 = vmatpush1.msra.mxu0 %v228
        %3409 = vmatprep.subr.mxu0 0.0
        %3410 = vmatpush1.msra.mxu0 %v229
        %3411 = vmatprep.subr.mxu0 0.0
        %3412 = vmatpush1.msra.mxu0 %v230
        %3413 = vmatprep.subr.mxu0 0.0
        %3414 = vmatpush1.msra.mxu0 %v231
        %3415 = vmatprep.subr.mxu0 0.0
        %3416 = vmatpush1.msra.mxu0 %v232
        %3417 = vmatprep.subr.mxu0 0.0
        %3418 = vmatpush1.msra.mxu0 %v233
        %3419 = vmatprep.subr.mxu0 0.0
        %3420 = vmatpush1.msra.mxu0 %v234
        %3421 = vmatprep.subr.mxu0 0.0
        %3422 = vmatpush1.msra.mxu0 0.0
        %3423 = vmatprep.subr.mxu0 0.0
        %3424 = vmatpush1.msra.mxu0 0.0
        %3425 = vmatprep.subr.mxu0 0.0
        %3426 = vmatpush1.msra.mxu0 0.0
        %3427 = vmatprep.subr.mxu0 0.0
        %3428 = vmatpush1.msra.mxu0 0.0
        %3429 = vmatprep.subr.mxu0 0.0
        %3430 = vmatpush1.msra.mxu0 0.0
        %3431 = vmatprep.subr.mxu0 0.0
        %3432 = vmatpush1.msra.mxu0 0.0
        %3433 = vmatprep.subr.mxu0 0.0
        %3434 = vmatpush1.msra.mxu0 0.0
        %3435 = vmatprep.subr.mxu0 0.0
        %3436 = vmatpush1.msra.mxu0 0.0
        %3437 = vmatprep.subr.mxu0 0.0
        %3438 = vmatpush1.msra.mxu0 0.0
        %3439 = vmatprep.subr.mxu0 0.0
        %3440 = vmatpush1.msra.mxu0 0.0
        %3441 = vmatprep.subr.mxu0 0.0
        %3442 = vmatpush1.msra.mxu0 0.0
        %3443 = vmatprep.subr.mxu0 0.0
        %3444 = vmatpush1.msra.mxu0 0.0
        %3445 = vmatprep.subr.mxu0 0.0
        %3446 = vmatpush1.msra.mxu0 0.0
        %3447 = vmatprep.subr.mxu0 0.0
        %3448 = vmatpush1.msra.mxu0 0.0
        %3449 = vmatprep.subr.mxu0 0.0
        %3450 = vmatpush1.msra.mxu0 0.0
        %3451 = vmatprep.subr.mxu0 0.0
        %3452 = vmatpush1.msra.mxu0 0.0
        %3453 = vmatprep.subr.mxu0 0.0
        %3454 = vmatpush1.msra.mxu0 0.0
        %3455 = vmatprep.subr.mxu0 0.0
        %3456 = vmatpush1.msra.mxu0 0.0
        %3457 = vmatprep.subr.mxu0 0.0
        %3458 = vmatpush1.msra.mxu0 0.0
        %3459 = vmatprep.subr.mxu0 0.0
        %3460 = vmatpush1.msra.mxu0 0.0
        %3461 = vmatprep.subr.mxu0 0.0
        %3462 = vmatpush1.msra.mxu0 0.0
        %3463 = vmatprep.subr.mxu0 0.0
        %3464 = vmatpush1.msra.mxu0 0.0
        %3465 = vmatprep.mubr.f32.mxu0 0.0
        %3466 = vmatmul.mubr.f32.gmra.mrb[0].mxu0 %v3390
        %v3467 = vpop.f32.mrb[0].mxu0
        %v3468 = vadd.f32 %v749, %v3467
        %v3469 = vpop.f32.mrb[0].mxu0
        %3470 = vmatprep.mubr.f32.mxu0 0.0
        %3471 = vmatmul.mubr.f32.gmra.mrb[0].mxu0 %v3393
        %v3472 = vpop.f32.mrb[0].mxu0
        %v3473 = vadd.f32 %v749, %v3472
        %v3474 = vpop.f32.mrb[0].mxu0
        %3475 = vmatprep.mubr.f32.mxu0 0.0
        %3476 = vmatmul.mubr.f32.gmra.mrb[0].mxu0 %v3396
        %v3477 = vpop.f32.mrb[0].mxu0
        %v3478 = vadd.f32 %v749, %v3477
        %v3479 = vpop.f32.mrb[0].mxu0
        %3480 = vmatprep.mubr.f32.mxu0 0.0
        %3481 = vmatmul.mubr.f32.gmra.mrb[0].mxu0 %v3399
        %v3482 = vpop.f32.mrb[0].mxu0
        %v3483 = vadd.f32 %v749, %v3482
        %v3484 = vpop.f32.mrb[0].mxu0
        %3485 = vdwg.mxu0
        %v3486 = vtanh.pop %v3468
        %v3487 = vtanh.pop %v3473
        %v3488 = vtanh.pop %v3478
        %v3489 = vtanh.pop %v3483
        %v3490 = vsub.f32 1.0, %v3103
        %v3491 = vsub.f32 1.0, %v3104
        %v3492 = vsub.f32 1.0, %v3105
        %v3493 = vsub.f32 1.0, %v3106
        %v3494 = vmul.f32 %v3285, %v3490
        %v3495 = vmul.f32 %v3286, %v3491
        %v3496 = vmul.f32 %v3287, %v3492
        %v3497 = vmul.f32 %v3288, %v3493
        %v3498 = vadd.f32 %v3055, %v3494
        %v3499 = vadd.f32 %v3056, %v3495
        %v3500 = vadd.f32 %v3057, %v3496
        %v3501 = vadd.f32 %v3058, %v3497
        %v3502 = vmul.f32 %v3289, %v3490
        %v3503 = vmul.f32 %v3290, %v3491
        %v3504 = vmul.f32 %v3291, %v3492
        %v3505 = vmul.f32 %v3292, %v3493
        %v3506 = vadd.f32 %v3063, %v3502
        %v3507 = vadd.f32 %v3064, %v3503
        %v3508 = vadd.f32 %v3065, %v3504
        %v3509 = vadd.f32 %v3066, %v3505
        %v3510 = vadd.f32 %v3067, %v3490
        %v3511 = vadd.f32 %v3068, %v3491
        %v3512 = vadd.f32 %v3069, %v3492
        %v3513 = vadd.f32 %v3070, %v3493
        %v3514 = vmul.f32 %v3490, %v3369
        %v3515 = vmul.f32 %v3491, %v3370
        %v3516 = vmul.f32 %v3492, %v3371
        %v3517 = vmul.f32 %v3493, %v3372
        %3519 = vset.pattern.permute.xlu0 0
        %3520 = vperm.xlu0 %3519, %v3514
        %v3521 = vpop.permute.xlu0 %3520
        %3524 = vset.pattern.permute.xlu0 0
        %3525 = vperm.xlu0 %3524, %v3515
        %v3526 = vpop.permute.xlu0 %3525
        %3529 = vset.pattern.permute.xlu0 0
        %3530 = vperm.xlu0 %3529, %v3516
        %v3531 = vpop.permute.xlu0 %3530
        %3534 = vset.pattern.permute.xlu0 0
        %3535 = vperm.xlu0 %3534, %v3517
        %v3536 = vpop.permute.xlu0 %3535
        %v3538 = vmul.f32 %v3521, %v3486
        %v3539 = vmul.f32 %v3526, %v3487
        %v3540 = vmul.f32 %v3531, %v3488
        %v3541 = vmul.f32 %v3536, %v3489
        %v3542 = vadd.f32 %v3099, %v3538
        %v3543 = vadd.f32 %v3100, %v3539
        %v3544 = vadd.f32 %v3101, %v3540
        %v3545 = vadd.f32 %v3102, %v3541
        %v3546 = vmax.f32 %v3103, %v3369
        %v3547 = vmax.f32 %v3104, %v3370
        %v3548 = vmax.f32 %v3105, %v3371
        %v3549 = vmax.f32 %v3106, %v3372
        %vm3550 = vcmp.eq.s32.totalorder %v222, 6
        %v3551 = vcvt.s32.f32 %v3315
        %v3552 = vcvt.s32.f32 %v3330
        %v3553 = vcvt.s32.f32 %v3345
        %v3554 = vcvt.s32.f32 %v3360
        %v3555 = vsel %vm3550, %v3551, %v3112
        %v3556 = vsel %vm3550, %v3552, %v3113
        %v3557 = vsel %vm3550, %v3553, %v3114
        %v3558 = vsel %vm3550, %v3554, %v3115
        %v3559 = vsel %vm3550, %v3285, %v3116
        %v3560 = vsel %vm3550, %v3286, %v3117
        %v3561 = vsel %vm3550, %v3287, %v3118
        %v3562 = vsel %vm3550, %v3288, %v3119
        %v3564 = vsel %vm476, %v3486, 0
        %v3567 = vsel %vm476, %v3487, 0
        %v3570 = vsel %vm476, %v3488, 0
        %v3573 = vsel %vm476, %v3489, 0
        %3575 = vmatprep.subr.mxu0 0.0
        %3576 = vmatpush1.msra.mxu0 %v235
        %3577 = vmatprep.subr.mxu0 0.0
        %3578 = vmatpush1.msra.mxu0 %v236
        %3579 = vmatprep.subr.mxu0 0.0
        %3580 = vmatpush1.msra.mxu0 %v237
        %3581 = vmatprep.subr.mxu0 0.0
        %3582 = vmatpush1.msra.mxu0 %v238
        %3583 = vmatprep.subr.mxu0 0.0
        %3584 = vmatpush1.msra.mxu0 %v239
        %3585 = vmatprep.subr.mxu0 0.0
        %3586 = vmatpush1.msra.mxu0 %v240
        %3587 = vmatprep.subr.mxu0 0.0
        %3588 = vmatpush1.msra.mxu0 %v241
        %3589 = vmatprep.subr.mxu0 0.0
        %3590 = vmatpush1.msra.mxu0 %v242
        %3591 = vmatprep.subr.mxu0 0.0
        %3592 = vmatpush1.msra.mxu0 0.0
        %3593 = vmatprep.subr.mxu0 0.0
        %3594 = vmatpush1.msra.mxu0 0.0
        %3595 = vmatprep.subr.mxu0 0.0
        %3596 = vmatpush1.msra.mxu0 0.0
        %3597 = vmatprep.subr.mxu0 0.0
        %3598 = vmatpush1.msra.mxu0 0.0
        %3599 = vmatprep.subr.mxu0 0.0
        %3600 = vmatpush1.msra.mxu0 0.0
        %3601 = vmatprep.subr.mxu0 0.0
        %3602 = vmatpush1.msra.mxu0 0.0
        %3603 = vmatprep.subr.mxu0 0.0
        %3604 = vmatpush1.msra.mxu0 0.0
        %3605 = vmatprep.subr.mxu0 0.0
        %3606 = vmatpush1.msra.mxu0 0.0
        %3607 = vmatprep.subr.mxu0 0.0
        %3608 = vmatpush1.msra.mxu0 0.0
        %3609 = vmatprep.subr.mxu0 0.0
        %3610 = vmatpush1.msra.mxu0 0.0
        %3611 = vmatprep.subr.mxu0 0.0
        %3612 = vmatpush1.msra.mxu0 0.0
        %3613 = vmatprep.subr.mxu0 0.0
        %3614 = vmatpush1.msra.mxu0 0.0
        %3615 = vmatprep.subr.mxu0 0.0
        %3616 = vmatpush1.msra.mxu0 0.0
        %3617 = vmatprep.subr.mxu0 0.0
        %3618 = vmatpush1.msra.mxu0 0.0
        %3619 = vmatprep.subr.mxu0 0.0
        %3620 = vmatpush1.msra.mxu0 0.0
        %3621 = vmatprep.subr.mxu0 0.0
        %3622 = vmatpush1.msra.mxu0 0.0
        %3623 = vmatprep.subr.mxu0 0.0
        %3624 = vmatpush1.msra.mxu0 0.0
        %3625 = vmatprep.subr.mxu0 0.0
        %3626 = vmatpush1.msra.mxu0 0.0
        %3627 = vmatprep.subr.mxu0 0.0
        %3628 = vmatpush1.msra.mxu0 0.0
        %3629 = vmatprep.subr.mxu0 0.0
        %3630 = vmatpush1.msra.mxu0 0.0
        %3631 = vmatprep.subr.mxu0 0.0
        %3632 = vmatpush1.msra.mxu0 0.0
        %3633 = vmatprep.subr.mxu0 0.0
        %3634 = vmatpush1.msra.mxu0 0.0
        %3635 = vmatprep.subr.mxu0 0.0
        %3636 = vmatpush1.msra.mxu0 0.0
        %3637 = vmatprep.subr.mxu0 0.0
        %3638 = vmatpush1.msra.mxu0 0.0
        %3639 = vmatprep.mubr.f32.mxu0 0.0
        %3640 = vmatmul.mubr.f32.gmra.mrb[0].mxu0 %v3564
        %v3641 = vpop.f32.mrb[0].mxu0
        %v3642 = vadd.f32 %v475, %v3641
        %v3643 = vpop.f32.mrb[0].mxu0
        %3644 = vmatprep.mubr.f32.mxu0 0.0
        %3645 = vmatmul.mubr.f32.gmra.mrb[0].mxu0 %v3567
        %v3646 = vpop.f32.mrb[0].mxu0
        %v3647 = vadd.f32 %v475, %v3646
        %v3648 = vpop.f32.mrb[0].mxu0
        %3649 = vmatprep.mubr.f32.mxu0 0.0
        %3650 = vmatmul.mubr.f32.gmra.mrb[0].mxu0 %v3570
        %v3651 = vpop.f32.mrb[0].mxu0
        %v3652 = vadd.f32 %v475, %v3651
        %v3653 = vpop.f32.mrb[0].mxu0
        %3654 = vmatprep.mubr.f32.mxu0 0.0
        %3655 = vmatmul.mubr.f32.gmra.mrb[0].mxu0 %v3573
        %v3656 = vpop.f32.mrb[0].mxu0
        %v3657 = vadd.f32 %v475, %v3656
        %v3658 = vpop.f32.mrb[0].mxu0
        %3659 = vdwg.mxu0
        %v3660 = vsel %vm264, %v3642, -inf
        %3661 = vmax.xlane.f32.xlu0 %v3660
        %v3662 = vpop.xlane.xlu0 %3661
        %v3663 = vsel %vm264, %v3647, -inf
        %3664 = vmax.xlane.f32.xlu0 %v3663
        %v3665 = vpop.xlane.xlu0 %3664
        %v3666 = vsel %vm264, %v3652, -inf
        %3667 = vmax.xlane.f32.xlu0 %v3666
        %v3668 = vpop.xlane.xlu0 %3667
        %v3669 = vsel %vm264, %v3657, -inf
        %3670 = vmax.xlane.f32.xlu0 %v3669
        %v3671 = vpop.xlane.xlu0 %3670
        %v3672 = vsub.f32 %v3642, %v3662
        %v3673 = vsub.f32 %v3647, %v3665
        %v3674 = vsub.f32 %v3652, %v3668
        %v3675 = vsub.f32 %v3657, %v3671
        %v3676 = vmul.f32 %v3672, 1.442695
        %v3677 = vpow.pop %v3676
        %v3678 = vmul.f32 %v3673, 1.442695
        %v3679 = vpow.pop %v3678
        %v3680 = vmul.f32 %v3674, 1.442695
        %v3681 = vpow.pop %v3680
        %v3682 = vmul.f32 %v3675, 1.442695
        %v3683 = vpow.pop %v3682
        %v3684 = vsel %vm264, %v3677, 0.0
        %3685 = vadd.xlane.f32.xlu0 %v3684
        %v3686 = vpop.xlane.xlu0 %3685
        %v3687 = vsel %vm264, %v3679, 0.0
        %3688 = vadd.xlane.f32.xlu0 %v3687
        %v3689 = vpop.xlane.xlu0 %3688
        %v3690 = vsel %vm264, %v3681, 0.0
        %3691 = vadd.xlane.f32.xlu0 %v3690
        %v3692 = vpop.xlane.xlu0 %3691
        %v3693 = vsel %vm264, %v3683, 0.0
        %3694 = vadd.xlane.f32.xlu0 %v3693
        %v3695 = vpop.xlane.xlu0 %3694
        %v3696 = vlog2.pop %v3686
        %v3697 = vmul.f32 %v3696, 0.6931472
        %v3698 = vlog2.pop %v3689
        %v3699 = vmul.f32 %v3698, 0.6931472
        %v3700 = vlog2.pop %v3692
        %v3701 = vmul.f32 %v3700, 0.6931472
        %v3702 = vlog2.pop %v3695
        %v3703 = vmul.f32 %v3702, 0.6931472
        %v3704 = vmul.f32 %v3677, %v3672
        %v3705 = vmul.f32 %v3679, %v3673
        %v3706 = vmul.f32 %v3681, %v3674
        %v3707 = vmul.f32 %v3683, %v3675
        %v3708 = vsel %vm264, %v3704, 0.0
        %3709 = vadd.xlane.f32.xlu0 %v3708
        %v3710 = vpop.xlane.xlu0 %3709
        %v3711 = vsel %vm264, %v3705, 0.0
        %3712 = vadd.xlane.f32.xlu0 %v3711
        %v3713 = vpop.xlane.xlu0 %3712
        %v3714 = vsel %vm264, %v3706, 0.0
        %3715 = vadd.xlane.f32.xlu0 %v3714
        %v3716 = vpop.xlane.xlu0 %3715
        %v3717 = vsel %vm264, %v3707, 0.0
        %3718 = vadd.xlane.f32.xlu0 %v3717
        %v3719 = vpop.xlane.xlu0 %3718
        %v3720 = vrcp.pop %v3686
        %v3721 = vmul.f32 %v3710, %v3720
        %v3722 = vrcp.pop %v3689
        %v3723 = vmul.f32 %v3713, %v3722
        %v3724 = vrcp.pop %v3692
        %v3725 = vmul.f32 %v3716, %v3724
        %v3726 = vrcp.pop %v3695
        %v3727 = vmul.f32 %v3719, %v3726
        %v3728 = vsub.f32 %v3697, %v3721
        %v3729 = vsub.f32 %v3699, %v3723
        %v3730 = vsub.f32 %v3701, %v3725
        %v3731 = vsub.f32 %v3703, %v3727
        %v3732 = vsub.f32 0.0, %v3697
        %v3733 = vsub.f32 0.0, %v3699
        %v3734 = vsub.f32 0.0, %v3701
        %v3735 = vsub.f32 0.0, %v3703
        %vm3736 = vcmp.ge.f32.partialorder %v3642, %v3662
        %vm3737 = vcmp.ge.f32.partialorder %v3647, %v3665
        %vm3738 = vcmp.ge.f32.partialorder %v3652, %v3668
        %vm3739 = vcmp.ge.f32.partialorder %v3657, %v3671
        %v3740 = vsel %vm3736, %v222, 16
        %v3741 = vsel %vm3737, %v222, 16
        %v3742 = vsel %vm3738, %v222, 16
        %v3743 = vsel %vm3739, %v222, 16
        %v3744 = vsel %vm264, %v3740, 2147483647
        %v3745 = vand.u32 %v3744, 65535
        %v3746 = vshra.s32 %v3744, 16
        %v3747 = vcvt.s32.f32 %v3745
        %v3748 = vcvt.s32.f32 %v3746
        %3749 = vmin.xlane.f32.xlu0 %v3748
        %v3750 = vpop.xlane.xlu0 %3749
        %vm3751 = vcmp.eq.f32.partialorder %v3748, %v3750
        %v3752 = vsel %vm3751, %v3747, inf
        %3753 = vmin.xlane.f32.xlu0 %v3752
        %v3754 = vpop.xlane.xlu0 %3753
        %v3755 = vcvt.f32.s32 %v3754
        %v3756 = vcvt.f32.s32 %v3750
        %v3757 = vshll.u32 %v3756, 16
        %v3758 = vadd.s32 %v3757, %v3755
        %v3759 = vsel %vm264, %v3741, 2147483647
        %v3760 = vand.u32 %v3759, 65535
        %v3761 = vshra.s32 %v3759, 16
        %v3762 = vcvt.s32.f32 %v3760
        %v3763 = vcvt.s32.f32 %v3761
        %3764 = vmin.xlane.f32.xlu0 %v3763
        %v3765 = vpop.xlane.xlu0 %3764
        %vm3766 = vcmp.eq.f32.partialorder %v3763, %v3765
        %v3767 = vsel %vm3766, %v3762, inf
        %3768 = vmin.xlane.f32.xlu0 %v3767
        %v3769 = vpop.xlane.xlu0 %3768
        %v3770 = vcvt.f32.s32 %v3769
        %v3771 = vcvt.f32.s32 %v3765
        %v3772 = vshll.u32 %v3771, 16
        %v3773 = vadd.s32 %v3772, %v3770
        %v3774 = vsel %vm264, %v3742, 2147483647
        %v3775 = vand.u32 %v3774, 65535
        %v3776 = vshra.s32 %v3774, 16
        %v3777 = vcvt.s32.f32 %v3775
        %v3778 = vcvt.s32.f32 %v3776
        %3779 = vmin.xlane.f32.xlu0 %v3778
        %v3780 = vpop.xlane.xlu0 %3779
        %vm3781 = vcmp.eq.f32.partialorder %v3778, %v3780
        %v3782 = vsel %vm3781, %v3777, inf
        %3783 = vmin.xlane.f32.xlu0 %v3782
        %v3784 = vpop.xlane.xlu0 %3783
        %v3785 = vcvt.f32.s32 %v3784
        %v3786 = vcvt.f32.s32 %v3780
        %v3787 = vshll.u32 %v3786, 16
        %v3788 = vadd.s32 %v3787, %v3785
        %v3789 = vsel %vm264, %v3743, 2147483647
        %v3790 = vand.u32 %v3789, 65535
        %v3791 = vshra.s32 %v3789, 16
        %v3792 = vcvt.s32.f32 %v3790
        %v3793 = vcvt.s32.f32 %v3791
        %3794 = vmin.xlane.f32.xlu0 %v3793
        %v3795 = vpop.xlane.xlu0 %3794
        %vm3796 = vcmp.eq.f32.partialorder %v3793, %v3795
        %v3797 = vsel %vm3796, %v3792, inf
        %3798 = vmin.xlane.f32.xlu0 %v3797
        %v3799 = vpop.xlane.xlu0 %3798
        %v3800 = vcvt.f32.s32 %v3799
        %v3801 = vcvt.f32.s32 %v3795
        %v3802 = vshll.u32 %v3801, 16
        %v3803 = vadd.s32 %v3802, %v3800
        %vm3804 = vcmp.eq.s32.totalorder %v222, %v3758
        %vm3805 = vcmp.eq.s32.totalorder %v222, %v3773
        %vm3806 = vcmp.eq.s32.totalorder %v222, %v3788
        %vm3807 = vcmp.eq.s32.totalorder %v222, %v3803
        %v3808 = vsel %vm3804, 1, 0
        %v3809 = vsel %vm3805, 1, 0
        %v3810 = vsel %vm3806, 1, 0
        %v3811 = vsel %vm3807, 1, 0
        %v3812 = vcvt.s32.f32 %v3808
        %v3813 = vcvt.s32.f32 %v3809
        %v3814 = vcvt.s32.f32 %v3810
        %v3815 = vcvt.s32.f32 %v3811
        %3816 = vrot.lane.b32.xlu0 %v3486, 16
        %v3817 = vpop.permute.xlu0 %3816
        %3818 = vrot.lane.b32.xlu0 %v3487, 16
        %v3819 = vpop.permute.xlu0 %3818
        %3820 = vrot.lane.b32.xlu0 %v3488, 16
        %v3821 = vpop.permute.xlu0 %3820
        %3822 = vrot.lane.b32.xlu0 %v3489, 16
        %v3823 = vpop.permute.xlu0 %3822
        %v3828 = vsel %vm264, %v3812, %v3817
        %v3829 = vsel %vm264, %v3813, %v3819
        %v3830 = vsel %vm264, %v3814, %v3821
        %v3831 = vsel %vm264, %v3815, %v3823
        %v3833 = vsel %vm750, %v3828, 0
        %v3836 = vsel %vm750, %v3829, 0
        %v3839 = vsel %vm750, %v3830, 0
        %v3842 = vsel %vm750, %v3831, 0
        %3844 = vmatprep.subr.mxu0 0.0
        %3845 = vmatpush1.msra.mxu0 %v225
        %3846 = vmatprep.subr.mxu0 0.0
        %3847 = vmatpush1.msra.mxu0 %v226
        %3848 = vmatprep.subr.mxu0 0.0
        %3849 = vmatpush1.msra.mxu0 %v227
        %3850 = vmatprep.subr.mxu0 0.0
        %3851 = vmatpush1.msra.mxu0 %v228
        %3852 = vmatprep.subr.mxu0 0.0
        %3853 = vmatpush1.msra.mxu0 %v229
        %3854 = vmatprep.subr.mxu0 0.0
        %3855 = vmatpush1.msra.mxu0 %v230
        %3856 = vmatprep.subr.mxu0 0.0
        %3857 = vmatpush1.msra.mxu0 %v231
        %3858 = vmatprep.subr.mxu0 0.0
        %3859 = vmatpush1.msra.mxu0 %v232
        %3860 = vmatprep.subr.mxu0 0.0
        %3861 = vmatpush1.msra.mxu0 %v233
        %3862 = vmatprep.subr.mxu0 0.0
        %3863 = vmatpush1.msra.mxu0 %v234
        %3864 = vmatprep.subr.mxu0 0.0
        %3865 = vmatpush1.msra.mxu0 0.0
        %3866 = vmatprep.subr.mxu0 0.0
        %3867 = vmatpush1.msra.mxu0 0.0
        %3868 = vmatprep.subr.mxu0 0.0
        %3869 = vmatpush1.msra.mxu0 0.0
        %3870 = vmatprep.subr.mxu0 0.0
        %3871 = vmatpush1.msra.mxu0 0.0
        %3872 = vmatprep.subr.mxu0 0.0
        %3873 = vmatpush1.msra.mxu0 0.0
        %3874 = vmatprep.subr.mxu0 0.0
        %3875 = vmatpush1.msra.mxu0 0.0
        %3876 = vmatprep.subr.mxu0 0.0
        %3877 = vmatpush1.msra.mxu0 0.0
        %3878 = vmatprep.subr.mxu0 0.0
        %3879 = vmatpush1.msra.mxu0 0.0
        %3880 = vmatprep.subr.mxu0 0.0
        %3881 = vmatpush1.msra.mxu0 0.0
        %3882 = vmatprep.subr.mxu0 0.0
        %3883 = vmatpush1.msra.mxu0 0.0
        %3884 = vmatprep.subr.mxu0 0.0
        %3885 = vmatpush1.msra.mxu0 0.0
        %3886 = vmatprep.subr.mxu0 0.0
        %3887 = vmatpush1.msra.mxu0 0.0
        %3888 = vmatprep.subr.mxu0 0.0
        %3889 = vmatpush1.msra.mxu0 0.0
        %3890 = vmatprep.subr.mxu0 0.0
        %3891 = vmatpush1.msra.mxu0 0.0
        %3892 = vmatprep.subr.mxu0 0.0
        %3893 = vmatpush1.msra.mxu0 0.0
        %3894 = vmatprep.subr.mxu0 0.0
        %3895 = vmatpush1.msra.mxu0 0.0
        %3896 = vmatprep.subr.mxu0 0.0
        %3897 = vmatpush1.msra.mxu0 0.0
        %3898 = vmatprep.subr.mxu0 0.0
        %3899 = vmatpush1.msra.mxu0 0.0
        %3900 = vmatprep.subr.mxu0 0.0
        %3901 = vmatpush1.msra.mxu0 0.0
        %3902 = vmatprep.subr.mxu0 0.0
        %3903 = vmatpush1.msra.mxu0 0.0
        %3904 = vmatprep.subr.mxu0 0.0
        %3905 = vmatpush1.msra.mxu0 0.0
        %3906 = vmatprep.subr.mxu0 0.0
        %3907 = vmatpush1.msra.mxu0 0.0
        %3908 = vmatprep.mubr.f32.mxu0 0.0
        %3909 = vmatmul.mubr.f32.gmra.mrb[0].mxu0 %v3833
        %v3910 = vpop.f32.mrb[0].mxu0
        %v3911 = vadd.f32 %v749, %v3910
        %v3912 = vpop.f32.mrb[0].mxu0
        %3913 = vmatprep.mubr.f32.mxu0 0.0
        %3914 = vmatmul.mubr.f32.gmra.mrb[0].mxu0 %v3836
        %v3915 = vpop.f32.mrb[0].mxu0
        %v3916 = vadd.f32 %v749, %v3915
        %v3917 = vpop.f32.mrb[0].mxu0
        %3918 = vmatprep.mubr.f32.mxu0 0.0
        %3919 = vmatmul.mubr.f32.gmra.mrb[0].mxu0 %v3839
        %v3920 = vpop.f32.mrb[0].mxu0
        %v3921 = vadd.f32 %v749, %v3920
        %v3922 = vpop.f32.mrb[0].mxu0
        %3923 = vmatprep.mubr.f32.mxu0 0.0
        %3924 = vmatmul.mubr.f32.gmra.mrb[0].mxu0 %v3842
        %v3925 = vpop.f32.mrb[0].mxu0
        %v3926 = vadd.f32 %v749, %v3925
        %v3927 = vpop.f32.mrb[0].mxu0
        %3928 = vdwg.mxu0
        %v3929 = vtanh.pop %v3911
        %v3930 = vtanh.pop %v3916
        %v3931 = vtanh.pop %v3921
        %v3932 = vtanh.pop %v3926
        %v3933 = vsub.f32 1.0, %v3546
        %v3934 = vsub.f32 1.0, %v3547
        %v3935 = vsub.f32 1.0, %v3548
        %v3936 = vsub.f32 1.0, %v3549
        %v3937 = vmul.f32 %v3728, %v3933
        %v3938 = vmul.f32 %v3729, %v3934
        %v3939 = vmul.f32 %v3730, %v3935
        %v3940 = vmul.f32 %v3731, %v3936
        %v3941 = vadd.f32 %v3498, %v3937
        %v3942 = vadd.f32 %v3499, %v3938
        %v3943 = vadd.f32 %v3500, %v3939
        %v3944 = vadd.f32 %v3501, %v3940
        %v3945 = vmul.f32 %v3732, %v3933
        %v3946 = vmul.f32 %v3733, %v3934
        %v3947 = vmul.f32 %v3734, %v3935
        %v3948 = vmul.f32 %v3735, %v3936
        %v3949 = vadd.f32 %v3506, %v3945
        %v3950 = vadd.f32 %v3507, %v3946
        %v3951 = vadd.f32 %v3508, %v3947
        %v3952 = vadd.f32 %v3509, %v3948
        %v3953 = vadd.f32 %v3510, %v3933
        %v3954 = vadd.f32 %v3511, %v3934
        %v3955 = vadd.f32 %v3512, %v3935
        %v3956 = vadd.f32 %v3513, %v3936
        %3958 = vset.pattern.permute.xlu0 0
        %3959 = vperm.xlu0 %3958, %v3933
        %v3960 = vpop.permute.xlu0 %3959
        %3963 = vset.pattern.permute.xlu0 0
        %3964 = vperm.xlu0 %3963, %v3934
        %v3965 = vpop.permute.xlu0 %3964
        %3968 = vset.pattern.permute.xlu0 0
        %3969 = vperm.xlu0 %3968, %v3935
        %v3970 = vpop.permute.xlu0 %3969
        %3973 = vset.pattern.permute.xlu0 0
        %3974 = vperm.xlu0 %3973, %v3936
        %v3975 = vpop.permute.xlu0 %3974
        %v3977 = vmul.f32 %v3960, %v3929
        %v3978 = vmul.f32 %v3965, %v3930
        %v3979 = vmul.f32 %v3970, %v3931
        %v3980 = vmul.f32 %v3975, %v3932
        %v3981 = vadd.f32 %v3542, %v3977
        %v3982 = vadd.f32 %v3543, %v3978
        %v3983 = vadd.f32 %v3544, %v3979
        %v3984 = vadd.f32 %v3545, %v3980
        %vm3985 = vcmp.eq.s32.totalorder %v222, 7
        %v3986 = vcvt.s32.f32 %v3758
        %v3987 = vcvt.s32.f32 %v3773
        %v3988 = vcvt.s32.f32 %v3788
        %v3989 = vcvt.s32.f32 %v3803
        %v3990 = vsel %vm3985, %v3986, %v3555
        %v3991 = vsel %vm3985, %v3987, %v3556
        %v3992 = vsel %vm3985, %v3988, %v3557
        %v3993 = vsel %vm3985, %v3989, %v3558
        %v3994 = vsel %vm3985, %v3728, %v3559
        %v3995 = vsel %vm3985, %v3729, %v3560
        %v3996 = vsel %vm3985, %v3730, %v3561
        %v3997 = vsel %vm3985, %v3731, %v3562
        %v3998 = vlaneseq
        %v3999 = vshrl.u32 %v3998, 7
        %v4000 = vsub.s32 0, %v3999
        %v4001 = vrot.slane %v255, %v4000
        %v4003 = vsel %vm476, %v3981, 0
        %v4006 = vsel %vm476, %v3982, 0
        %v4009 = vsel %vm476, %v3983, 0
        %v4012 = vsel %vm476, %v3984, 0
        %4014 = vmatprep.subr.mxu0 0.0
        %4015 = vmatpush1.msra.mxu0 %v243
        %4016 = vmatprep.subr.mxu0 0.0
        %4017 = vmatpush1.msra.mxu0 %v244
        %4018 = vmatprep.subr.mxu0 0.0
        %4019 = vmatpush1.msra.mxu0 %v245
        %4020 = vmatprep.subr.mxu0 0.0
        %4021 = vmatpush1.msra.mxu0 %v246
        %4022 = vmatprep.subr.mxu0 0.0
        %4023 = vmatpush1.msra.mxu0 %v247
        %4024 = vmatprep.subr.mxu0 0.0
        %4025 = vmatpush1.msra.mxu0 %v248
        %4026 = vmatprep.subr.mxu0 0.0
        %4027 = vmatpush1.msra.mxu0 %v249
        %4028 = vmatprep.subr.mxu0 0.0
        %4029 = vmatpush1.msra.mxu0 %v250
        %4030 = vmatprep.subr.mxu0 0.0
        %4031 = vmatpush1.msra.mxu0 0.0
        %4032 = vmatprep.subr.mxu0 0.0
        %4033 = vmatpush1.msra.mxu0 0.0
        %4034 = vmatprep.subr.mxu0 0.0
        %4035 = vmatpush1.msra.mxu0 0.0
        %4036 = vmatprep.subr.mxu0 0.0
        %4037 = vmatpush1.msra.mxu0 0.0
        %4038 = vmatprep.subr.mxu0 0.0
        %4039 = vmatpush1.msra.mxu0 0.0
        %4040 = vmatprep.subr.mxu0 0.0
        %4041 = vmatpush1.msra.mxu0 0.0
        %4042 = vmatprep.subr.mxu0 0.0
        %4043 = vmatpush1.msra.mxu0 0.0
        %4044 = vmatprep.subr.mxu0 0.0
        %4045 = vmatpush1.msra.mxu0 0.0
        %4046 = vmatprep.subr.mxu0 0.0
        %4047 = vmatpush1.msra.mxu0 0.0
        %4048 = vmatprep.subr.mxu0 0.0
        %4049 = vmatpush1.msra.mxu0 0.0
        %4050 = vmatprep.subr.mxu0 0.0
        %4051 = vmatpush1.msra.mxu0 0.0
        %4052 = vmatprep.subr.mxu0 0.0
        %4053 = vmatpush1.msra.mxu0 0.0
        %4054 = vmatprep.subr.mxu0 0.0
        %4055 = vmatpush1.msra.mxu0 0.0
        %4056 = vmatprep.subr.mxu0 0.0
        %4057 = vmatpush1.msra.mxu0 0.0
        %4058 = vmatprep.subr.mxu0 0.0
        %4059 = vmatpush1.msra.mxu0 0.0
        %4060 = vmatprep.subr.mxu0 0.0
        %4061 = vmatpush1.msra.mxu0 0.0
        %4062 = vmatprep.subr.mxu0 0.0
        %4063 = vmatpush1.msra.mxu0 0.0
        %4064 = vmatprep.subr.mxu0 0.0
        %4065 = vmatpush1.msra.mxu0 0.0
        %4066 = vmatprep.subr.mxu0 0.0
        %4067 = vmatpush1.msra.mxu0 0.0
        %4068 = vmatprep.subr.mxu0 0.0
        %4069 = vmatpush1.msra.mxu0 0.0
        %4070 = vmatprep.subr.mxu0 0.0
        %4071 = vmatpush1.msra.mxu0 0.0
        %4072 = vmatprep.subr.mxu0 0.0
        %4073 = vmatpush1.msra.mxu0 0.0
        %4074 = vmatprep.subr.mxu0 0.0
        %4075 = vmatpush1.msra.mxu0 0.0
        %4076 = vmatprep.subr.mxu0 0.0
        %4077 = vmatpush1.msra.mxu0 0.0
        %4078 = vmatprep.mubr.f32.mxu0 0.0
        %4079 = vmatmul.mubr.f32.gmra.mrb[0].mxu0 %v4003
        %v4080 = vpop.f32.mrb[0].mxu0
        %v4081 = vadd.f32 %v4001, %v4080
        %v4082 = vpop.f32.mrb[0].mxu0
        %4083 = vmatprep.mubr.f32.mxu0 0.0
        %4084 = vmatmul.mubr.f32.gmra.mrb[0].mxu0 %v4006
        %v4085 = vpop.f32.mrb[0].mxu0
        %v4086 = vadd.f32 %v4001, %v4085
        %v4087 = vpop.f32.mrb[0].mxu0
        %4088 = vmatprep.mubr.f32.mxu0 0.0
        %4089 = vmatmul.mubr.f32.gmra.mrb[0].mxu0 %v4009
        %v4090 = vpop.f32.mrb[0].mxu0
        %v4091 = vadd.f32 %v4001, %v4090
        %v4092 = vpop.f32.mrb[0].mxu0
        %4093 = vmatprep.mubr.f32.mxu0 0.0
        %4094 = vmatmul.mubr.f32.gmra.mrb[0].mxu0 %v4012
        %v4095 = vpop.f32.mrb[0].mxu0
        %v4096 = vadd.f32 %v4001, %v4095
        %v4097 = vpop.f32.mrb[0].mxu0
        %4098 = vdwg.mxu0
        %v4099 = vld [vmem:[%s218] sm:$0xff]
        %v4100 = vld [vmem:[%s218 + $0x8] sm:$0xff]
        %v4101 = vld [vmem:[%s218 + $0x10] sm:$0xff]
        %v4102 = vld [vmem:[%s218 + $0x18] sm:$0xff]
        %4103 = vset.pattern.permute.xlu0 0
        %4104 = vperm.xlu0 %4103, %v4099
        %v4105 = vpop.permute.xlu0 %4104
        %4106 = vset.pattern.permute.xlu0 0
        %4107 = vperm.xlu0 %4106, %v4100
        %v4108 = vpop.permute.xlu0 %4107
        %4109 = vset.pattern.permute.xlu0 0
        %4110 = vperm.xlu0 %4109, %v4101
        %v4111 = vpop.permute.xlu0 %4110
        %4112 = vset.pattern.permute.xlu0 0
        %4113 = vperm.xlu0 %4112, %v4102
        %v4114 = vpop.permute.xlu0 %4113
        %vm4115 = vcmp.eq.s32.totalorder %v222, %v4105
        %vm4116 = vcmp.eq.s32.totalorder %v222, %v4108
        %vm4117 = vcmp.eq.s32.totalorder %v222, %v4111
        %vm4118 = vcmp.eq.s32.totalorder %v222, %v4114
        %v4119 = vsel %vm4115, 1, 0
        %v4120 = vsel %vm4116, 1, 0
        %v4121 = vsel %vm4117, 1, 0
        %v4122 = vsel %vm4118, 1, 0
        %v4123 = vcvt.s32.f32 %v4119
        %v4124 = vcvt.s32.f32 %v4120
        %v4125 = vcvt.s32.f32 %v4121
        %v4126 = vcvt.s32.f32 %v4122
        %v4127 = vsel %vm264, %v4081, -inf
        %4128 = vmax.xlane.f32.xlu0 %v4127
        %v4129 = vpop.xlane.xlu0 %4128
        %v4130 = vsel %vm264, %v4086, -inf
        %4131 = vmax.xlane.f32.xlu0 %v4130
        %v4132 = vpop.xlane.xlu0 %4131
        %v4133 = vsel %vm264, %v4091, -inf
        %4134 = vmax.xlane.f32.xlu0 %v4133
        %v4135 = vpop.xlane.xlu0 %4134
        %v4136 = vsel %vm264, %v4096, -inf
        %4137 = vmax.xlane.f32.xlu0 %v4136
        %v4138 = vpop.xlane.xlu0 %4137
        %v4139 = vsub.f32 %v4081, %v4129
        %v4140 = vsub.f32 %v4086, %v4132
        %v4141 = vsub.f32 %v4091, %v4135
        %v4142 = vsub.f32 %v4096, %v4138
        %v4143 = vmul.f32 %v4139, 1.442695
        %v4144 = vpow.pop %v4143
        %v4145 = vmul.f32 %v4140, 1.442695
        %v4146 = vpow.pop %v4145
        %v4147 = vmul.f32 %v4141, 1.442695
        %v4148 = vpow.pop %v4147
        %v4149 = vmul.f32 %v4142, 1.442695
        %v4150 = vpow.pop %v4149
        %v4151 = vsel %vm264, %v4144, 0.0
        %4152 = vadd.xlane.f32.xlu0 %v4151
        %v4153 = vpop.xlane.xlu0 %4152
        %v4154 = vsel %vm264, %v4146, 0.0
        %4155 = vadd.xlane.f32.xlu0 %v4154
        %v4156 = vpop.xlane.xlu0 %4155
        %v4157 = vsel %vm264, %v4148, 0.0
        %4158 = vadd.xlane.f32.xlu0 %v4157
        %v4159 = vpop.xlane.xlu0 %4158
        %v4160 = vsel %vm264, %v4150, 0.0
        %4161 = vadd.xlane.f32.xlu0 %v4160
        %v4162 = vpop.xlane.xlu0 %4161
        %v4163 = vlog2.pop %v4153
        %v4164 = vmul.f32 %v4163, 0.6931472
        %v4165 = vlog2.pop %v4156
        %v4166 = vmul.f32 %v4165, 0.6931472
        %v4167 = vlog2.pop %v4159
        %v4168 = vmul.f32 %v4167, 0.6931472
        %v4169 = vlog2.pop %v4162
        %v4170 = vmul.f32 %v4169, 0.6931472
        %v4171 = vsub.f32 %v4139, %v4164
        %v4172 = vsub.f32 %v4140, %v4166
        %v4173 = vsub.f32 %v4141, %v4168
        %v4174 = vsub.f32 %v4142, %v4170
        %v4175 = vmul.f32 %v4123, %v4171
        %v4176 = vmul.f32 %v4124, %v4172
        %v4177 = vmul.f32 %v4125, %v4173
        %v4178 = vmul.f32 %v4126, %v4174
        %v4179 = vsel %vm264, %v4175, 0.0
        %4180 = vadd.xlane.f32.xlu0 %v4179
        %v4181 = vpop.xlane.xlu0 %4180
        %v4182 = vsel %vm264, %v4176, 0.0
        %4183 = vadd.xlane.f32.xlu0 %v4182
        %v4184 = vpop.xlane.xlu0 %4183
        %v4185 = vsel %vm264, %v4177, 0.0
        %4186 = vadd.xlane.f32.xlu0 %v4185
        %v4187 = vpop.xlane.xlu0 %4186
        %v4188 = vsel %vm264, %v4178, 0.0
        %4189 = vadd.xlane.f32.xlu0 %v4188
        %v4190 = vpop.xlane.xlu0 %4189
        %v4191 = vsub.f32 0.0, %v4181
        %v4192 = vsub.f32 0.0, %v4184
        %v4193 = vsub.f32 0.0, %v4187
        %v4194 = vsub.f32 0.0, %v4190
        %vm4195 = vcmp.ge.f32.partialorder %v4081, %v4129
        %vm4196 = vcmp.ge.f32.partialorder %v4086, %v4132
        %vm4197 = vcmp.ge.f32.partialorder %v4091, %v4135
        %vm4198 = vcmp.ge.f32.partialorder %v4096, %v4138
        %v4199 = vsel %vm4195, %v222, 16
        %v4200 = vsel %vm4196, %v222, 16
        %v4201 = vsel %vm4197, %v222, 16
        %v4202 = vsel %vm4198, %v222, 16
        %v4203 = vsel %vm264, %v4199, 2147483647
        %v4204 = vand.u32 %v4203, 65535
        %v4205 = vshra.s32 %v4203, 16
        %v4206 = vcvt.s32.f32 %v4204
        %v4207 = vcvt.s32.f32 %v4205
        %4208 = vmin.xlane.f32.xlu0 %v4207
        %v4209 = vpop.xlane.xlu0 %4208
        %vm4210 = vcmp.eq.f32.partialorder %v4207, %v4209
        %v4211 = vsel %vm4210, %v4206, inf
        %4212 = vmin.xlane.f32.xlu0 %v4211
        %v4213 = vpop.xlane.xlu0 %4212
        %v4214 = vcvt.f32.s32 %v4213
        %v4215 = vcvt.f32.s32 %v4209
        %v4216 = vshll.u32 %v4215, 16
        %v4217 = vadd.s32 %v4216, %v4214
        %v4218 = vsel %vm264, %v4200, 2147483647
        %v4219 = vand.u32 %v4218, 65535
        %v4220 = vshra.s32 %v4218, 16
        %v4221 = vcvt.s32.f32 %v4219
        %v4222 = vcvt.s32.f32 %v4220
        %4223 = vmin.xlane.f32.xlu0 %v4222
        %v4224 = vpop.xlane.xlu0 %4223
        %vm4225 = vcmp.eq.f32.partialorder %v4222, %v4224
        %v4226 = vsel %vm4225, %v4221, inf
        %4227 = vmin.xlane.f32.xlu0 %v4226
        %v4228 = vpop.xlane.xlu0 %4227
        %v4229 = vcvt.f32.s32 %v4228
        %v4230 = vcvt.f32.s32 %v4224
        %v4231 = vshll.u32 %v4230, 16
        %v4232 = vadd.s32 %v4231, %v4229
        %v4233 = vsel %vm264, %v4201, 2147483647
        %v4234 = vand.u32 %v4233, 65535
        %v4235 = vshra.s32 %v4233, 16
        %v4236 = vcvt.s32.f32 %v4234
        %v4237 = vcvt.s32.f32 %v4235
        %4238 = vmin.xlane.f32.xlu0 %v4237
        %v4239 = vpop.xlane.xlu0 %4238
        %vm4240 = vcmp.eq.f32.partialorder %v4237, %v4239
        %v4241 = vsel %vm4240, %v4236, inf
        %4242 = vmin.xlane.f32.xlu0 %v4241
        %v4243 = vpop.xlane.xlu0 %4242
        %v4244 = vcvt.f32.s32 %v4243
        %v4245 = vcvt.f32.s32 %v4239
        %v4246 = vshll.u32 %v4245, 16
        %v4247 = vadd.s32 %v4246, %v4244
        %v4248 = vsel %vm264, %v4202, 2147483647
        %v4249 = vand.u32 %v4248, 65535
        %v4250 = vshra.s32 %v4248, 16
        %v4251 = vcvt.s32.f32 %v4249
        %v4252 = vcvt.s32.f32 %v4250
        %4253 = vmin.xlane.f32.xlu0 %v4252
        %v4254 = vpop.xlane.xlu0 %4253
        %vm4255 = vcmp.eq.f32.partialorder %v4252, %v4254
        %v4256 = vsel %vm4255, %v4251, inf
        %4257 = vmin.xlane.f32.xlu0 %v4256
        %v4258 = vpop.xlane.xlu0 %4257
        %v4259 = vcvt.f32.s32 %v4258
        %v4260 = vcvt.f32.s32 %v4254
        %v4261 = vshll.u32 %v4260, 16
        %v4262 = vadd.s32 %v4261, %v4259
        %vm4263 = vcmp.eq.s32.totalorder %v4217, %v4099
        %vm4264 = vcmp.eq.s32.totalorder %v4232, %v4100
        %vm4265 = vcmp.eq.s32.totalorder %v4247, %v4101
        %vm4266 = vcmp.eq.s32.totalorder %v4262, %v4102
        %v4267 = vsel %vm4263, 1, 0
        %v4268 = vsel %vm4264, 1, 0
        %v4269 = vsel %vm4265, 1, 0
        %v4270 = vsel %vm4266, 1, 0
        %v4271 = vcvt.s32.f32 %v4267
        %v4272 = vcvt.s32.f32 %v4268
        %v4273 = vcvt.s32.f32 %v4269
        %v4274 = vcvt.s32.f32 %v4270
        %v4275 = vrcp.pop %v3953
        %v4276 = vmul.f32 %v3941, %v4275
        %v4277 = vrcp.pop %v3954
        %v4278 = vmul.f32 %v3942, %v4277
        %v4279 = vrcp.pop %v3955
        %v4280 = vmul.f32 %v3943, %v4279
        %v4281 = vrcp.pop %v3956
        %v4282 = vmul.f32 %v3944, %v4281
        %v4283 = vmul.f32 %v4276, %v4191
        %v4284 = vmul.f32 %v4278, %v4192
        %v4285 = vmul.f32 %v4280, %v4193
        %v4286 = vmul.f32 %v4282, %v4194
        %v4287 = vadd.f32 %v3949, 0.0
        %v4288 = vadd.f32 %v3950, 0.0
        %v4289 = vadd.f32 %v3951, 0.0
        %v4290 = vadd.f32 %v3952, 0.0
        %v4291 = vmul.f32 %v4191, %v4287
        %v4292 = vmul.f32 %v4192, %v4288
        %v4293 = vmul.f32 %v4193, %v4289
        %v4294 = vmul.f32 %v4194, %v4290
        %v4295 = vadd.f32 %v4191, %v4291
        %v4296 = vadd.f32 %v4192, %v4292
        %v4297 = vadd.f32 %v4193, %v4293
        %v4298 = vadd.f32 %v4194, %v4294
        %v4299 = vmul.f32 %v3949, 0.0
        %v4300 = vmul.f32 %v3950, 0.0
        %v4301 = vmul.f32 %v3951, 0.0
        %v4302 = vmul.f32 %v3952, 0.0
        %v4303 = vadd.f32 %v4295, %v4299
        %v4304 = vadd.f32 %v4296, %v4300
        %v4305 = vadd.f32 %v4297, %v4301
        %v4306 = vadd.f32 %v4298, %v4302
        %v4307 = vmul.f32 %v4283, 0.1
        %v4308 = vmul.f32 %v4284, 0.1
        %v4309 = vmul.f32 %v4285, 0.1
        %v4310 = vmul.f32 %v4286, 0.1
        %v4311 = vsub.f32 %v4303, %v4307
        %v4312 = vsub.f32 %v4304, %v4308
        %v4313 = vsub.f32 %v4305, %v4309
        %v4314 = vsub.f32 %v4306, %v4310
        %vm4315 = vcmask 7168
        %v4316 = vsel %vm4315, %v4191, 0.0
        %v4317 = vsel %vm4315, %v4192, 0.0
        %v4318 = vadd.f32 %v4316, %v4317
        %v4319 = vsel %vm4315, %v4193, 0.0
        %v4320 = vadd.f32 %v4318, %v4319
        %v4321 = vsel %vm4315, %v4194, 0.0
        %v4322 = vadd.f32 %v4320, %v4321
        %4323 = vadd.xlane.f32.xlu0 %v4322
        %v4324 = vpop.xlane.xlu0 %4323
        %v4325 = vrot.slane %v4324, 4
        %v4326 = vadd.f32 %v4324, %v4325
        %v4327 = vrot.slane %v4326, 2
        %v4328 = vadd.f32 %v4326, %v4327
        %v4329 = vrot.slane %v4328, 1
        %v4330 = vadd.f32 %v4328, %v4329
        %s4331 = vtos %v4330
        %v4332 = vstv %s4331
        %v4333 = vsel %vm4315, %v4271, 0.0
        %v4334 = vsel %vm4315, %v4272, 0.0
        %v4335 = vadd.f32 %v4333, %v4334
        %v4336 = vsel %vm4315, %v4273, 0.0
        %v4337 = vadd.f32 %v4335, %v4336
        %v4338 = vsel %vm4315, %v4274, 0.0
        %v4339 = vadd.f32 %v4337, %v4338
        %4340 = vadd.xlane.f32.xlu0 %v4339
        %v4341 = vpop.xlane.xlu0 %4340
        %v4342 = vrot.slane %v4341, 4
        %v4343 = vadd.f32 %v4341, %v4342
        %v4344 = vrot.slane %v4343, 2
        %v4345 = vadd.f32 %v4343, %v4344
        %v4346 = vrot.slane %v4345, 1
        %v4347 = vadd.f32 %v4345, %v4346
        %s4348 = vtos %v4347
        %v4349 = vstv %s4348
        %vm4350 = vcmask 64512
        %v4351 = vsel %vm4350, %v3994, 0.0
        %v4352 = vsel %vm4350, %v3995, 0.0
        %v4353 = vadd.f32 %v4351, %v4352
        %v4354 = vsel %vm4350, %v3996, 0.0
        %v4355 = vadd.f32 %v4353, %v4354
        %v4356 = vsel %vm4350, %v3997, 0.0
        %v4357 = vadd.f32 %v4355, %v4356
        %4358 = vadd.xlane.f32.xlu0 %v4357
        %v4359 = vpop.xlane.xlu0 %4358
        %v4360 = vrot.slane %v4359, 4
        %v4361 = vadd.f32 %v4359, %v4360
        %v4362 = vrot.slane %v4361, 2
        %v4363 = vadd.f32 %v4361, %v4362
        %v4364 = vrot.slane %v4363, 1
        %v4365 = vadd.f32 %v4363, %v4364
        %s4366 = vtos %v4365
        %v4367 = vstv %s4366
        %v4368 = vsel %vm4315, %v3953, 0.0
        %v4369 = vsel %vm4315, %v3954, 0.0
        %v4370 = vadd.f32 %v4368, %v4369
        %v4371 = vsel %vm4315, %v3955, 0.0
        %v4372 = vadd.f32 %v4370, %v4371
        %v4373 = vsel %vm4315, %v3956, 0.0
        %v4374 = vadd.f32 %v4372, %v4373
        %4375 = vadd.xlane.f32.xlu0 %v4374
        %v4376 = vpop.xlane.xlu0 %4375
        %v4377 = vrot.slane %v4376, 4
        %v4378 = vadd.f32 %v4376, %v4377
        %v4379 = vrot.slane %v4378, 2
        %v4380 = vadd.f32 %v4378, %v4379
        %v4381 = vrot.slane %v4380, 1
        %v4382 = vadd.f32 %v4380, %v4381
        %s4383 = vtos %v4382
        %v4384 = vstv %s4383
        %4385 = vadd.xlane.f32.xlu0 0.0
        %v4386 = vpop.xlane.xlu0 %4385
        %v4387 = vrot.slane %v4386, 4
        %v4388 = vadd.f32 %v4386, %v4387
        %v4389 = vrot.slane %v4388, 2
        %v4390 = vadd.f32 %v4388, %v4389
        %v4391 = vrot.slane %v4390, 1
        %v4392 = vadd.f32 %v4390, %v4391
        %s4393 = vtos %v4392
        %v4394 = vstv %s4393
        %v4395 = vsel %vm4315, %v4311, 0.0
        %v4396 = vsel %vm4315, %v4312, 0.0
        %v4397 = vadd.f32 %v4395, %v4396
        %v4398 = vsel %vm4315, %v4313, 0.0
        %v4399 = vadd.f32 %v4397, %v4398
        %v4400 = vsel %vm4315, %v4314, 0.0
        %v4401 = vadd.f32 %v4399, %v4400
        %4402 = vadd.xlane.f32.xlu0 %v4401
        %v4403 = vpop.xlane.xlu0 %4402
        %v4404 = vrot.slane %v4403, 4
        %v4405 = vadd.f32 %v4403, %v4404
        %v4406 = vrot.slane %v4405, 2
        %v4407 = vadd.f32 %v4405, %v4406
        %v4408 = vrot.slane %v4407, 1
        %v4409 = vadd.f32 %v4407, %v4408
        %s4410 = vtos %v4409
        %v4411 = vstv %s4410
        %4416 = vrot.lane.b32.xlu0 %v3994, 8
        %v4417 = vpop.permute.xlu0 %4416
        %4418 = vrot.lane.b32.xlu0 %v3995, 8
        %v4419 = vpop.permute.xlu0 %4418
        %4420 = vrot.lane.b32.xlu0 %v3996, 8
        %v4421 = vpop.permute.xlu0 %4420
        %4422 = vrot.lane.b32.xlu0 %v3997, 8
        %v4423 = vpop.permute.xlu0 %4422
        %4432 = vrot.lane.b32.xlu0 %v4283, 17
        %v4433 = vpop.permute.xlu0 %4432
        %4434 = vrot.lane.b32.xlu0 %v4284, 17
        %v4435 = vpop.permute.xlu0 %4434
        %4436 = vrot.lane.b32.xlu0 %v4285, 17
        %v4437 = vpop.permute.xlu0 %4436
        %4438 = vrot.lane.b32.xlu0 %v4286, 17
        %v4439 = vpop.permute.xlu0 %4438
        %4448 = vrot.lane.b32.xlu0 %v3949, 18
        %v4449 = vpop.permute.xlu0 %4448
        %4450 = vrot.lane.b32.xlu0 %v3950, 18
        %v4451 = vpop.permute.xlu0 %4450
        %4452 = vrot.lane.b32.xlu0 %v3951, 18
        %v4453 = vpop.permute.xlu0 %4452
        %4454 = vrot.lane.b32.xlu0 %v3952, 18
        %v4455 = vpop.permute.xlu0 %4454
        %4464 = vrot.lane.b32.xlu0 %v3953, 21
        %v4465 = vpop.permute.xlu0 %4464
        %4466 = vrot.lane.b32.xlu0 %v3954, 21
        %v4467 = vpop.permute.xlu0 %4466
        %4468 = vrot.lane.b32.xlu0 %v3955, 21
        %v4469 = vpop.permute.xlu0 %4468
        %4470 = vrot.lane.b32.xlu0 %v3956, 21
        %v4471 = vpop.permute.xlu0 %4470
        %4480 = vrot.lane.b32.xlu0 %v4271, 22
        %v4481 = vpop.permute.xlu0 %4480
        %4482 = vrot.lane.b32.xlu0 %v4272, 22
        %v4483 = vpop.permute.xlu0 %4482
        %4484 = vrot.lane.b32.xlu0 %v4273, 22
        %v4485 = vpop.permute.xlu0 %4484
        %4486 = vrot.lane.b32.xlu0 %v4274, 22
        %v4487 = vpop.permute.xlu0 %4486
        %v4492 = vsel %vm4350, %v3990, %v4417
        %v4493 = vsel %vm4350, %v3991, %v4419
        %v4494 = vsel %vm4350, %v3992, %v4421
        %v4495 = vsel %vm4350, %v3993, %v4423
        %v4496 = vsel %vm264, %v4492, %v4191
        %v4497 = vsel %vm264, %v4493, %v4192
        %v4498 = vsel %vm264, %v4494, %v4193
        %v4499 = vsel %vm264, %v4495, %v4194
        %vm4500 = vcmask 138240
        %v4501 = vsel %vm4500, %v4496, %v4433
        %v4502 = vsel %vm4500, %v4497, %v4435
        %v4503 = vsel %vm4500, %v4498, %v4437
        %v4504 = vsel %vm4500, %v4499, %v4439
        %vm4505 = vcmask 146432
        %v4506 = vsel %vm4505, %v4501, %v4449
        %v4507 = vsel %vm4505, %v4502, %v4451
        %v4508 = vsel %vm4505, %v4503, %v4453
        %v4509 = vsel %vm4505, %v4504, %v4455
        %vm4510 = vcmask 154624
        %v4511 = vsel %vm4510, %v4506, 0.0
        %v4512 = vsel %vm4510, %v4507, 0.0
        %v4513 = vsel %vm4510, %v4508, 0.0
        %v4514 = vsel %vm4510, %v4509, 0.0
        %vm4515 = vcmask 162816
        %v4516 = vsel %vm4515, %v4511, 0.0
        %v4517 = vsel %vm4515, %v4512, 0.0
        %v4518 = vsel %vm4515, %v4513, 0.0
        %v4519 = vsel %vm4515, %v4514, 0.0
        %vm4520 = vcmask 171008
        %v4521 = vsel %vm4520, %v4516, %v4465
        %v4522 = vsel %vm4520, %v4517, %v4467
        %v4523 = vsel %vm4520, %v4518, %v4469
        %v4524 = vsel %vm4520, %v4519, %v4471
        %vm4525 = vcmask 179200
        %v4526 = vsel %vm4525, %v4521, %v4481
        %v4527 = vsel %vm4525, %v4522, %v4483
        %v4528 = vsel %vm4525, %v4523, %v4485
        %v4529 = vsel %vm4525, %v4524, %v4487
        %vm4530 = vcmask 187392
        %v4531 = vsel %vm4530, %v4526, 0.0
        %v4532 = vsel %vm4530, %v4527, 0.0
        %v4533 = vsel %vm4530, %v4528, 0.0
        %v4534 = vsel %vm4530, %v4529, 0.0
        %vm4535 = vcmask 195584
        %v4536 = vsel %vm4535, %v4531, %v4332
        %v4537 = vsel %vm4535, %v4532, %v4332
        %v4538 = vsel %vm4535, %v4533, %v4332
        %v4539 = vsel %vm4535, %v4534, %v4332
        %vm4540 = vcmask 203776
        %v4541 = vsel %vm4540, %v4536, %v4349
        %v4542 = vsel %vm4540, %v4537, %v4349
        %v4543 = vsel %vm4540, %v4538, %v4349
        %v4544 = vsel %vm4540, %v4539, %v4349
        %vm4545 = vcmask 211968
        %v4546 = vsel %vm4545, %v4541, %v4367
        %v4547 = vsel %vm4545, %v4542, %v4367
        %v4548 = vsel %vm4545, %v4543, %v4367
        %v4549 = vsel %vm4545, %v4544, %v4367
        %vm4550 = vcmask 220160
        %v4551 = vsel %vm4550, %v4546, %v4384
        %v4552 = vsel %vm4550, %v4547, %v4384
        %v4553 = vsel %vm4550, %v4548, %v4384
        %v4554 = vsel %vm4550, %v4549, %v4384
        %vm4555 = vcmask 228352
        %v4556 = vsel %vm4555, %v4551, %v4394
        %v4557 = vsel %vm4555, %v4552, %v4394
        %v4558 = vsel %vm4555, %v4553, %v4394
        %v4559 = vsel %vm4555, %v4554, %v4394
        %vm4560 = vcmask 236544
        %v4561 = vsel %vm4560, %v4556, %v4411
        %v4562 = vsel %vm4560, %v4557, %v4411
        %v4563 = vsel %vm4560, %v4558, %v4411
        %v4564 = vsel %vm4560, %v4559, %v4411
        %vm4565 = vcmask 244736
        %v4566 = vsel %vm4565, %v4561, 0.0
        %v4567 = vsel %vm4565, %v4562, 0.0
        %v4568 = vsel %vm4565, %v4563, 0.0
        %v4569 = vsel %vm4565, %v4564, 0.0
        %4570 = vst [vmem:[%s207] sm:$0xff] %v4566
        %4571 = vst [vmem:[%s207 + $0x8] sm:$0xff] %v4567
        %4572 = vst [vmem:[%s207 + $0x10] sm:$0xff] %v4568
        %4573 = vst [vmem:[%s207 + $0x18] sm:$0xff] %v4569
        %s4574 = sand.u32 %s120, 1
        %s4575 = scalar_lea.sflag [#allocation3], %s4574
        %s4576 = sand.u32 %s120, 1
        %s4577 = smul.addr %s4576, 32
        %s4578 = scalar_lea.vmem [#allocation2], %s4577
        // Predicated region
        $region37: #{tpu_custom_call.1} parent=35 // pred_check
          %p4579 = pneg %p130
        $region38: #{tpu_custom_call.1} parent=35 // pred_check_branch
          %4581 = sbr.rel (%p4579) target = $region40
        $region39: #{tpu_custom_call.1} parent=35 // pred_region
          %s4582 = smul.u32 4, %s18
          %s4584 = ssub.s32 512, 512
          %4585 = vsyncadd %s4575, %s4584
          %s4586 = smul.addr %s4582, 128
          %s4587 = scalar_lea.hbm %s4, %s4586
          %s4588 = sshll.u32 %s4578, 4
          %s4589 = int_to_ptr.vmem [resolvable:$true] %s4588
          %4594 = dma.vmem_to_hbm [thread:$0]  %s4589, 512, %s4587, %s4575, 128, 128, 8
        $region40: #{tpu_custom_call.1} parent=35 // pred_fallthru
          _
      $region36: #{tpu_custom_call.1} parent=5 // pred_fallthru
        _
      %p4595 = scmp.le.s32.totalorder 2, %s13
      // Predicated region
      $region41: #{tpu_custom_call.1} parent=5 // pred_check
        %p4596 = pneg %p4595
      $region42: #{tpu_custom_call.1} parent=5 // pred_check_branch
        %4598 = sbr.rel (%p4596) target = $region44
      $region43: #{tpu_custom_call.1} parent=5 // pred_region
        %s4599 = ssub.s32 %s13, 2
        // Predicated region
        $region45: #{tpu_custom_call.1} parent=43 // pred_check
          %p4600 = pneg %p136
        $region46: #{tpu_custom_call.1} parent=43 // pred_check_branch
          %4602 = sbr.rel (%p4600) target = $region48
        $region47: #{tpu_custom_call.1} parent=43 // pred_region
          %s4603 = sand.u32 %s121, 1
          %s4604 = scalar_lea.sflag [#allocation3], %s4603
          %s4605 = sand.u32 %s121, 1
          %s4606 = smul.addr %s4605, 32
          %s4607 = scalar_lea.vmem [#allocation2], %s4606
          %4608 = dma.done %s4604, 512
        $region48: #{tpu_custom_call.1} parent=43 // pred_fallthru
          _
      $region44: #{tpu_custom_call.1} parent=5 // pred_fallthru
        _
    $region6: #{tpu_custom_call.1} parent=1 // loop_footer
      %s17 = sadd.s32 1, %s13
    $region7: #{tpu_custom_call.1} parent=1 // loop_footer_branch
      %12 = sbr.rel target = $region3
    $region8: #{tpu_custom_call.1} parent=1 // loop_exit
      _
    %4609 = vsyncpa [#allocation3], 1
    %s4610 = scalar_lea.sflag [#allocation3], 1
    %4611 = vsyncpa %s4610, 1

</llo_original>
